<compile_context>
chip_gen: v7x
topology: tpu7x:2x2x1
jax: 0.10.0
libtpu: 0.0.40
codegen_flags: <defaults>
</compile_context>

<pallas_src>
import functools

import jax
import jax.numpy as jnp
from jax import lax
from jax.experimental import pallas as pl
from jax.experimental.pallas import tpu as pltpu


# ----------------------------------------------------------------------------
# Generation-aware VMEM budget (queried once, defensively).
# ----------------------------------------------------------------------------
_DEF_VMEM_CAP = 128 * 1024 * 1024
try:  # v5e/v6e: 128 MiB, v7x: 64 MiB per TensorCore
    _VMEM_CAP = int(pltpu.get_tpu_info().vmem_capacity_bytes)
except Exception:  # pragma: no cover - best-effort query
    _VMEM_CAP = _DEF_VMEM_CAP
_VMEM_BUDGET = min(_VMEM_CAP // 8, 16 * 1024 * 1024)   # per-block budget
_VMEM_LIMIT = min(_VMEM_CAP // 2, 64 * 1024 * 1024)    # scoped-vmem limit


def _round_up(v, m):
    return -(-v // m) * m


def _block_footprint(rows, k3, w, c, cout, r):
    """Conservative VMEM bytes for one grid step (double-buffered)."""
    bf16 = 2
    patch = k3 * _round_up(rows, 8) * _round_up(w + 2, 128) * bf16
    out = c * _round_up(rows * r, 8) * _round_up(w * r, 128) * bf16
    consts = (3 * cout * _round_up(k3, 128) * bf16            # weights
              + r * _round_up(w, 8) * _round_up(w * r, 128) * bf16  # scatter mats
              + 2 * _round_up(cout, 8) * 128 * 4)              # scale + bias
    return 2 * (patch + out + consts)


def _pick_rows(n, h, k3, w, c, cout, r, budget, min_steps=8):
    """Rows of the input image handled per grid step.

    Legal values: divisors of H that are multiples of 8 (sublane rule), or H
    itself (full-dim rule).  Pick the largest that fits the VMEM budget, then
    shrink (if possible) so the grid has >= min_steps steps — this mainly
    keeps both v7x TensorCores busy and costs ~nothing on v5e/v6e.
    """
    cands = [d for d in range(8, h + 1, 8) if h % d == 0]
    if not cands:
        cands = [h]
    rows = cands[0]
    for d in cands:
        if _block_footprint(d, k3, w, c, cout, r) <= budget:
            rows = d
    while n * (h // rows) < min_steps:
        smaller = [d for d in cands if d < rows]
        if not smaller:
            break
        rows = smaller[-1]
    return rows


# ----------------------------------------------------------------------------
# Kernel: conv(3x3) + folded BN + ReLU + PixelShuffle for one band of rows.
# ----------------------------------------------------------------------------
def _duc_kernel(p_ref, w_ref, scale_ref, bias_ref, s_ref, o_ref):
    # p_ref:     (1, K3, rows, W+2) bf16, vertical taps only, W pre-padded by 1
    # w_ref:     (3, Cout, K3)      bf16, per-horizontal-tap weights, rows
    #                               reordered to (j, i, c) channel order
    # scale_ref: (Cout, 1)          f32  folded BN scale   (same reorder)
    # bias_ref:  (Cout, 1)          f32  folded bias+shift (same reorder)
    # s_ref:     (r, W, W*r)        bf16 0/1 column-scatter matrices
    # o_ref:     (1, C, rows*r, W*r) bf16 final PixelShuffled output block
    _, k3, rows, _ = p_ref.shape
    r = s_ref.shape[0]
    w_img = s_ref.shape[1]
    c = o_ref.shape[1]
    rc = r * c

    scale = scale_ref[...]
    bias = bias_ref[...]
    taps_w = [w_ref[kw] for kw in range(3)]      # (Cout, K3) each
    s_mats = [s_ref[j] for j in range(r)]        # (W, W*r)  each

    for hh in range(rows):                       # static unrolled row loop
        p_full = p_ref[0, :, hh, :]              # (K3, W+2)
        # 3x3 conv as 3 accumulating dots; horizontal taps via static slices.
        y = jnp.dot(taps_w[0], p_full[:, 0:w_img],
                    preferred_element_type=jnp.float32)
        y += jnp.dot(taps_w[1], p_full[:, 1:w_img + 1],
                     preferred_element_type=jnp.float32)
        y += jnp.dot(taps_w[2], p_full[:, 2:w_img + 2],
                     preferred_element_type=jnp.float32)
        # Fused eval-mode BatchNorm + ReLU.
        y = jnp.maximum(y * scale + bias, 0.0)   # (Cout, W) f32
        yb = y.astype(jnp.bfloat16)

        # PixelShuffle column interleave: exact 0/1 scatter matmuls.
        # Channel rows are ordered (j, i, c); group j scatters to lanes w*r+j.
        z = jnp.dot(yb[0:rc, :], s_mats[0], preferred_element_type=jnp.float32)
        for j in range(1, r):
            z += jnp.dot(yb[j * rc:(j + 1) * rc, :], s_mats[j],
                         preferred_element_type=jnp.float32)
        zb = z.astype(o_ref.dtype)               # (r*C, W*r), rows = (i, c)

        # PixelShuffle row interleave: static stores to output rows hh*r + i.
        for i in range(r):
            o_ref[0, :, hh * r + i, :] = zb[i * c:(i + 1) * c, :]


def _conv_bn_relu_shuffle_pallas(patches, w3, scale, bias, s_mats,
                                 n, c, h, w, r, rows, vmem_limit):
    k3 = patches.shape[1]
    cout = w3.shape[1]
    grid = (n, h // rows)
    return pl.pallas_call(
        _duc_kernel,
        out_shape=jax.ShapeDtypeStruct((n, c, h * r, w * r), jnp.bfloat16),
        grid_spec=pltpu.PrefetchScalarGridSpec(
            num_scalar_prefetch=0,
            grid=grid,
            in_specs=[
                pl.BlockSpec((1, k3, rows, w + 2), lambda nn, hb: (nn, 0, hb, 0)),
                pl.BlockSpec((3, cout, k3), lambda nn, hb: (0, 0, 0)),
                pl.BlockSpec((cout, 1), lambda nn, hb: (0, 0)),
                pl.BlockSpec((cout, 1), lambda nn, hb: (0, 0)),
                pl.BlockSpec((r, w, w * r), lambda nn, hb: (0, 0, 0)),
            ],
            out_specs=pl.BlockSpec((1, c, rows * r, w * r),
                                   lambda nn, hb: (nn, 0, hb, 0)),
        ),
        # NOTE: if xprof shows exposed input DMA per step, add
        # pipeline_mode=pl.Buffered(3) on the patch BlockSpec (VMEM headroom exists).
        compiler_params=pltpu.CompilerParams(
            dimension_semantics=("parallel", "parallel"),
            vmem_limit_bytes=vmem_limit),
    )(patches, w3, scale, bias, s_mats)


# ----------------------------------------------------------------------------
# Wrapper.
# ----------------------------------------------------------------------------
@functools.partial(jax.jit, static_argnames=("upscale_factor",))
def dense_upsampling_convolution(x_nchw, w_oihw, conv_bias, gamma, beta,
                                 running_mean, running_var,
                                 upscale_factor=2, eps=1e-5):
    """Forward pass of DenseUpsamplingConvolution (NCHW in / NCHW out, bf16)."""
    n, cin, h, w = x_nchw.shape
    cout = w_oihw.shape[0]
    r = upscale_factor
    c = cout // (r * r)
    k3 = 3 * cin

    # Vertical taps only (3x inflation instead of 9x); pad W by 1 on each side
    # so the kernel builds the horizontal taps as static lane slices.
    xb = x_nchw.astype(jnp.bfloat16)
    xp = jnp.pad(xb, ((0, 0), (0, 0), (1, 1), (1, 1)))
    patches = jnp.stack([xp[:, :, kh:kh + h, :] for kh in range(3)],
                        axis=1).reshape(n, k3, h, w + 2)

    # Output-channel reorder (j, i, c): new row g = j*(r*C)+i*C+c holds the
    # original channel c*r*r + i*r + j (what PixelShuffle needs per phase).
    cc, ii, jj = jnp.arange(c), jnp.arange(r), jnp.arange(r)
    o_idx = (cc[None, None, :] * (r * r) + ii[None, :, None] * r
             + jj[:, None, None]).reshape(-1)

    # Per-horizontal-tap weight matrices: (kw, Cout, kh*Cin+ci), rows reordered.
    w3 = jnp.transpose(w_oihw, (3, 0, 2, 1)).reshape(3, cout, k3)
    w3 = w3[:, o_idx, :].astype(jnp.bfloat16)

    # Fold eval-mode BatchNorm + conv bias into per-channel scale/bias.
    scale = gamma / jnp.sqrt(running_var + eps)
    bias = (conv_bias - running_mean) * scale + beta
    scale = scale[o_idx].astype(jnp.float32).reshape(cout, 1)
    bias = bias[o_idx].astype(jnp.float32).reshape(cout, 1)

    # Column-scatter matrices for the fused PixelShuffle: S[j, w, w*r + j] = 1.
    xcol = jnp.arange(w * r)
    s_mats = (xcol[None, None, :] ==
              (jnp.arange(w)[None, :, None] * r
               + jnp.arange(r)[:, None, None])).astype(jnp.bfloat16)

    rows = _pick_rows(n, h, k3, w, c, cout, r, _VMEM_BUDGET)
    footprint = _block_footprint(rows, k3, w, c, cout, r)
    vmem_limit = int(min(_VMEM_CAP * 9 // 10,
                         max(_VMEM_LIMIT, footprint + (4 << 20))))

    return _conv_bn_relu_shuffle_pallas(patches, w3, scale, bias, s_mats,
                                        n, c, h, w, r, rows, vmem_limit)


# ----------------------------------------------------------------------------
# Plain-JAX reference (lax.conv) for correctness checking.
# ----------------------------------------------------------------------------
def _reference(x_nchw, w_oihw, conv_bias, gamma, beta, running_mean,
               running_var, upscale_factor=2, eps=1e-5):
    y = lax.conv_general_dilated(
        x_nchw, w_oihw, window_strides=(1, 1), padding=((1, 1), (1, 1)),
        dimension_numbers=("NCHW", "OIHW", "NCHW"),
        precision=lax.Precision.HIGHEST)
    y = y + conv_bias[None, :, None, None]
    y = (y - running_mean[None, :, None, None]) / jnp.sqrt(
        running_var[None, :, None, None] + eps)
    y = y * gamma[None, :, None, None] + beta[None, :, None, None]
    y = jnp.maximum(y, 0.0)
    n, crr, h, w = y.shape
    r = upscale_factor
    c = crr // (r * r)
    y = y.reshape(n, c, r, r, h, w)
    y = jnp.transpose(y, (0, 1, 4, 2, 5, 3))
    return y.reshape(n, c, h * r, w * r)


if __name__ == "__main__":
    # Module config: inplanes=4, planes=4, upscale_factor=2 -> Cout = 4*2*2 = 16.
    N, Cin, H, W = 2, 4, 16, 16
    planes, r = 4, 2
    Cout = planes * r * r

    key = jax.random.PRNGKey(0)
    kx, kw_, kb, kg, kbt = jax.random.split(key, 5)

    x = jax.random.normal(kx, (N, Cin, H, W), dtype=jnp.float32)
    w = jax.random.normal(kw_, (Cout, Cin, 3, 3), dtype=jnp.float32) * 0.1
    conv_bias = jax.random.normal(kb, (Cout,), dtype=jnp.float32) * 0.1
    gamma = 1.0 + 0.1 * jax.random.normal(kg, (Cout,), dtype=jnp.float32)
    beta = 0.1 * jax.random.normal(kbt, (Cout,), dtype=jnp.float32)
    # BatchNorm running stats (eval mode).
    running_mean = jnp.zeros((Cout,), dtype=jnp.float32)
    running_var = jnp.ones((Cout,), dtype=jnp.float32)

    out = dense_upsampling_convolution(
        x, w, conv_bias, gamma, beta, running_mean, running_var,
        upscale_factor=r)
    out = jax.block_until_ready(out)

    # Reference on the same bf16-quantized conv inputs (the kernel feeds the
    # MXU bf16 and stores a bf16 output -> loosened tolerance).
    x_q = x.astype(jnp.bfloat16).astype(jnp.float32)
    w_q = w.astype(jnp.bfloat16).astype(jnp.float32)
    ref = _reference(x_q, w_q, conv_bias, gamma, beta, running_mean,
                     running_var, upscale_factor=r)

    assert out.shape == (N, planes, H * r, W * r), out.shape
    assert jnp.allclose(out.astype(jnp.float32), ref, atol=2.5e-2, rtol=2.5e-2), \
        float(jnp.max(jnp.abs(out.astype(jnp.float32) - ref)))

    print("KERNEL_OK")
</pallas_src>

<mosaic_0001>
module attributes {stable_mosaic.version = 11 : i64} {
  func.func @_duc_kernel(%arg0: i32, %arg1: i32, %arg2: memref<1x12x8x18xbf16, #tpu.memory_space<vmem>>, %arg3: memref<3x16x12xbf16, #tpu.memory_space<vmem>>, %arg4: memref<16x1xf32, #tpu.memory_space<vmem>>, %arg5: memref<16x1xf32, #tpu.memory_space<vmem>>, %arg6: memref<2x16x32xbf16, #tpu.memory_space<vmem>>, %arg7: memref<1x4x16x32xbf16, #tpu.memory_space<vmem>>) attributes {dimension_semantics = [#tpu.dimension_semantics<parallel>, #tpu.dimension_semantics<parallel>], iteration_bounds = array<i64: 2, 2>, scalar_prefetch = 0 : i64, scratch_operands = 0 : i64, tpu.core_type = #tpu.core_type<tc>, window_params = [{transform_indices = @transform_0, window_bounds = array<i64: 1, 12, 8, 18>}, {pipeline_mode = #tpu.pipeline_mode<synchronous>, transform_indices = @transform_1, window_bounds = array<i64: 3, 16, 12>}, {pipeline_mode = #tpu.pipeline_mode<synchronous>, transform_indices = @transform_2, window_bounds = array<i64: 16, 1>}, {pipeline_mode = #tpu.pipeline_mode<synchronous>, transform_indices = @transform_3, window_bounds = array<i64: 16, 1>}, {pipeline_mode = #tpu.pipeline_mode<synchronous>, transform_indices = @transform_4, window_bounds = array<i64: 2, 16, 32>}, {transform_indices = @transform_5, window_bounds = array<i64: 1, 4, 16, 32>}]} {
    %c0 = arith.constant 0 : index
    %c0_0 = arith.constant 0 : index
    %0 = vector.load %arg4[%c0, %c0_0] : memref<16x1xf32, #tpu.memory_space<vmem>>, vector<16x1xf32>
    %c0_1 = arith.constant 0 : index
    %c0_2 = arith.constant 0 : index
    %1 = vector.load %arg5[%c0_1, %c0_2] : memref<16x1xf32, #tpu.memory_space<vmem>>, vector<16x1xf32>
    %c0_3 = arith.constant 0 : index
    %c0_4 = arith.constant 0 : index
    %c0_5 = arith.constant 0 : index
    %2 = vector.load %arg3[%c0_3, %c0_4, %c0_5] : memref<3x16x12xbf16, #tpu.memory_space<vmem>>, vector<1x16x12xbf16>
    %3 = vector.shape_cast %2 : vector<1x16x12xbf16> to vector<16x12xbf16>
    %c1 = arith.constant 1 : index
    %c0_6 = arith.constant 0 : index
    %c0_7 = arith.constant 0 : index
    %4 = vector.load %arg3[%c1, %c0_6, %c0_7] : memref<3x16x12xbf16, #tpu.memory_space<vmem>>, vector<1x16x12xbf16>
    %5 = vector.shape_cast %4 : vector<1x16x12xbf16> to vector<16x12xbf16>
    %c2 = arith.constant 2 : index
    %c0_8 = arith.constant 0 : index
    %c0_9 = arith.constant 0 : index
    %6 = vector.load %arg3[%c2, %c0_8, %c0_9] : memref<3x16x12xbf16, #tpu.memory_space<vmem>>, vector<1x16x12xbf16>
    %7 = vector.shape_cast %6 : vector<1x16x12xbf16> to vector<16x12xbf16>
    %c0_10 = arith.constant 0 : index
    %c0_11 = arith.constant 0 : index
    %c0_12 = arith.constant 0 : index
    %8 = vector.load %arg6[%c0_10, %c0_11, %c0_12] : memref<2x16x32xbf16, #tpu.memory_space<vmem>>, vector<1x16x32xbf16>
    %9 = vector.shape_cast %8 : vector<1x16x32xbf16> to vector<16x32xbf16>
    %c1_13 = arith.constant 1 : index
    %c0_14 = arith.constant 0 : index
    %c0_15 = arith.constant 0 : index
    %10 = vector.load %arg6[%c1_13, %c0_14, %c0_15] : memref<2x16x32xbf16, #tpu.memory_space<vmem>>, vector<1x16x32xbf16>
    %11 = vector.shape_cast %10 : vector<1x16x32xbf16> to vector<16x32xbf16>
    %c0_16 = arith.constant 0 : index
    %c0_17 = arith.constant 0 : index
    %c0_18 = arith.constant 0 : index
    %c0_19 = arith.constant 0 : index
    %12 = vector.load %arg2[%c0_16, %c0_17, %c0_18, %c0_19] : memref<1x12x8x18xbf16, #tpu.memory_space<vmem>>, vector<1x12x1x18xbf16>
    %13 = vector.shape_cast %12 : vector<1x12x1x18xbf16> to vector<12x18xbf16>
    %14 = vector.extract_strided_slice %13 {offsets = [0, 0], sizes = [12, 16], strides = [1, 1]} : vector<12x18xbf16> to vector<12x16xbf16>
    %cst = arith.constant dense<0.000000e+00> : vector<16x16xf32>
    %15 = tpu.matmul %3, %14, %cst {dimension_numbers = #tpu.dot_dimension_numbers<[1], [0], [0], [1], [0, 0, 1, 1], [], []>} : vector<16x12xbf16>, vector<12x16xbf16>, vector<16x16xf32> -> vector<16x16xf32>
    %16 = vector.extract_strided_slice %13 {offsets = [0, 1], sizes = [12, 16], strides = [1, 1]} : vector<12x18xbf16> to vector<12x16xbf16>
    %cst_20 = arith.constant dense<0.000000e+00> : vector<16x16xf32>
    %17 = tpu.matmul %5, %16, %cst_20 {dimension_numbers = #tpu.dot_dimension_numbers<[1], [0], [0], [1], [0, 0, 1, 1], [], []>} : vector<16x12xbf16>, vector<12x16xbf16>, vector<16x16xf32> -> vector<16x16xf32>
    %18 = arith.addf %15, %17 : vector<16x16xf32>
    %19 = vector.extract_strided_slice %13 {offsets = [0, 2], sizes = [12, 16], strides = [1, 1]} : vector<12x18xbf16> to vector<12x16xbf16>
    %cst_21 = arith.constant dense<0.000000e+00> : vector<16x16xf32>
    %20 = tpu.matmul %7, %19, %cst_21 {dimension_numbers = #tpu.dot_dimension_numbers<[1], [0], [0], [1], [0, 0, 1, 1], [], []>} : vector<16x12xbf16>, vector<12x16xbf16>, vector<16x16xf32> -> vector<16x16xf32>
    %21 = arith.addf %18, %20 : vector<16x16xf32>
    %22 = vector.broadcast %0 : vector<16x1xf32> to vector<16x16xf32>
    %23 = arith.mulf %21, %22 : vector<16x16xf32>
    %24 = vector.broadcast %1 : vector<16x1xf32> to vector<16x16xf32>
    %25 = arith.addf %23, %24 : vector<16x16xf32>
    %cst_22 = arith.constant 0.000000e+00 : f32
    %26 = vector.broadcast %cst_22 : f32 to vector<16x16xf32>
    %27 = arith.maximumf %25, %26 : vector<16x16xf32>
    %28 = arith.truncf %27 : vector<16x16xf32> to vector<16x16xbf16>
    %29 = vector.extract_strided_slice %28 {offsets = [0, 0], sizes = [8, 16], strides = [1, 1]} : vector<16x16xbf16> to vector<8x16xbf16>
    %cst_23 = arith.constant dense<0.000000e+00> : vector<8x32xf32>
    %30 = tpu.matmul %29, %9, %cst_23 {dimension_numbers = #tpu.dot_dimension_numbers<[1], [0], [0], [1], [0, 0, 1, 1], [], []>} : vector<8x16xbf16>, vector<16x32xbf16>, vector<8x32xf32> -> vector<8x32xf32>
    %31 = vector.extract_strided_slice %28 {offsets = [8, 0], sizes = [8, 16], strides = [1, 1]} : vector<16x16xbf16> to vector<8x16xbf16>
    %cst_24 = arith.constant dense<0.000000e+00> : vector<8x32xf32>
    %32 = tpu.matmul %31, %11, %cst_24 {dimension_numbers = #tpu.dot_dimension_numbers<[1], [0], [0], [1], [0, 0, 1, 1], [], []>} : vector<8x16xbf16>, vector<16x32xbf16>, vector<8x32xf32> -> vector<8x32xf32>
    %33 = arith.addf %30, %32 : vector<8x32xf32>
    %34 = arith.truncf %33 : vector<8x32xf32> to vector<8x32xbf16>
    %35 = vector.extract_strided_slice %34 {offsets = [0, 0], sizes = [4, 32], strides = [1, 1]} : vector<8x32xbf16> to vector<4x32xbf16>
    %c0_25 = arith.constant 0 : index
    %c0_26 = arith.constant 0 : index
    %c0_27 = arith.constant 0 : index
    %c0_28 = arith.constant 0 : index
    %36 = vector.load %arg7[%c0_25, %c0_26, %c0_27, %c0_28] : memref<1x4x16x32xbf16, #tpu.memory_space<vmem>>, vector<1x4x1x32xbf16>
    %37 = vector.shape_cast %36 : vector<1x4x1x32xbf16> to vector<4x32xbf16>
    %38 = vector.shape_cast %35 : vector<4x32xbf16> to vector<1x4x1x32xbf16>
    tpu.vector_store %arg7[%c0_25, %c0_26, %c0_27, %c0_28], %38 {strides = array<i32>} : memref<1x4x16x32xbf16, #tpu.memory_space<vmem>>, vector<1x4x1x32xbf16>,
    %39 = vector.extract_strided_slice %34 {offsets = [4, 0], sizes = [4, 32], strides = [1, 1]} : vector<8x32xbf16> to vector<4x32xbf16>
    %c0_29 = arith.constant 0 : index
    %c0_30 = arith.constant 0 : index
    %c1_31 = arith.constant 1 : index
    %c0_32 = arith.constant 0 : index
    %40 = vector.load %arg7[%c0_29, %c0_30, %c1_31, %c0_32] : memref<1x4x16x32xbf16, #tpu.memory_space<vmem>>, vector<1x4x1x32xbf16>
    %41 = vector.shape_cast %40 : vector<1x4x1x32xbf16> to vector<4x32xbf16>
    %42 = vector.shape_cast %39 : vector<4x32xbf16> to vector<1x4x1x32xbf16>
    tpu.vector_store %arg7[%c0_29, %c0_30, %c1_31, %c0_32], %42 {strides = array<i32>} : memref<1x4x16x32xbf16, #tpu.memory_space<vmem>>, vector<1x4x1x32xbf16>,
    %c0_33 = arith.constant 0 : index
    %c0_34 = arith.constant 0 : index
    %c1_35 = arith.constant 1 : index
    %c0_36 = arith.constant 0 : index
    %43 = vector.load %arg2[%c0_33, %c0_34, %c1_35, %c0_36] : memref<1x12x8x18xbf16, #tpu.memory_space<vmem>>, vector<1x12x1x18xbf16>
    %44 = vector.shape_cast %43 : vector<1x12x1x18xbf16> to vector<12x18xbf16>
    %45 = vector.extract_strided_slice %44 {offsets = [0, 0], sizes = [12, 16], strides = [1, 1]} : vector<12x18xbf16> to vector<12x16xbf16>
    %cst_37 = arith.constant dense<0.000000e+00> : vector<16x16xf32>
    %46 = tpu.matmul %3, %45, %cst_37 {dimension_numbers = #tpu.dot_dimension_numbers<[1], [0], [0], [1], [0, 0, 1, 1], [], []>} : vector<16x12xbf16>, vector<12x16xbf16>, vector<16x16xf32> -> vector<16x16xf32>
    %47 = vector.extract_strided_slice %44 {offsets = [0, 1], sizes = [12, 16], strides = [1, 1]} : vector<12x18xbf16> to vector<12x16xbf16>
    %cst_38 = arith.constant dense<0.000000e+00> : vector<16x16xf32>
    %48 = tpu.matmul %5, %47, %cst_38 {dimension_numbers = #tpu.dot_dimension_numbers<[1], [0], [0], [1], [0, 0, 1, 1], [], []>} : vector<16x12xbf16>, vector<12x16xbf16>, vector<16x16xf32> -> vector<16x16xf32>
    %49 = arith.addf %46, %48 : vector<16x16xf32>
    %50 = vector.extract_strided_slice %44 {offsets = [0, 2], sizes = [12, 16], strides = [1, 1]} : vector<12x18xbf16> to vector<12x16xbf16>
    %cst_39 = arith.constant dense<0.000000e+00> : vector<16x16xf32>
    %51 = tpu.matmul %7, %50, %cst_39 {dimension_numbers = #tpu.dot_dimension_numbers<[1], [0], [0], [1], [0, 0, 1, 1], [], []>} : vector<16x12xbf16>, vector<12x16xbf16>, vector<16x16xf32> -> vector<16x16xf32>
    %52 = arith.addf %49, %51 : vector<16x16xf32>
    %53 = vector.broadcast %0 : vector<16x1xf32> to vector<16x16xf32>
    %54 = arith.mulf %52, %53 : vector<16x16xf32>
    %55 = vector.broadcast %1 : vector<16x1xf32> to vector<16x16xf32>
    %56 = arith.addf %54, %55 : vector<16x16xf32>
    %cst_40 = arith.constant 0.000000e+00 : f32
    %57 = vector.broadcast %cst_40 : f32 to vector<16x16xf32>
    %58 = arith.maximumf %56, %57 : vector<16x16xf32>
    %59 = arith.truncf %58 : vector<16x16xf32> to vector<16x16xbf16>
    %60 = vector.extract_strided_slice %59 {offsets = [0, 0], sizes = [8, 16], strides = [1, 1]} : vector<16x16xbf16> to vector<8x16xbf16>
    %cst_41 = arith.constant dense<0.000000e+00> : vector<8x32xf32>
    %61 = tpu.matmul %60, %9, %cst_41 {dimension_numbers = #tpu.dot_dimension_numbers<[1], [0], [0], [1], [0, 0, 1, 1], [], []>} : vector<8x16xbf16>, vector<16x32xbf16>, vector<8x32xf32> -> vector<8x32xf32>
    %62 = vector.extract_strided_slice %59 {offsets = [8, 0], sizes = [8, 16], strides = [1, 1]} : vector<16x16xbf16> to vector<8x16xbf16>
    %cst_42 = arith.constant dense<0.000000e+00> : vector<8x32xf32>
    %63 = tpu.matmul %62, %11, %cst_42 {dimension_numbers = #tpu.dot_dimension_numbers<[1], [0], [0], [1], [0, 0, 1, 1], [], []>} : vector<8x16xbf16>, vector<16x32xbf16>, vector<8x32xf32> -> vector<8x32xf32>
    %64 = arith.addf %61, %63 : vector<8x32xf32>
    %65 = arith.truncf %64 : vector<8x32xf32> to vector<8x32xbf16>
    %66 = vector.extract_strided_slice %65 {offsets = [0, 0], sizes = [4, 32], strides = [1, 1]} : vector<8x32xbf16> to vector<4x32xbf16>
    %c0_43 = arith.constant 0 : index
    %c0_44 = arith.constant 0 : index
    %c2_45 = arith.constant 2 : index
    %c0_46 = arith.constant 0 : index
    %67 = vector.load %arg7[%c0_43, %c0_44, %c2_45, %c0_46] : memref<1x4x16x32xbf16, #tpu.memory_space<vmem>>, vector<1x4x1x32xbf16>
    %68 = vector.shape_cast %67 : vector<1x4x1x32xbf16> to vector<4x32xbf16>
    %69 = vector.shape_cast %66 : vector<4x32xbf16> to vector<1x4x1x32xbf16>
    tpu.vector_store %arg7[%c0_43, %c0_44, %c2_45, %c0_46], %69 {strides = array<i32>} : memref<1x4x16x32xbf16, #tpu.memory_space<vmem>>, vector<1x4x1x32xbf16>,
    %70 = vector.extract_strided_slice %65 {offsets = [4, 0], sizes = [4, 32], strides = [1, 1]} : vector<8x32xbf16> to vector<4x32xbf16>
    %c0_47 = arith.constant 0 : index
    %c0_48 = arith.constant 0 : index
    %c3 = arith.constant 3 : index
    %c0_49 = arith.constant 0 : index
    %71 = vector.load %arg7[%c0_47, %c0_48, %c3, %c0_49] : memref<1x4x16x32xbf16, #tpu.memory_space<vmem>>, vector<1x4x1x32xbf16>
    %72 = vector.shape_cast %71 : vector<1x4x1x32xbf16> to vector<4x32xbf16>
    %73 = vector.shape_cast %70 : vector<4x32xbf16> to vector<1x4x1x32xbf16>
    tpu.vector_store %arg7[%c0_47, %c0_48, %c3, %c0_49], %73 {strides = array<i32>} : memref<1x4x16x32xbf16, #tpu.memory_space<vmem>>, vector<1x4x1x32xbf16>,
    %c0_50 = arith.constant 0 : index
    %c0_51 = arith.constant 0 : index
    %c2_52 = arith.constant 2 : index
    %c0_53 = arith.constant 0 : index
    %74 = vector.load %arg2[%c0_50, %c0_51, %c2_52, %c0_53] : memref<1x12x8x18xbf16, #tpu.memory_space<vmem>>, vector<1x12x1x18xbf16>
    %75 = vector.shape_cast %74 : vector<1x12x1x18xbf16> to vector<12x18xbf16>
    %76 = vector.extract_strided_slice %75 {offsets = [0, 0], sizes = [12, 16], strides = [1, 1]} : vector<12x18xbf16> to vector<12x16xbf16>
    %cst_54 = arith.constant dense<0.000000e+00> : vector<16x16xf32>
    %77 = tpu.matmul %3, %76, %cst_54 {dimension_numbers = #tpu.dot_dimension_numbers<[1], [0], [0], [1], [0, 0, 1, 1], [], []>} : vector<16x12xbf16>, vector<12x16xbf16>, vector<16x16xf32> -> vector<16x16xf32>
    %78 = vector.extract_strided_slice %75 {offsets = [0, 1], sizes = [12, 16], strides = [1, 1]} : vector<12x18xbf16> to vector<12x16xbf16>
    %cst_55 = arith.constant dense<0.000000e+00> : vector<16x16xf32>
    %79 = tpu.matmul %5, %78, %cst_55 {dimension_numbers = #tpu.dot_dimension_numbers<[1], [0], [0], [1], [0, 0, 1, 1], [], []>} : vector<16x12xbf16>, vector<12x16xbf16>, vector<16x16xf32> -> vector<16x16xf32>
    %80 = arith.addf %77, %79 : vector<16x16xf32>
    %81 = vector.extract_strided_slice %75 {offsets = [0, 2], sizes = [12, 16], strides = [1, 1]} : vector<12x18xbf16> to vector<12x16xbf16>
    %cst_56 = arith.constant dense<0.000000e+00> : vector<16x16xf32>
    %82 = tpu.matmul %7, %81, %cst_56 {dimension_numbers = #tpu.dot_dimension_numbers<[1], [0], [0], [1], [0, 0, 1, 1], [], []>} : vector<16x12xbf16>, vector<12x16xbf16>, vector<16x16xf32> -> vector<16x16xf32>
    %83 = arith.addf %80, %82 : vector<16x16xf32>
    %84 = vector.broadcast %0 : vector<16x1xf32> to vector<16x16xf32>
    %85 = arith.mulf %83, %84 : vector<16x16xf32>
    %86 = vector.broadcast %1 : vector<16x1xf32> to vector<16x16xf32>
    %87 = arith.addf %85, %86 : vector<16x16xf32>
    %cst_57 = arith.constant 0.000000e+00 : f32
    %88 = vector.broadcast %cst_57 : f32 to vector<16x16xf32>
    %89 = arith.maximumf %87, %88 : vector<16x16xf32>
    %90 = arith.truncf %89 : vector<16x16xf32> to vector<16x16xbf16>
    %91 = vector.extract_strided_slice %90 {offsets = [0, 0], sizes = [8, 16], strides = [1, 1]} : vector<16x16xbf16> to vector<8x16xbf16>
    %cst_58 = arith.constant dense<0.000000e+00> : vector<8x32xf32>
    %92 = tpu.matmul %91, %9, %cst_58 {dimension_numbers = #tpu.dot_dimension_numbers<[1], [0], [0], [1], [0, 0, 1, 1], [], []>} : vector<8x16xbf16>, vector<16x32xbf16>, vector<8x32xf32> -> vector<8x32xf32>
    %93 = vector.extract_strided_slice %90 {offsets = [8, 0], sizes = [8, 16], strides = [1, 1]} : vector<16x16xbf16> to vector<8x16xbf16>
    %cst_59 = arith.constant dense<0.000000e+00> : vector<8x32xf32>
    %94 = tpu.matmul %93, %11, %cst_59 {dimension_numbers = #tpu.dot_dimension_numbers<[1], [0], [0], [1], [0, 0, 1, 1], [], []>} : vector<8x16xbf16>, vector<16x32xbf16>, vector<8x32xf32> -> vector<8x32xf32>
    %95 = arith.addf %92, %94 : vector<8x32xf32>
    %96 = arith.truncf %95 : vector<8x32xf32> to vector<8x32xbf16>
    %97 = vector.extract_strided_slice %96 {offsets = [0, 0], sizes = [4, 32], strides = [1, 1]} : vector<8x32xbf16> to vector<4x32xbf16>
    %c0_60 = arith.constant 0 : index
    %c0_61 = arith.constant 0 : index
    %c4 = arith.constant 4 : index
    %c0_62 = arith.constant 0 : index
    %98 = vector.load %arg7[%c0_60, %c0_61, %c4, %c0_62] : memref<1x4x16x32xbf16, #tpu.memory_space<vmem>>, vector<1x4x1x32xbf16>
    %99 = vector.shape_cast %98 : vector<1x4x1x32xbf16> to vector<4x32xbf16>
    %100 = vector.shape_cast %97 : vector<4x32xbf16> to vector<1x4x1x32xbf16>
    tpu.vector_store %arg7[%c0_60, %c0_61, %c4, %c0_62], %100 {strides = array<i32>} : memref<1x4x16x32xbf16, #tpu.memory_space<vmem>>, vector<1x4x1x32xbf16>,
    %101 = vector.extract_strided_slice %96 {offsets = [4, 0], sizes = [4, 32], strides = [1, 1]} : vector<8x32xbf16> to vector<4x32xbf16>
    %c0_63 = arith.constant 0 : index
    %c0_64 = arith.constant 0 : index
    %c5 = arith.constant 5 : index
    %c0_65 = arith.constant 0 : index
    %102 = vector.load %arg7[%c0_63, %c0_64, %c5, %c0_65] : memref<1x4x16x32xbf16, #tpu.memory_space<vmem>>, vector<1x4x1x32xbf16>
    %103 = vector.shape_cast %102 : vector<1x4x1x32xbf16> to vector<4x32xbf16>
    %104 = vector.shape_cast %101 : vector<4x32xbf16> to vector<1x4x1x32xbf16>
    tpu.vector_store %arg7[%c0_63, %c0_64, %c5, %c0_65], %104 {strides = array<i32>} : memref<1x4x16x32xbf16, #tpu.memory_space<vmem>>, vector<1x4x1x32xbf16>,
    %c0_66 = arith.constant 0 : index
    %c0_67 = arith.constant 0 : index
    %c3_68 = arith.constant 3 : index
    %c0_69 = arith.constant 0 : index
    %105 = vector.load %arg2[%c0_66, %c0_67, %c3_68, %c0_69] : memref<1x12x8x18xbf16, #tpu.memory_space<vmem>>, vector<1x12x1x18xbf16>
    %106 = vector.shape_cast %105 : vector<1x12x1x18xbf16> to vector<12x18xbf16>
    %107 = vector.extract_strided_slice %106 {offsets = [0, 0], sizes = [12, 16], strides = [1, 1]} : vector<12x18xbf16> to vector<12x16xbf16>
    %cst_70 = arith.constant dense<0.000000e+00> : vector<16x16xf32>
    %108 = tpu.matmul %3, %107, %cst_70 {dimension_numbers = #tpu.dot_dimension_numbers<[1], [0], [0], [1], [0, 0, 1, 1], [], []>} : vector<16x12xbf16>, vector<12x16xbf16>, vector<16x16xf32> -> vector<16x16xf32>
    %109 = vector.extract_strided_slice %106 {offsets = [0, 1], sizes = [12, 16], strides = [1, 1]} : vector<12x18xbf16> to vector<12x16xbf16>
    %cst_71 = arith.constant dense<0.000000e+00> : vector<16x16xf32>
    %110 = tpu.matmul %5, %109, %cst_71 {dimension_numbers = #tpu.dot_dimension_numbers<[1], [0], [0], [1], [0, 0, 1, 1], [], []>} : vector<16x12xbf16>, vector<12x16xbf16>, vector<16x16xf32> -> vector<16x16xf32>
    %111 = arith.addf %108, %110 : vector<16x16xf32>
    %112 = vector.extract_strided_slice %106 {offsets = [0, 2], sizes = [12, 16], strides = [1, 1]} : vector<12x18xbf16> to vector<12x16xbf16>
    %cst_72 = arith.constant dense<0.000000e+00> : vector<16x16xf32>
    %113 = tpu.matmul %7, %112, %cst_72 {dimension_numbers = #tpu.dot_dimension_numbers<[1], [0], [0], [1], [0, 0, 1, 1], [], []>} : vector<16x12xbf16>, vector<12x16xbf16>, vector<16x16xf32> -> vector<16x16xf32>
    %114 = arith.addf %111, %113 : vector<16x16xf32>
    %115 = vector.broadcast %0 : vector<16x1xf32> to vector<16x16xf32>
    %116 = arith.mulf %114, %115 : vector<16x16xf32>
    %117 = vector.broadcast %1 : vector<16x1xf32> to vector<16x16xf32>
    %118 = arith.addf %116, %117 : vector<16x16xf32>
    %cst_73 = arith.constant 0.000000e+00 : f32
    %119 = vector.broadcast %cst_73 : f32 to vector<16x16xf32>
    %120 = arith.maximumf %118, %119 : vector<16x16xf32>
    %121 = arith.truncf %120 : vector<16x16xf32> to vector<16x16xbf16>
    %122 = vector.extract_strided_slice %121 {offsets = [0, 0], sizes = [8, 16], strides = [1, 1]} : vector<16x16xbf16> to vector<8x16xbf16>
    %cst_74 = arith.constant dense<0.000000e+00> : vector<8x32xf32>
    %123 = tpu.matmul %122, %9, %cst_74 {dimension_numbers = #tpu.dot_dimension_numbers<[1], [0], [0], [1], [0, 0, 1, 1], [], []>} : vector<8x16xbf16>, vector<16x32xbf16>, vector<8x32xf32> -> vector<8x32xf32>
    %124 = vector.extract_strided_slice %121 {offsets = [8, 0], sizes = [8, 16], strides = [1, 1]} : vector<16x16xbf16> to vector<8x16xbf16>
    %cst_75 = arith.constant dense<0.000000e+00> : vector<8x32xf32>
    %125 = tpu.matmul %124, %11, %cst_75 {dimension_numbers = #tpu.dot_dimension_numbers<[1], [0], [0], [1], [0, 0, 1, 1], [], []>} : vector<8x16xbf16>, vector<16x32xbf16>, vector<8x32xf32> -> vector<8x32xf32>
    %126 = arith.addf %123, %125 : vector<8x32xf32>
    %127 = arith.truncf %126 : vector<8x32xf32> to vector<8x32xbf16>
    %128 = vector.extract_strided_slice %127 {offsets = [0, 0], sizes = [4, 32], strides = [1, 1]} : vector<8x32xbf16> to vector<4x32xbf16>
    %c0_76 = arith.constant 0 : index
    %c0_77 = arith.constant 0 : index
    %c6 = arith.constant 6 : index
    %c0_78 = arith.constant 0 : index
    %129 = vector.load %arg7[%c0_76, %c0_77, %c6, %c0_78] : memref<1x4x16x32xbf16, #tpu.memory_space<vmem>>, vector<1x4x1x32xbf16>
    %130 = vector.shape_cast %129 : vector<1x4x1x32xbf16> to vector<4x32xbf16>
    %131 = vector.shape_cast %128 : vector<4x32xbf16> to vector<1x4x1x32xbf16>
    tpu.vector_store %arg7[%c0_76, %c0_77, %c6, %c0_78], %131 {strides = array<i32>} : memref<1x4x16x32xbf16, #tpu.memory_space<vmem>>, vector<1x4x1x32xbf16>,
    %132 = vector.extract_strided_slice %127 {offsets = [4, 0], sizes = [4, 32], strides = [1, 1]} : vector<8x32xbf16> to vector<4x32xbf16>
    %c0_79 = arith.constant 0 : index
    %c0_80 = arith.constant 0 : index
    %c7 = arith.constant 7 : index
    %c0_81 = arith.constant 0 : index
    %133 = vector.load %arg7[%c0_79, %c0_80, %c7, %c0_81] : memref<1x4x16x32xbf16, #tpu.memory_space<vmem>>, vector<1x4x1x32xbf16>
    %134 = vector.shape_cast %133 : vector<1x4x1x32xbf16> to vector<4x32xbf16>
    %135 = vector.shape_cast %132 : vector<4x32xbf16> to vector<1x4x1x32xbf16>
    tpu.vector_store %arg7[%c0_79, %c0_80, %c7, %c0_81], %135 {strides = array<i32>} : memref<1x4x16x32xbf16, #tpu.memory_space<vmem>>, vector<1x4x1x32xbf16>,
    %c0_82 = arith.constant 0 : index
    %c0_83 = arith.constant 0 : index
    %c4_84 = arith.constant 4 : index
    %c0_85 = arith.constant 0 : index
    %136 = vector.load %arg2[%c0_82, %c0_83, %c4_84, %c0_85] : memref<1x12x8x18xbf16, #tpu.memory_space<vmem>>, vector<1x12x1x18xbf16>
    %137 = vector.shape_cast %136 : vector<1x12x1x18xbf16> to vector<12x18xbf16>
    %138 = vector.extract_strided_slice %137 {offsets = [0, 0], sizes = [12, 16], strides = [1, 1]} : vector<12x18xbf16> to vector<12x16xbf16>
    %cst_86 = arith.constant dense<0.000000e+00> : vector<16x16xf32>
    %139 = tpu.matmul %3, %138, %cst_86 {dimension_numbers = #tpu.dot_dimension_numbers<[1], [0], [0], [1], [0, 0, 1, 1], [], []>} : vector<16x12xbf16>, vector<12x16xbf16>, vector<16x16xf32> -> vector<16x16xf32>
    %140 = vector.extract_strided_slice %137 {offsets = [0, 1], sizes = [12, 16], strides = [1, 1]} : vector<12x18xbf16> to vector<12x16xbf16>
    %cst_87 = arith.constant dense<0.000000e+00> : vector<16x16xf32>
    %141 = tpu.matmul %5, %140, %cst_87 {dimension_numbers = #tpu.dot_dimension_numbers<[1], [0], [0], [1], [0, 0, 1, 1], [], []>} : vector<16x12xbf16>, vector<12x16xbf16>, vector<16x16xf32> -> vector<16x16xf32>
    %142 = arith.addf %139, %141 : vector<16x16xf32>
    %143 = vector.extract_strided_slice %137 {offsets = [0, 2], sizes = [12, 16], strides = [1, 1]} : vector<12x18xbf16> to vector<12x16xbf16>
    %cst_88 = arith.constant dense<0.000000e+00> : vector<16x16xf32>
    %144 = tpu.matmul %7, %143, %cst_88 {dimension_numbers = #tpu.dot_dimension_numbers<[1], [0], [0], [1], [0, 0, 1, 1], [], []>} : vector<16x12xbf16>, vector<12x16xbf16>, vector<16x16xf32> -> vector<16x16xf32>
    %145 = arith.addf %142, %144 : vector<16x16xf32>
    %146 = vector.broadcast %0 : vector<16x1xf32> to vector<16x16xf32>
    %147 = arith.mulf %145, %146 : vector<16x16xf32>
    %148 = vector.broadcast %1 : vector<16x1xf32> to vector<16x16xf32>
    %149 = arith.addf %147, %148 : vector<16x16xf32>
    %cst_89 = arith.constant 0.000000e+00 : f32
    %150 = vector.broadcast %cst_89 : f32 to vector<16x16xf32>
    %151 = arith.maximumf %149, %150 : vector<16x16xf32>
    %152 = arith.truncf %151 : vector<16x16xf32> to vector<16x16xbf16>
    %153 = vector.extract_strided_slice %152 {offsets = [0, 0], sizes = [8, 16], strides = [1, 1]} : vector<16x16xbf16> to vector<8x16xbf16>
    %cst_90 = arith.constant dense<0.000000e+00> : vector<8x32xf32>
    %154 = tpu.matmul %153, %9, %cst_90 {dimension_numbers = #tpu.dot_dimension_numbers<[1], [0], [0], [1], [0, 0, 1, 1], [], []>} : vector<8x16xbf16>, vector<16x32xbf16>, vector<8x32xf32> -> vector<8x32xf32>
    %155 = vector.extract_strided_slice %152 {offsets = [8, 0], sizes = [8, 16], strides = [1, 1]} : vector<16x16xbf16> to vector<8x16xbf16>
    %cst_91 = arith.constant dense<0.000000e+00> : vector<8x32xf32>
    %156 = tpu.matmul %155, %11, %cst_91 {dimension_numbers = #tpu.dot_dimension_numbers<[1], [0], [0], [1], [0, 0, 1, 1], [], []>} : vector<8x16xbf16>, vector<16x32xbf16>, vector<8x32xf32> -> vector<8x32xf32>
    %157 = arith.addf %154, %156 : vector<8x32xf32>
    %158 = arith.truncf %157 : vector<8x32xf32> to vector<8x32xbf16>
    %159 = vector.extract_strided_slice %158 {offsets = [0, 0], sizes = [4, 32], strides = [1, 1]} : vector<8x32xbf16> to vector<4x32xbf16>
    %c0_92 = arith.constant 0 : index
    %c0_93 = arith.constant 0 : index
    %c8 = arith.constant 8 : index
    %c0_94 = arith.constant 0 : index
    %160 = vector.load %arg7[%c0_92, %c0_93, %c8, %c0_94] : memref<1x4x16x32xbf16, #tpu.memory_space<vmem>>, vector<1x4x1x32xbf16>
    %161 = vector.shape_cast %160 : vector<1x4x1x32xbf16> to vector<4x32xbf16>
    %162 = vector.shape_cast %159 : vector<4x32xbf16> to vector<1x4x1x32xbf16>
    tpu.vector_store %arg7[%c0_92, %c0_93, %c8, %c0_94], %162 {strides = array<i32>} : memref<1x4x16x32xbf16, #tpu.memory_space<vmem>>, vector<1x4x1x32xbf16>,
    %163 = vector.extract_strided_slice %158 {offsets = [4, 0], sizes = [4, 32], strides = [1, 1]} : vector<8x32xbf16> to vector<4x32xbf16>
    %c0_95 = arith.constant 0 : index
    %c0_96 = arith.constant 0 : index
    %c9 = arith.constant 9 : index
    %c0_97 = arith.constant 0 : index
    %164 = vector.load %arg7[%c0_95, %c0_96, %c9, %c0_97] : memref<1x4x16x32xbf16, #tpu.memory_space<vmem>>, vector<1x4x1x32xbf16>
    %165 = vector.shape_cast %164 : vector<1x4x1x32xbf16> to vector<4x32xbf16>
    %166 = vector.shape_cast %163 : vector<4x32xbf16> to vector<1x4x1x32xbf16>
    tpu.vector_store %arg7[%c0_95, %c0_96, %c9, %c0_97], %166 {strides = array<i32>} : memref<1x4x16x32xbf16, #tpu.memory_space<vmem>>, vector<1x4x1x32xbf16>,
    %c0_98 = arith.constant 0 : index
    %c0_99 = arith.constant 0 : index
    %c5_100 = arith.constant 5 : index
    %c0_101 = arith.constant 0 : index
    %167 = vector.load %arg2[%c0_98, %c0_99, %c5_100, %c0_101] : memref<1x12x8x18xbf16, #tpu.memory_space<vmem>>, vector<1x12x1x18xbf16>
    %168 = vector.shape_cast %167 : vector<1x12x1x18xbf16> to vector<12x18xbf16>
    %169 = vector.extract_strided_slice %168 {offsets = [0, 0], sizes = [12, 16], strides = [1, 1]} : vector<12x18xbf16> to vector<12x16xbf16>
    %cst_102 = arith.constant dense<0.000000e+00> : vector<16x16xf32>
    %170 = tpu.matmul %3, %169, %cst_102 {dimension_numbers = #tpu.dot_dimension_numbers<[1], [0], [0], [1], [0, 0, 1, 1], [], []>} : vector<16x12xbf16>, vector<12x16xbf16>, vector<16x16xf32> -> vector<16x16xf32>
    %171 = vector.extract_strided_slice %168 {offsets = [0, 1], sizes = [12, 16], strides = [1, 1]} : vector<12x18xbf16> to vector<12x16xbf16>
    %cst_103 = arith.constant dense<0.000000e+00> : vector<16x16xf32>
    %172 = tpu.matmul %5, %171, %cst_103 {dimension_numbers = #tpu.dot_dimension_numbers<[1], [0], [0], [1], [0, 0, 1, 1], [], []>} : vector<16x12xbf16>, vector<12x16xbf16>, vector<16x16xf32> -> vector<16x16xf32>
    %173 = arith.addf %170, %172 : vector<16x16xf32>
    %174 = vector.extract_strided_slice %168 {offsets = [0, 2], sizes = [12, 16], strides = [1, 1]} : vector<12x18xbf16> to vector<12x16xbf16>
    %cst_104 = arith.constant dense<0.000000e+00> : vector<16x16xf32>
    %175 = tpu.matmul %7, %174, %cst_104 {dimension_numbers = #tpu.dot_dimension_numbers<[1], [0], [0], [1], [0, 0, 1, 1], [], []>} : vector<16x12xbf16>, vector<12x16xbf16>, vector<16x16xf32> -> vector<16x16xf32>
    %176 = arith.addf %173, %175 : vector<16x16xf32>
    %177 = vector.broadcast %0 : vector<16x1xf32> to vector<16x16xf32>
    %178 = arith.mulf %176, %177 : vector<16x16xf32>
    %179 = vector.broadcast %1 : vector<16x1xf32> to vector<16x16xf32>
    %180 = arith.addf %178, %179 : vector<16x16xf32>
    %cst_105 = arith.constant 0.000000e+00 : f32
    %181 = vector.broadcast %cst_105 : f32 to vector<16x16xf32>
    %182 = arith.maximumf %180, %181 : vector<16x16xf32>
    %183 = arith.truncf %182 : vector<16x16xf32> to vector<16x16xbf16>
    %184 = vector.extract_strided_slice %183 {offsets = [0, 0], sizes = [8, 16], strides = [1, 1]} : vector<16x16xbf16> to vector<8x16xbf16>
    %cst_106 = arith.constant dense<0.000000e+00> : vector<8x32xf32>
    %185 = tpu.matmul %184, %9, %cst_106 {dimension_numbers = #tpu.dot_dimension_numbers<[1], [0], [0], [1], [0, 0, 1, 1], [], []>} : vector<8x16xbf16>, vector<16x32xbf16>, vector<8x32xf32> -> vector<8x32xf32>
    %186 = vector.extract_strided_slice %183 {offsets = [8, 0], sizes = [8, 16], strides = [1, 1]} : vector<16x16xbf16> to vector<8x16xbf16>
    %cst_107 = arith.constant dense<0.000000e+00> : vector<8x32xf32>
    %187 = tpu.matmul %186, %11, %cst_107 {dimension_numbers = #tpu.dot_dimension_numbers<[1], [0], [0], [1], [0, 0, 1, 1], [], []>} : vector<8x16xbf16>, vector<16x32xbf16>, vector<8x32xf32> -> vector<8x32xf32>
    %188 = arith.addf %185, %187 : vector<8x32xf32>
    %189 = arith.truncf %188 : vector<8x32xf32> to vector<8x32xbf16>
    %190 = vector.extract_strided_slice %189 {offsets = [0, 0], sizes = [4, 32], strides = [1, 1]} : vector<8x32xbf16> to vector<4x32xbf16>
    %c0_108 = arith.constant 0 : index
    %c0_109 = arith.constant 0 : index
    %c10 = arith.constant 10 : index
    %c0_110 = arith.constant 0 : index
    %191 = vector.load %arg7[%c0_108, %c0_109, %c10, %c0_110] : memref<1x4x16x32xbf16, #tpu.memory_space<vmem>>, vector<1x4x1x32xbf16>
    %192 = vector.shape_cast %191 : vector<1x4x1x32xbf16> to vector<4x32xbf16>
    %193 = vector.shape_cast %190 : vector<4x32xbf16> to vector<1x4x1x32xbf16>
    tpu.vector_store %arg7[%c0_108, %c0_109, %c10, %c0_110], %193 {strides = array<i32>} : memref<1x4x16x32xbf16, #tpu.memory_space<vmem>>, vector<1x4x1x32xbf16>,
    %194 = vector.extract_strided_slice %189 {offsets = [4, 0], sizes = [4, 32], strides = [1, 1]} : vector<8x32xbf16> to vector<4x32xbf16>
    %c0_111 = arith.constant 0 : index
    %c0_112 = arith.constant 0 : index
    %c11 = arith.constant 11 : index
    %c0_113 = arith.constant 0 : index
    %195 = vector.load %arg7[%c0_111, %c0_112, %c11, %c0_113] : memref<1x4x16x32xbf16, #tpu.memory_space<vmem>>, vector<1x4x1x32xbf16>
    %196 = vector.shape_cast %195 : vector<1x4x1x32xbf16> to vector<4x32xbf16>
    %197 = vector.shape_cast %194 : vector<4x32xbf16> to vector<1x4x1x32xbf16>
    tpu.vector_store %arg7[%c0_111, %c0_112, %c11, %c0_113], %197 {strides = array<i32>} : memref<1x4x16x32xbf16, #tpu.memory_space<vmem>>, vector<1x4x1x32xbf16>,
    %c0_114 = arith.constant 0 : index
    %c0_115 = arith.constant 0 : index
    %c6_116 = arith.constant 6 : index
    %c0_117 = arith.constant 0 : index
    %198 = vector.load %arg2[%c0_114, %c0_115, %c6_116, %c0_117] : memref<1x12x8x18xbf16, #tpu.memory_space<vmem>>, vector<1x12x1x18xbf16>
    %199 = vector.shape_cast %198 : vector<1x12x1x18xbf16> to vector<12x18xbf16>
    %200 = vector.extract_strided_slice %199 {offsets = [0, 0], sizes = [12, 16], strides = [1, 1]} : vector<12x18xbf16> to vector<12x16xbf16>
    %cst_118 = arith.constant dense<0.000000e+00> : vector<16x16xf32>
    %201 = tpu.matmul %3, %200, %cst_118 {dimension_numbers = #tpu.dot_dimension_numbers<[1], [0], [0], [1], [0, 0, 1, 1], [], []>} : vector<16x12xbf16>, vector<12x16xbf16>, vector<16x16xf32> -> vector<16x16xf32>
    %202 = vector.extract_strided_slice %199 {offsets = [0, 1], sizes = [12, 16], strides = [1, 1]} : vector<12x18xbf16> to vector<12x16xbf16>
    %cst_119 = arith.constant dense<0.000000e+00> : vector<16x16xf32>
    %203 = tpu.matmul %5, %202, %cst_119 {dimension_numbers = #tpu.dot_dimension_numbers<[1], [0], [0], [1], [0, 0, 1, 1], [], []>} : vector<16x12xbf16>, vector<12x16xbf16>, vector<16x16xf32> -> vector<16x16xf32>
    %204 = arith.addf %201, %203 : vector<16x16xf32>
    %205 = vector.extract_strided_slice %199 {offsets = [0, 2], sizes = [12, 16], strides = [1, 1]} : vector<12x18xbf16> to vector<12x16xbf16>
    %cst_120 = arith.constant dense<0.000000e+00> : vector<16x16xf32>
    %206 = tpu.matmul %7, %205, %cst_120 {dimension_numbers = #tpu.dot_dimension_numbers<[1], [0], [0], [1], [0, 0, 1, 1], [], []>} : vector<16x12xbf16>, vector<12x16xbf16>, vector<16x16xf32> -> vector<16x16xf32>
    %207 = arith.addf %204, %206 : vector<16x16xf32>
    %208 = vector.broadcast %0 : vector<16x1xf32> to vector<16x16xf32>
    %209 = arith.mulf %207, %208 : vector<16x16xf32>
    %210 = vector.broadcast %1 : vector<16x1xf32> to vector<16x16xf32>
    %211 = arith.addf %209, %210 : vector<16x16xf32>
    %cst_121 = arith.constant 0.000000e+00 : f32
    %212 = vector.broadcast %cst_121 : f32 to vector<16x16xf32>
    %213 = arith.maximumf %211, %212 : vector<16x16xf32>
    %214 = arith.truncf %213 : vector<16x16xf32> to vector<16x16xbf16>
    %215 = vector.extract_strided_slice %214 {offsets = [0, 0], sizes = [8, 16], strides = [1, 1]} : vector<16x16xbf16> to vector<8x16xbf16>
    %cst_122 = arith.constant dense<0.000000e+00> : vector<8x32xf32>
    %216 = tpu.matmul %215, %9, %cst_122 {dimension_numbers = #tpu.dot_dimension_numbers<[1], [0], [0], [1], [0, 0, 1, 1], [], []>} : vector<8x16xbf16>, vector<16x32xbf16>, vector<8x32xf32> -> vector<8x32xf32>
    %217 = vector.extract_strided_slice %214 {offsets = [8, 0], sizes = [8, 16], strides = [1, 1]} : vector<16x16xbf16> to vector<8x16xbf16>
    %cst_123 = arith.constant dense<0.000000e+00> : vector<8x32xf32>
    %218 = tpu.matmul %217, %11, %cst_123 {dimension_numbers = #tpu.dot_dimension_numbers<[1], [0], [0], [1], [0, 0, 1, 1], [], []>} : vector<8x16xbf16>, vector<16x32xbf16>, vector<8x32xf32> -> vector<8x32xf32>
    %219 = arith.addf %216, %218 : vector<8x32xf32>
    %220 = arith.truncf %219 : vector<8x32xf32> to vector<8x32xbf16>
    %221 = vector.extract_strided_slice %220 {offsets = [0, 0], sizes = [4, 32], strides = [1, 1]} : vector<8x32xbf16> to vector<4x32xbf16>
    %c0_124 = arith.constant 0 : index
    %c0_125 = arith.constant 0 : index
    %c12 = arith.constant 12 : index
    %c0_126 = arith.constant 0 : index
    %222 = vector.load %arg7[%c0_124, %c0_125, %c12, %c0_126] : memref<1x4x16x32xbf16, #tpu.memory_space<vmem>>, vector<1x4x1x32xbf16>
    %223 = vector.shape_cast %222 : vector<1x4x1x32xbf16> to vector<4x32xbf16>
    %224 = vector.shape_cast %221 : vector<4x32xbf16> to vector<1x4x1x32xbf16>
    tpu.vector_store %arg7[%c0_124, %c0_125, %c12, %c0_126], %224 {strides = array<i32>} : memref<1x4x16x32xbf16, #tpu.memory_space<vmem>>, vector<1x4x1x32xbf16>,
    %225 = vector.extract_strided_slice %220 {offsets = [4, 0], sizes = [4, 32], strides = [1, 1]} : vector<8x32xbf16> to vector<4x32xbf16>
    %c0_127 = arith.constant 0 : index
    %c0_128 = arith.constant 0 : index
    %c13 = arith.constant 13 : index
    %c0_129 = arith.constant 0 : index
    %226 = vector.load %arg7[%c0_127, %c0_128, %c13, %c0_129] : memref<1x4x16x32xbf16, #tpu.memory_space<vmem>>, vector<1x4x1x32xbf16>
    %227 = vector.shape_cast %226 : vector<1x4x1x32xbf16> to vector<4x32xbf16>
    %228 = vector.shape_cast %225 : vector<4x32xbf16> to vector<1x4x1x32xbf16>
    tpu.vector_store %arg7[%c0_127, %c0_128, %c13, %c0_129], %228 {strides = array<i32>} : memref<1x4x16x32xbf16, #tpu.memory_space<vmem>>, vector<1x4x1x32xbf16>,
    %c0_130 = arith.constant 0 : index
    %c0_131 = arith.constant 0 : index
    %c7_132 = arith.constant 7 : index
    %c0_133 = arith.constant 0 : index
    %229 = vector.load %arg2[%c0_130, %c0_131, %c7_132, %c0_133] : memref<1x12x8x18xbf16, #tpu.memory_space<vmem>>, vector<1x12x1x18xbf16>
    %230 = vector.shape_cast %229 : vector<1x12x1x18xbf16> to vector<12x18xbf16>
    %231 = vector.extract_strided_slice %230 {offsets = [0, 0], sizes = [12, 16], strides = [1, 1]} : vector<12x18xbf16> to vector<12x16xbf16>
    %cst_134 = arith.constant dense<0.000000e+00> : vector<16x16xf32>
    %232 = tpu.matmul %3, %231, %cst_134 {dimension_numbers = #tpu.dot_dimension_numbers<[1], [0], [0], [1], [0, 0, 1, 1], [], []>} : vector<16x12xbf16>, vector<12x16xbf16>, vector<16x16xf32> -> vector<16x16xf32>
    %233 = vector.extract_strided_slice %230 {offsets = [0, 1], sizes = [12, 16], strides = [1, 1]} : vector<12x18xbf16> to vector<12x16xbf16>
    %cst_135 = arith.constant dense<0.000000e+00> : vector<16x16xf32>
    %234 = tpu.matmul %5, %233, %cst_135 {dimension_numbers = #tpu.dot_dimension_numbers<[1], [0], [0], [1], [0, 0, 1, 1], [], []>} : vector<16x12xbf16>, vector<12x16xbf16>, vector<16x16xf32> -> vector<16x16xf32>
    %235 = arith.addf %232, %234 : vector<16x16xf32>
    %236 = vector.extract_strided_slice %230 {offsets = [0, 2], sizes = [12, 16], strides = [1, 1]} : vector<12x18xbf16> to vector<12x16xbf16>
    %cst_136 = arith.constant dense<0.000000e+00> : vector<16x16xf32>
    %237 = tpu.matmul %7, %236, %cst_136 {dimension_numbers = #tpu.dot_dimension_numbers<[1], [0], [0], [1], [0, 0, 1, 1], [], []>} : vector<16x12xbf16>, vector<12x16xbf16>, vector<16x16xf32> -> vector<16x16xf32>
    %238 = arith.addf %235, %237 : vector<16x16xf32>
    %239 = vector.broadcast %0 : vector<16x1xf32> to vector<16x16xf32>
    %240 = arith.mulf %238, %239 : vector<16x16xf32>
    %241 = vector.broadcast %1 : vector<16x1xf32> to vector<16x16xf32>
    %242 = arith.addf %240, %241 : vector<16x16xf32>
    %cst_137 = arith.constant 0.000000e+00 : f32
    %243 = vector.broadcast %cst_137 : f32 to vector<16x16xf32>
    %244 = arith.maximumf %242, %243 : vector<16x16xf32>
    %245 = arith.truncf %244 : vector<16x16xf32> to vector<16x16xbf16>
    %246 = vector.extract_strided_slice %245 {offsets = [0, 0], sizes = [8, 16], strides = [1, 1]} : vector<16x16xbf16> to vector<8x16xbf16>
    %cst_138 = arith.constant dense<0.000000e+00> : vector<8x32xf32>
    %247 = tpu.matmul %246, %9, %cst_138 {dimension_numbers = #tpu.dot_dimension_numbers<[1], [0], [0], [1], [0, 0, 1, 1], [], []>} : vector<8x16xbf16>, vector<16x32xbf16>, vector<8x32xf32> -> vector<8x32xf32>
    %248 = vector.extract_strided_slice %245 {offsets = [8, 0], sizes = [8, 16], strides = [1, 1]} : vector<16x16xbf16> to vector<8x16xbf16>
    %cst_139 = arith.constant dense<0.000000e+00> : vector<8x32xf32>
    %249 = tpu.matmul %248, %11, %cst_139 {dimension_numbers = #tpu.dot_dimension_numbers<[1], [0], [0], [1], [0, 0, 1, 1], [], []>} : vector<8x16xbf16>, vector<16x32xbf16>, vector<8x32xf32> -> vector<8x32xf32>
    %250 = arith.addf %247, %249 : vector<8x32xf32>
    %251 = arith.truncf %250 : vector<8x32xf32> to vector<8x32xbf16>
    %252 = vector.extract_strided_slice %251 {offsets = [0, 0], sizes = [4, 32], strides = [1, 1]} : vector<8x32xbf16> to vector<4x32xbf16>
    %c0_140 = arith.constant 0 : index
    %c0_141 = arith.constant 0 : index
    %c14 = arith.constant 14 : index
    %c0_142 = arith.constant 0 : index
    %253 = vector.load %arg7[%c0_140, %c0_141, %c14, %c0_142] : memref<1x4x16x32xbf16, #tpu.memory_space<vmem>>, vector<1x4x1x32xbf16>
    %254 = vector.shape_cast %253 : vector<1x4x1x32xbf16> to vector<4x32xbf16>
    %255 = vector.shape_cast %252 : vector<4x32xbf16> to vector<1x4x1x32xbf16>
    tpu.vector_store %arg7[%c0_140, %c0_141, %c14, %c0_142], %255 {strides = array<i32>} : memref<1x4x16x32xbf16, #tpu.memory_space<vmem>>, vector<1x4x1x32xbf16>,
    %256 = vector.extract_strided_slice %251 {offsets = [4, 0], sizes = [4, 32], strides = [1, 1]} : vector<8x32xbf16> to vector<4x32xbf16>
    %c0_143 = arith.constant 0 : index
    %c0_144 = arith.constant 0 : index
    %c15 = arith.constant 15 : index
    %c0_145 = arith.constant 0 : index
    %257 = vector.load %arg7[%c0_143, %c0_144, %c15, %c0_145] : memref<1x4x16x32xbf16, #tpu.memory_space<vmem>>, vector<1x4x1x32xbf16>
    %258 = vector.shape_cast %257 : vector<1x4x1x32xbf16> to vector<4x32xbf16>
    %259 = vector.shape_cast %256 : vector<4x32xbf16> to vector<1x4x1x32xbf16>
    tpu.vector_store %arg7[%c0_143, %c0_144, %c15, %c0_145], %259 {strides = array<i32>} : memref<1x4x16x32xbf16, #tpu.memory_space<vmem>>, vector<1x4x1x32xbf16>,
    return
  }
  func.func @transform_0(%arg0: i32, %arg1: i32) -> (i32, i32, i32, i32) {
    %c0_i32 = arith.constant 0 : i32
    %c0_i32_0 = arith.constant 0 : i32
    %c0_i32_1 = arith.constant 0 : i32
    return %arg0, %c0_i32, %arg1, %c0_i32_0 : i32, i32, i32, i32
  }
  func.func @transform_1(%arg0: i32, %arg1: i32) -> (i32, i32, i32) {
    %c0_i32 = arith.constant 0 : i32
    %c0_i32_0 = arith.constant 0 : i32
    %c0_i32_1 = arith.constant 0 : i32
    %c0_i32_2 = arith.constant 0 : i32
    return %c0_i32, %c0_i32_0, %c0_i32_1 : i32, i32, i32
  }
  func.func @transform_2(%arg0: i32, %arg1: i32) -> (i32, i32) {
    %c0_i32 = arith.constant 0 : i32
    %c0_i32_0 = arith.constant 0 : i32
    %c0_i32_1 = arith.constant 0 : i32
    return %c0_i32, %c0_i32_0 : i32, i32
  }
  func.func @transform_3(%arg0: i32, %arg1: i32) -> (i32, i32) {
    %c0_i32 = arith.constant 0 : i32
    %c0_i32_0 = arith.constant 0 : i32
    %c0_i32_1 = arith.constant 0 : i32
    return %c0_i32, %c0_i32_0 : i32, i32
  }
  func.func @transform_4(%arg0: i32, %arg1: i32) -> (i32, i32, i32) {
    %c0_i32 = arith.constant 0 : i32
    %c0_i32_0 = arith.constant 0 : i32
    %c0_i32_1 = arith.constant 0 : i32
    %c0_i32_2 = arith.constant 0 : i32
    return %c0_i32, %c0_i32_0, %c0_i32_1 : i32, i32, i32
  }
  func.func @transform_5(%arg0: i32, %arg1: i32) -> (i32, i32, i32, i32) {
    %c0_i32 = arith.constant 0 : i32
    %c0_i32_0 = arith.constant 0 : i32
    %c0_i32_1 = arith.constant 0 : i32
    return %arg0, %c0_i32, %arg1, %c0_i32_0 : i32, i32, i32, i32
  }
}

</mosaic_0001>

<llo_original>
// kernel: dense_upsampling_convolution.1
$region0: #{dense_upsampling_convolution.1}
  #allocation0 [shape = 'u32[]', space=smem, size = 0x4, offset = 0x4, fixed_abs, tag = 'smem constant byte address 0x4 - core index']
  #allocation1 [shape = 'u32[144,128]{1,0:T(1,128)}', space=vmem, size = 0x12000, scoped, tag = 'internal scratch']
  #allocation12 [shape = 's32[]', space=sflag, size = 0x4, offset = 0, fixed_abs, tag = 'sflag constant byte address 0x0 - dummy sync flag']
  %s0 = inlined_call_operand.hbm [shape: bf16[2,12,16,18], index: 0, kind: input, shape index: {}]
  %s1 = inlined_call_operand.hbm [shape: bf16[3,16,12], index: 1, kind: input, shape index: {}]
  %s2 = inlined_call_operand.hbm [shape: f32[16,1], index: 2, kind: input, shape index: {}]
  %s3 = inlined_call_operand.hbm [shape: f32[16,1], index: 3, kind: input, shape index: {}]
  %s4 = inlined_call_operand.hbm [shape: bf16[2,16,32], index: 4, kind: input, shape index: {}]
  %s5 = inlined_call_operand.hbm [shape: bf16[2,4,32,32], index: 5, kind: output, shape index: {}]
  %s6 = sld [smem:[#allocation0]]
  $region73: #{dense_upsampling_convolution.1} parent=0
    _
  %s8 = ssub.s32 1, %s6
  %s9 = scalar_select 0, %s8, %s6
  $region1: #{dense_upsampling_convolution.1} parent=0
    #allocation2 [shape = 'u8[49152]{0}', space=vmem, size = 0xc000, scoped, tag = 'input window, operand 0']
    #allocation3 [shape = 's32[2]{0}', space=sflag, size = 0x8, scoped, tag = 'scoped memory for dense_upsampling_convolution.1']
    #allocation4 [shape = 's32[2]{0}', space=sflag, size = 0x8, scoped, tag = 'scoped memory for dense_upsampling_convolution.1']
    #allocation5 [shape = 'u8[12288]{0}', space=vmem, size = 0x3000, scoped, tag = 'input window, operand 1, single buffered']
    #allocation6 [shape = 's32[1]{0}', space=sflag, size = 0x4, scoped, tag = 'scoped memory for dense_upsampling_convolution.1']
    #allocation7 [shape = 'u8[8192]{0}', space=vmem, size = 0x2000, scoped, tag = 'input window, operand 2, single buffered']
    #allocation8 [shape = 'u8[8192]{0}', space=vmem, size = 0x2000, scoped, tag = 'input window, operand 3, single buffered']
    #allocation9 [shape = 's32[1]{0}', space=sflag, size = 0x4, scoped, tag = 'scoped memory for dense_upsampling_convolution.1']
    #allocation10 [shape = 'u8[8192]{0}', space=vmem, size = 0x2000, scoped, tag = 'input window, operand 4, single buffered']
    #allocation11 [shape = 'u8[32768]{0}', space=vmem, size = 0x8000, scoped, tag = 'output window, operand 0']
    %10 = vsyncpa [#allocation3], 0
    %s11 = scalar_lea.sflag [#allocation3], 1
    %12 = vsyncpa %s11, 0
    %13 = vsyncpa [#allocation6], 0
    %14 = vsyncpa [#allocation9], 0
    %15 = vsyncpa [#allocation4], 0
    %s16 = scalar_lea.sflag [#allocation4], 1
    %17 = vsyncpa %s16, 0
    loop: start=0, step=1, limit=6
    $region2: #{dense_upsampling_convolution.1} parent=1 // loop_pre_header
      _
    $region3: #{dense_upsampling_convolution.1} parent=1 // loop_header
      %s19 = sphi 0, %s23
      %p20 = scmp.ge.s32.totalorder %s19, 6
      %s26 = sphi 0, %s38
      %s27 = sphi 0, %s34
      %s28 = sphi 0, %s26
      %s29 = sphi 0, %s27
      %s30 = sphi 0, %s28
      %s31 = sphi 0, %s29
      %s43 = sphi 0, %s45
      %s46 = sphi 0, %s43
      %s47 = sphi 0, %s46
      %s63 = sphi 0, %s47
      %s67 = sphi 0, %s67
      %s69 = sphi 0, %s67
      %s70 = sphi 0, %s69
      %s84 = sphi 0, %s70
      %s88 = sphi 0, %s88
      %s90 = sphi 0, %s88
      %s91 = sphi 0, %s90
      %s105 = sphi 0, %s91
      %s109 = sphi 0, %s109
      %s111 = sphi 0, %s109
      %s112 = sphi 0, %s111
      %s126 = sphi 0, %s112
      %s130 = sphi 0, %s130
      %s132 = sphi 0, %s130
      %s133 = sphi 0, %s132
      %s147 = sphi 0, %s133
      %s155 = sphi 0, %s157
      %s158 = sphi 0, %s155
      %s159 = sphi 0, %s158
      %s175 = sphi 0, %s159
    $region4: #{dense_upsampling_convolution.1} parent=1 // loop_header_branch
      %22 = sbr.rel (%p20) target = $region8
    $region5: #{dense_upsampling_convolution.1} parent=1 // loop_body
      %s24 = ssub.s32 %s19, 1
      %s25 = ssub.s32 %s19, 2
      %s32 = sadd.s32 1, %s27
      %p33 = scmp.ge.s32.totalorder %s32, 2
      %s34 = scalar_select %p33, 0, %s32
      %s35 = sadd.s32 1, %s26
      %s36 = scalar_select %p33, %s35, %s26
      %p37 = scmp.ge.s32.totalorder %s36, 2
      %s38 = scalar_select %p37, 0, %s36
      %s39 = ssub.s32 %s26, %s38
      %s40 = ssub.s32 %s27, %s34
      %s41 = sor.u32 %s39, %s40
      %p42 = scmp.eq.s32.totalorder %s41, 0
      %s44 = sadd.s32 %s43, 1
      %s45 = scalar_select %p42, %s43, %s44
      %p48 = pneg %p42
      %p49 = scmp.eq.s32.totalorder %s19, 3
      %p50 = por %p48, %p49
      %p51 = scmp.ne.s32.totalorder %s43, %s46
      %p52 = scmp.eq.s32.totalorder %s19, 0
      %p53 = por %p51, %p52
      %p54 = scmp.ne.s32.totalorder %s43, %s46
      %p55 = scmp.eq.s32.totalorder %s24, 3
      %p56 = por %p54, %p55
      %p57 = scmp.ne.s32.totalorder %s46, %s47
      %p58 = scmp.eq.s32.totalorder %s24, 0
      %p59 = por %p57, %p58
      %p60 = scmp.ne.s32.totalorder %s46, %s47
      %p61 = scmp.eq.s32.totalorder %s25, 3
      %p62 = por %p60, %p61
      %p64 = scmp.ne.s32.totalorder %s47, %s63
      %p65 = scmp.eq.s32.totalorder %s25, 0
      %p66 = por %p64, %p65
      %s68 = sadd.s32 %s67, 1
      %p71 = scmp.eq.s32.totalorder %s19, 3
      %p72 = scmp.ne.s32.totalorder %s67, %s69
      %p73 = scmp.eq.s32.totalorder %s19, 0
      %p74 = por %p72, %p73
      %p75 = scmp.ne.s32.totalorder %s67, %s69
      %p76 = scmp.eq.s32.totalorder %s24, 3
      %p77 = por %p75, %p76
      %p78 = scmp.ne.s32.totalorder %s69, %s70
      %p79 = scmp.eq.s32.totalorder %s24, 0
      %p80 = por %p78, %p79
      %p81 = scmp.ne.s32.totalorder %s69, %s70
      %p82 = scmp.eq.s32.totalorder %s25, 3
      %p83 = por %p81, %p82
      %p85 = scmp.ne.s32.totalorder %s70, %s84
      %p86 = scmp.eq.s32.totalorder %s25, 0
      %p87 = por %p85, %p86
      %s89 = sadd.s32 %s88, 1
      %p92 = scmp.eq.s32.totalorder %s19, 3
      %p93 = scmp.ne.s32.totalorder %s88, %s90
      %p94 = scmp.eq.s32.totalorder %s19, 0
      %p95 = por %p93, %p94
      %p96 = scmp.ne.s32.totalorder %s88, %s90
      %p97 = scmp.eq.s32.totalorder %s24, 3
      %p98 = por %p96, %p97
      %p99 = scmp.ne.s32.totalorder %s90, %s91
      %p100 = scmp.eq.s32.totalorder %s24, 0
      %p101 = por %p99, %p100
      %p102 = scmp.ne.s32.totalorder %s90, %s91
      %p103 = scmp.eq.s32.totalorder %s25, 3
      %p104 = por %p102, %p103
      %p106 = scmp.ne.s32.totalorder %s91, %s105
      %p107 = scmp.eq.s32.totalorder %s25, 0
      %p108 = por %p106, %p107
      %s110 = sadd.s32 %s109, 1
      %p113 = scmp.eq.s32.totalorder %s19, 3
      %p114 = scmp.ne.s32.totalorder %s109, %s111
      %p115 = scmp.eq.s32.totalorder %s19, 0
      %p116 = por %p114, %p115
      %p117 = scmp.ne.s32.totalorder %s109, %s111
      %p118 = scmp.eq.s32.totalorder %s24, 3
      %p119 = por %p117, %p118
      %p120 = scmp.ne.s32.totalorder %s111, %s112
      %p121 = scmp.eq.s32.totalorder %s24, 0
      %p122 = por %p120, %p121
      %p123 = scmp.ne.s32.totalorder %s111, %s112
      %p124 = scmp.eq.s32.totalorder %s25, 3
      %p125 = por %p123, %p124
      %p127 = scmp.ne.s32.totalorder %s112, %s126
      %p128 = scmp.eq.s32.totalorder %s25, 0
      %p129 = por %p127, %p128
      %s131 = sadd.s32 %s130, 1
      %p134 = scmp.eq.s32.totalorder %s19, 3
      %p135 = scmp.ne.s32.totalorder %s130, %s132
      %p136 = scmp.eq.s32.totalorder %s19, 0
      %p137 = por %p135, %p136
      %p138 = scmp.ne.s32.totalorder %s130, %s132
      %p139 = scmp.eq.s32.totalorder %s24, 3
      %p140 = por %p138, %p139
      %p141 = scmp.ne.s32.totalorder %s132, %s133
      %p142 = scmp.eq.s32.totalorder %s24, 0
      %p143 = por %p141, %p142
      %p144 = scmp.ne.s32.totalorder %s132, %s133
      %p145 = scmp.eq.s32.totalorder %s25, 3
      %p146 = por %p144, %p145
      %p148 = scmp.ne.s32.totalorder %s133, %s147
      %p149 = scmp.eq.s32.totalorder %s25, 0
      %p150 = por %p148, %p149
      %s151 = ssub.s32 %s26, %s38
      %s152 = ssub.s32 %s27, %s34
      %s153 = sor.u32 %s151, %s152
      %p154 = scmp.eq.s32.totalorder %s153, 0
      %s156 = sadd.s32 %s155, 1
      %s157 = scalar_select %p154, %s155, %s156
      %p160 = pneg %p154
      %p161 = scmp.eq.s32.totalorder %s19, 3
      %p162 = por %p160, %p161
      %p163 = scmp.ne.s32.totalorder %s155, %s158
      %p164 = scmp.eq.s32.totalorder %s19, 0
      %p165 = por %p163, %p164
      %p166 = scmp.ne.s32.totalorder %s155, %s158
      %p167 = scmp.eq.s32.totalorder %s24, 3
      %p168 = por %p166, %p167
      %p169 = scmp.ne.s32.totalorder %s158, %s159
      %p170 = scmp.eq.s32.totalorder %s24, 0
      %p171 = por %p169, %p170
      %p172 = scmp.ne.s32.totalorder %s158, %s159
      %p173 = scmp.eq.s32.totalorder %s25, 3
      %p174 = por %p172, %p173
      %p176 = scmp.ne.s32.totalorder %s159, %s175
      %p177 = scmp.eq.s32.totalorder %s25, 0
      %p178 = por %p176, %p177
      %p179 = scmp.le.s32.totalorder 1, %s19
      %p180 = scmp.lt.s32.totalorder %s19, 5
      %p181 = pnand %p179, %p180
      %p182 = pneg %p181
      // Predicated region
      $region9: #{dense_upsampling_convolution.1} parent=5 // pred_check
        _
      $region10: #{dense_upsampling_convolution.1} parent=5 // pred_check_branch
        %184 = sbr.rel (%p181) target = $region12
      $region11: #{dense_upsampling_convolution.1} parent=5 // pred_region
        %s185 = ssub.s32 %s19, 1
        // Predicated region
        $region13: #{dense_upsampling_convolution.1} parent=11 // pred_check
          %p186 = pneg %p80
        $region14: #{dense_upsampling_convolution.1} parent=11 // pred_check_branch
          %188 = sbr.rel (%p186) target = $region16
        $region15: #{dense_upsampling_convolution.1} parent=11 // pred_region
          %s190 = ssub.s32 384, 384
          %191 = vsyncadd [#allocation6], %s190
          %s192 = sshll.u32 [#allocation5], 4
          %s193 = int_to_ptr.vmem [resolvable:$true] %s192
          %198 = dma.hbm_to_vmem [thread:$0]  %s1, 384, %s193, [#allocation6], 64, 64, 4
        $region16: #{dense_upsampling_convolution.1} parent=11 // pred_fallthru
          _
        // Predicated region
        $region17: #{dense_upsampling_convolution.1} parent=11 // pred_check
          %p199 = pneg %p101
        $region18: #{dense_upsampling_convolution.1} parent=11 // pred_check_branch
          %201 = sbr.rel (%p199) target = $region20
        $region19: #{dense_upsampling_convolution.1} parent=11 // pred_region
          %s203 = ssub.s32 256, 256
          %204 = vsyncadd [#allocation6], %s203
          %s205 = sshll.u32 [#allocation7], 4
          %s206 = int_to_ptr.vmem [resolvable:$true] %s205
          %211 = dma.hbm_to_vmem [thread:$0]  %s2, 256, %s206, [#allocation6], 128, 128, 8
        $region20: #{dense_upsampling_convolution.1} parent=11 // pred_fallthru
          _
        // Predicated region
        $region21: #{dense_upsampling_convolution.1} parent=11 // pred_check
          %p212 = pneg %p122
        $region22: #{dense_upsampling_convolution.1} parent=11 // pred_check_branch
          %214 = sbr.rel (%p212) target = $region24
        $region23: #{dense_upsampling_convolution.1} parent=11 // pred_region
          %s216 = ssub.s32 256, 256
          %217 = vsyncadd [#allocation9], %s216
          %s218 = sshll.u32 [#allocation8], 4
          %s219 = int_to_ptr.vmem [resolvable:$true] %s218
          %224 = dma.hbm_to_vmem [thread:$0]  %s3, 256, %s219, [#allocation9], 128, 128, 8
        $region24: #{dense_upsampling_convolution.1} parent=11 // pred_fallthru
          _
        // Predicated region
        $region25: #{dense_upsampling_convolution.1} parent=11 // pred_check
          %p225 = pneg %p143
        $region26: #{dense_upsampling_convolution.1} parent=11 // pred_check_branch
          %227 = sbr.rel (%p225) target = $region28
        $region27: #{dense_upsampling_convolution.1} parent=11 // pred_region
          %s229 = ssub.s32 256, 256
          %230 = vsyncadd [#allocation9], %s229
          %s231 = sshll.u32 [#allocation10], 4
          %s232 = int_to_ptr.vmem [resolvable:$true] %s231
          %237 = dma.hbm_to_vmem [thread:$0]  %s4, 256, %s232, [#allocation9], 64, 64, 4
        $region28: #{dense_upsampling_convolution.1} parent=11 // pred_fallthru
          _
      $region12: #{dense_upsampling_convolution.1} parent=5 // pred_fallthru
        _
      %p238 = scmp.lt.s32.totalorder %s19, 4
      // Predicated region
      $region29: #{dense_upsampling_convolution.1} parent=5 // pred_check
        %p239 = pneg %p238
      $region30: #{dense_upsampling_convolution.1} parent=5 // pred_check_branch
        %241 = sbr.rel (%p239) target = $region32
      $region31: #{dense_upsampling_convolution.1} parent=5 // pred_region
        // Predicated region
        $region33: #{dense_upsampling_convolution.1} parent=31 // pred_check
          %p242 = pneg %p53
        $region34: #{dense_upsampling_convolution.1} parent=31 // pred_check_branch
          %244 = sbr.rel (%p242) target = $region36
        $region35: #{dense_upsampling_convolution.1} parent=31 // pred_region
          %s245 = sand.u32 %s43, 1
          %s246 = scalar_lea.sflag [#allocation3], %s245
          %s247 = sand.u32 %s43, 1
          %s248 = smul.addr %s247, 48
          %s249 = scalar_lea.vmem [#allocation2], %s248
          %s251 = ssub.s32 768, 768
          %252 = vsyncadd %s246, %s251
          %s253 = smul.addr %s26, 24
          %s254 = sadd.s32 %s27, %s253
          %s255 = smul.addr %s254, 64
          %s256 = scalar_lea.hbm %s0, %s255
          %s257 = sshll.u32 %s249, 4
          %s258 = int_to_ptr.vmem [resolvable:$true] %s257
          %263 = dma.hbm_to_vmem [thread:$0]  %s256, 768, %s258, %s246, 128, 64, 4
        $region36: #{dense_upsampling_convolution.1} parent=31 // pred_fallthru
          _
      $region32: #{dense_upsampling_convolution.1} parent=5 // pred_fallthru
        _
      %p264 = scmp.le.s32.totalorder 1, %s19
      %p265 = scmp.lt.s32.totalorder %s19, 5
      %p266 = pnand %p264, %p265
      %p267 = pneg %p266
      // Predicated region
      $region37: #{dense_upsampling_convolution.1} parent=5 // pred_check
        _
      $region38: #{dense_upsampling_convolution.1} parent=5 // pred_check_branch
        %269 = sbr.rel (%p266) target = $region40
      $region39: #{dense_upsampling_convolution.1} parent=5 // pred_region
        %s270 = ssub.s32 %s19, 1
        %s271 = sand.u32 %s46, 1
        %s272 = scalar_lea.sflag [#allocation3], %s271
        %s273 = sand.u32 %s46, 1
        %s274 = smul.addr %s273, 48
        %s275 = scalar_lea.vmem [#allocation2], %s274
        // Predicated region
        $region41: #{dense_upsampling_convolution.1} parent=39 // pred_check
          %p276 = pneg %p59
        $region42: #{dense_upsampling_convolution.1} parent=39 // pred_check_branch
          %278 = sbr.rel (%p276) target = $region44
        $region43: #{dense_upsampling_convolution.1} parent=39 // pred_region
          %279 = dma.done %s272, 768
        $region44: #{dense_upsampling_convolution.1} parent=39 // pred_fallthru
          _
        // Predicated region
        $region45: #{dense_upsampling_convolution.1} parent=39 // pred_check
          %p280 = pneg %p80
        $region46: #{dense_upsampling_convolution.1} parent=39 // pred_check_branch
          %282 = sbr.rel (%p280) target = $region48
        $region47: #{dense_upsampling_convolution.1} parent=39 // pred_region
          %283 = dma.done [#allocation6], 384
        $region48: #{dense_upsampling_convolution.1} parent=39 // pred_fallthru
          _
        // Predicated region
        $region49: #{dense_upsampling_convolution.1} parent=39 // pred_check
          %p284 = pneg %p101
        $region50: #{dense_upsampling_convolution.1} parent=39 // pred_check_branch
          %286 = sbr.rel (%p284) target = $region52
        $region51: #{dense_upsampling_convolution.1} parent=39 // pred_region
          %287 = dma.done [#allocation6], 256
        $region52: #{dense_upsampling_convolution.1} parent=39 // pred_fallthru
          _
        // Predicated region
        $region53: #{dense_upsampling_convolution.1} parent=39 // pred_check
          %p288 = pneg %p122
        $region54: #{dense_upsampling_convolution.1} parent=39 // pred_check_branch
          %290 = sbr.rel (%p288) target = $region56
        $region55: #{dense_upsampling_convolution.1} parent=39 // pred_region
          %291 = dma.done [#allocation9], 256
        $region56: #{dense_upsampling_convolution.1} parent=39 // pred_fallthru
          _
        // Predicated region
        $region57: #{dense_upsampling_convolution.1} parent=39 // pred_check
          %p292 = pneg %p143
        $region58: #{dense_upsampling_convolution.1} parent=39 // pred_check_branch
          %294 = sbr.rel (%p292) target = $region60
        $region59: #{dense_upsampling_convolution.1} parent=39 // pred_region
          %295 = dma.done [#allocation9], 256
        $region60: #{dense_upsampling_convolution.1} parent=39 // pred_fallthru
          _
        %s296 = sand.u32 %s46, 1
        %s297 = scalar_lea.sflag [#allocation3], %s296
        %s298 = sand.u32 %s46, 1
        %s299 = smul.addr %s298, 48
        %s300 = scalar_lea.vmem [#allocation2], %s299
        %p301 = pneg %p59
        %p302 = pneg %p56
        %p303 = pneg %p80
        %p304 = pneg %p77
        %p305 = pneg %p101
        %p306 = pneg %p98
        %p307 = pneg %p122
        %p308 = pneg %p119
        %p309 = pneg %p143
        %p310 = pneg %p140
        %p311 = pneg %p171
        %p312 = pneg %p168
        %s313 = sand.u32 %s158, 1
        %s314 = scalar_lea.sflag [#allocation4], %s313
        %s315 = sand.u32 %s158, 1
        %s316 = smul.addr %s315, 32
        %s317 = scalar_lea.vmem [#allocation11], %s316
        %s318 = smul.u32 2, %s29
        %v320 = vld [vmem:[#allocation7] sm:$0xff]
        %v321 = vld [vmem:[#allocation7 + $0x8] sm:$0xff]
        %v322 = vld [vmem:[#allocation8] sm:$0xff]
        %v323 = vld [vmem:[#allocation8 + $0x8] sm:$0xff]
        %v324 = vld [vmem:[#allocation5] sm:$0xf]
        %v325 = vld [vmem:[#allocation5 + $0x4] sm:$0xf]
        %s326 = scalar_lea.vmem [#allocation5], 8
        %v327 = vld [vmem:[%s326] sm:$0xf]
        %v328 = vld [vmem:[%s326 + $0x4] sm:$0xf]
        %s329 = scalar_lea.vmem [#allocation5], 16
        %v330 = vld [vmem:[%s329] sm:$0xf]
        %v331 = vld [vmem:[%s329 + $0x4] sm:$0xf]
        %v332 = vld [vmem:[#allocation10] sm:$0xf]
        %v333 = vld [vmem:[#allocation10 + $0x4] sm:$0xf]
        %s334 = scalar_lea.vmem [#allocation10], 8
        %v335 = vld [vmem:[%s334] sm:$0xf]
        %v336 = vld [vmem:[%s334 + $0x4] sm:$0xf]
        %v337 = vld [vmem:[%s275] sm:$0x1]
        %v338 = vld [vmem:[%s275 + $0x4] sm:$0x1]
        %v339 = vld [vmem:[%s275 + $0x8] sm:$0x1]
        %v340 = vld [vmem:[%s275 + $0xc] sm:$0x1]
        %v341 = vld [vmem:[%s275 + $0x10] sm:$0x1]
        %v342 = vld [vmem:[%s275 + $0x14] sm:$0x1]
        %v343 = vld [vmem:[%s275 + $0x18] sm:$0x1]
        %v344 = vld [vmem:[%s275 + $0x1c] sm:$0x1]
        %v345 = vld [vmem:[%s275 + $0x20] sm:$0x1]
        %v346 = vld [vmem:[%s275 + $0x24] sm:$0x1]
        %v347 = vld [vmem:[%s275 + $0x28] sm:$0x1]
        %v348 = vld [vmem:[%s275 + $0x2c] sm:$0x1]
        %v351 = vunpack.c.l.b16 %v327
        %v352 = vunpack.c.l.b16 %v328
        %v353 = vpack.c.b16 %v352, %v351
        %v366 = vunpack.c.l.b16 %v337
        %v367 = vunpack.c.l.b16 %v338
        %v368 = vunpack.c.l.b16 %v339
        %v369 = vunpack.c.l.b16 %v340
        %v370 = vunpack.c.l.b16 %v341
        %v371 = vunpack.c.l.b16 %v342
        %v372 = vunpack.c.l.b16 %v343
        %v373 = vunpack.c.l.b16 %v344
        %v374 = vunpack.c.l.b16 %v345
        %v375 = vunpack.c.l.b16 %v346
        %v376 = vunpack.c.l.b16 %v347
        %v377 = vunpack.c.l.b16 %v348
        %v378 = vpack.c.b16 %v366, %v366
        %v379 = vpack.c.b16 %v367, %v367
        %v380 = vpack.c.b16 %v368, %v368
        %v381 = vpack.c.b16 %v369, %v369
        %v382 = vpack.c.b16 %v370, %v370
        %v383 = vpack.c.b16 %v371, %v371
        %v384 = vpack.c.b16 %v372, %v372
        %v385 = vpack.c.b16 %v373, %v373
        %v386 = vpack.c.b16 %v374, %v374
        %v387 = vpack.c.b16 %v375, %v375
        %v388 = vpack.c.b16 %v376, %v376
        %v389 = vpack.c.b16 %v377, %v377
        %v390 = vunpack.c.l.b16 %v378
        %v391 = vunpack.c.l.b16 %v379
        %v392 = vunpack.c.l.b16 %v380
        %v393 = vunpack.c.l.b16 %v381
        %v394 = vunpack.c.l.b16 %v382
        %v395 = vunpack.c.l.b16 %v383
        %v396 = vunpack.c.l.b16 %v384
        %v397 = vunpack.c.l.b16 %v385
        %v398 = vunpack.c.l.b16 %v386
        %v399 = vunpack.c.l.b16 %v387
        %v400 = vunpack.c.l.b16 %v388
        %v401 = vunpack.c.l.b16 %v389
        %v402 = vrot.slane %v391, 7
        %vm403 = vcmask 1041409
        %v404 = vsel %vm403, %v402, %v390
        %v405 = vrot.slane %v392, 6
        %vm406 = vcmask 1042434
        %v407 = vsel %vm406, %v405, %v404
        %v408 = vrot.slane %v393, 5
        %vm409 = vcmask 1043459
        %v410 = vsel %vm409, %v408, %v407
        %v411 = vrot.slane %v394, 4
        %vm412 = vcmask 1044484
        %v413 = vsel %vm412, %v411, %v410
        %v414 = vrot.slane %v395, 3
        %vm415 = vcmask 1045509
        %v416 = vsel %vm415, %v414, %v413
        %v417 = vrot.slane %v396, 2
        %vm418 = vcmask 1046534
        %v419 = vsel %vm418, %v417, %v416
        %v420 = vrot.slane %v397, 1
        %vm421 = vcmask 1047559
        %v422 = vsel %vm421, %v420, %v419
        %v423 = vrot.slane %v399, 7
        %v424 = vsel %vm403, %v423, %v398
        %v425 = vrot.slane %v400, 6
        %v426 = vsel %vm406, %v425, %v424
        %v427 = vrot.slane %v401, 5
        %v428 = vsel %vm409, %v427, %v426
        %v429 = vpack.c.b16 %v428, %v422
        %430 = vrot.lane.b32.xlu0 %v429, 127
        %v431 = vpop.permute.xlu0 %430
        %vm432 = vcmask 97280
        %v434 = vsel %vm432, %v353, 0
        %vm436 = vcmask 1045504
        %v438 = vsel %vm436, %v431, 0
        %440 = vmatprep.subr.bf16.mxu0 0
        %441 = vmatpush1.bf16.msra.mxu0 %v438
        %442 = vmatprep.subr.bf16.mxu0 0
        %443 = vmatpush1.bf16.msra.mxu0 0
        %444 = vmatprep.subr.bf16.mxu0 0
        %445 = vmatpush1.bf16.msra.mxu0 0
        %446 = vmatprep.subr.bf16.mxu0 0
        %447 = vmatpush1.bf16.msra.mxu0 0
        %448 = vmatprep.subr.bf16.mxu0 0
        %449 = vmatpush1.bf16.msra.mxu0 0
        %450 = vmatprep.subr.bf16.mxu0 0
        %451 = vmatpush1.bf16.msra.mxu0 0
        %452 = vmatprep.subr.bf16.mxu0 0
        %453 = vmatpush1.bf16.msra.mxu0 0
        %454 = vmatprep.subr.bf16.mxu0 0
        %455 = vmatpush1.bf16.msra.mxu0 0
        %456 = vmatprep.subr.bf16.mxu0 0
        %457 = vmatpush1.bf16.msra.mxu0 0
        %458 = vmatprep.subr.bf16.mxu0 0
        %459 = vmatpush1.bf16.msra.mxu0 0
        %460 = vmatprep.subr.bf16.mxu0 0
        %461 = vmatpush1.bf16.msra.mxu0 0
        %462 = vmatprep.subr.bf16.mxu0 0
        %463 = vmatpush1.bf16.msra.mxu0 0
        %464 = vmatprep.subr.bf16.mxu0 0
        %465 = vmatpush1.bf16.msra.mxu0 0
        %466 = vmatprep.subr.bf16.mxu0 0
        %467 = vmatpush1.bf16.msra.mxu0 0
        %468 = vmatprep.subr.bf16.mxu0 0
        %469 = vmatpush1.bf16.msra.mxu0 0
        %470 = vmatprep.subr.bf16.mxu0 0
        %471 = vmatpush1.bf16.msra.mxu0 0
        %472 = vmatprep.mubr.bf16.mxu0 0
        %473 = vmatmul.mubr.bf16.gmra.mrb[0].mxu0 %v434
        %v474 = vpop.f32.mrb[0].mxu0
        %v475 = vadd.f32 0.0, %v474
        %v476 = vpop.f32.mrb[0].mxu0
        %v477 = vpop.f32.mrb[0].mxu0
        %v478 = vadd.f32 0.0, %v477
        %v479 = vpop.f32.mrb[0].mxu0
        %480 = vdwg.mxu0
        %v483 = vunpack.c.l.b16 %v324
        %v484 = vunpack.c.l.b16 %v325
        %v485 = vpack.c.b16 %v484, %v483
        %v487 = vsel %vm432, %v485, 0
        %v490 = vsel %vm436, %v429, 0
        %492 = vmatprep.subr.bf16.mxu0 0
        %493 = vmatpush1.bf16.msra.mxu0 %v490
        %494 = vmatprep.subr.bf16.mxu0 0
        %495 = vmatpush1.bf16.msra.mxu0 0
        %496 = vmatprep.subr.bf16.mxu0 0
        %497 = vmatpush1.bf16.msra.mxu0 0
        %498 = vmatprep.subr.bf16.mxu0 0
        %499 = vmatpush1.bf16.msra.mxu0 0
        %500 = vmatprep.subr.bf16.mxu0 0
        %501 = vmatpush1.bf16.msra.mxu0 0
        %502 = vmatprep.subr.bf16.mxu0 0
        %503 = vmatpush1.bf16.msra.mxu0 0
        %504 = vmatprep.subr.bf16.mxu0 0
        %505 = vmatpush1.bf16.msra.mxu0 0
        %506 = vmatprep.subr.bf16.mxu0 0
        %507 = vmatpush1.bf16.msra.mxu0 0
        %508 = vmatprep.subr.bf16.mxu0 0
        %509 = vmatpush1.bf16.msra.mxu0 0
        %510 = vmatprep.subr.bf16.mxu0 0
        %511 = vmatpush1.bf16.msra.mxu0 0
        %512 = vmatprep.subr.bf16.mxu0 0
        %513 = vmatpush1.bf16.msra.mxu0 0
        %514 = vmatprep.subr.bf16.mxu0 0
        %515 = vmatpush1.bf16.msra.mxu0 0
        %516 = vmatprep.subr.bf16.mxu0 0
        %517 = vmatpush1.bf16.msra.mxu0 0
        %518 = vmatprep.subr.bf16.mxu0 0
        %519 = vmatpush1.bf16.msra.mxu0 0
        %520 = vmatprep.subr.bf16.mxu0 0
        %521 = vmatpush1.bf16.msra.mxu0 0
        %522 = vmatprep.subr.bf16.mxu0 0
        %523 = vmatpush1.bf16.msra.mxu0 0
        %524 = vmatprep.mubr.bf16.mxu0 0
        %525 = vmatmul.mubr.bf16.gmra.mrb[0].mxu0 %v487
        %v526 = vpop.f32.mrb[0].mxu0
        %v527 = vadd.f32 %v475, %v526
        %v528 = vpop.f32.mrb[0].mxu0
        %v529 = vpop.f32.mrb[0].mxu0
        %v530 = vadd.f32 %v478, %v529
        %v531 = vpop.f32.mrb[0].mxu0
        %532 = vdwg.mxu0
        %v535 = vunpack.c.l.b16 %v330
        %v536 = vunpack.c.l.b16 %v331
        %v537 = vpack.c.b16 %v536, %v535
        %538 = vrot.lane.b32.xlu0 %v429, 126
        %v539 = vpop.permute.xlu0 %538
        %v541 = vsel %vm432, %v537, 0
        %v544 = vsel %vm436, %v539, 0
        %546 = vmatprep.subr.bf16.mxu0 0
        %547 = vmatpush1.bf16.msra.mxu0 %v544
        %548 = vmatprep.subr.bf16.mxu0 0
        %549 = vmatpush1.bf16.msra.mxu0 0
        %550 = vmatprep.subr.bf16.mxu0 0
        %551 = vmatpush1.bf16.msra.mxu0 0
        %552 = vmatprep.subr.bf16.mxu0 0
        %553 = vmatpush1.bf16.msra.mxu0 0
        %554 = vmatprep.subr.bf16.mxu0 0
        %555 = vmatpush1.bf16.msra.mxu0 0
        %556 = vmatprep.subr.bf16.mxu0 0
        %557 = vmatpush1.bf16.msra.mxu0 0
        %558 = vmatprep.subr.bf16.mxu0 0
        %559 = vmatpush1.bf16.msra.mxu0 0
        %560 = vmatprep.subr.bf16.mxu0 0
        %561 = vmatpush1.bf16.msra.mxu0 0
        %562 = vmatprep.subr.bf16.mxu0 0
        %563 = vmatpush1.bf16.msra.mxu0 0
        %564 = vmatprep.subr.bf16.mxu0 0
        %565 = vmatpush1.bf16.msra.mxu0 0
        %566 = vmatprep.subr.bf16.mxu0 0
        %567 = vmatpush1.bf16.msra.mxu0 0
        %568 = vmatprep.subr.bf16.mxu0 0
        %569 = vmatpush1.bf16.msra.mxu0 0
        %570 = vmatprep.subr.bf16.mxu0 0
        %571 = vmatpush1.bf16.msra.mxu0 0
        %572 = vmatprep.subr.bf16.mxu0 0
        %573 = vmatpush1.bf16.msra.mxu0 0
        %574 = vmatprep.subr.bf16.mxu0 0
        %575 = vmatpush1.bf16.msra.mxu0 0
        %576 = vmatprep.subr.bf16.mxu0 0
        %577 = vmatpush1.bf16.msra.mxu0 0
        %578 = vmatprep.mubr.bf16.mxu0 0
        %579 = vmatmul.mubr.bf16.gmra.mrb[0].mxu0 %v541
        %v580 = vpop.f32.mrb[0].mxu0
        %v581 = vadd.f32 0.0, %v580
        %v582 = vpop.f32.mrb[0].mxu0
        %v583 = vpop.f32.mrb[0].mxu0
        %v584 = vadd.f32 0.0, %v583
        %v585 = vpop.f32.mrb[0].mxu0
        %586 = vdwg.mxu0
        %v587 = vadd.f32 %v527, %v581
        %v588 = vadd.f32 %v530, %v584
        %590 = vset.pattern.permute.xlu0 0
        %591 = vperm.xlu0 %590, %v320
        %v592 = vpop.permute.xlu0 %591
        %595 = vset.pattern.permute.xlu0 0
        %596 = vperm.xlu0 %595, %v321
        %v597 = vpop.permute.xlu0 %596
        %v599 = vmul.f32 %v587, %v592
        %v600 = vmul.f32 %v588, %v597
        %602 = vset.pattern.permute.xlu0 0
        %603 = vperm.xlu0 %602, %v322
        %v604 = vpop.permute.xlu0 %603
        %607 = vset.pattern.permute.xlu0 0
        %608 = vperm.xlu0 %607, %v323
        %v609 = vpop.permute.xlu0 %608
        %v611 = vadd.f32 %v599, %v604
        %v612 = vadd.f32 %v600, %v609
        %v613 = vmax.f32 %v611, 0.0
        %v614 = vmax.f32 %v612, 0.0
        %v615 = vpack.c.bf16 %v614, %v613
        %v617 = vrot.slane %v615, 4
        %v620 = vunpack.c.l.b16 %v335
        %v621 = vunpack.c.l.b16 %v336
        %v622 = vpack.c.b16 %v621, %v620
        %vm624 = vcmask 130048
        %v626 = vsel %vm624, %v617, 0
        %628 = vmatprep.subr.bf16.mxu0 0
        %629 = vmatpush1.bf16.msra.mxu0 %v622
        %630 = vmatprep.subr.bf16.mxu0 0
        %631 = vmatpush1.bf16.msra.mxu0 0
        %632 = vmatprep.subr.bf16.mxu0 0
        %633 = vmatpush1.bf16.msra.mxu0 0
        %634 = vmatprep.subr.bf16.mxu0 0
        %635 = vmatpush1.bf16.msra.mxu0 0
        %636 = vmatprep.subr.bf16.mxu0 0
        %637 = vmatpush1.bf16.msra.mxu0 0
        %638 = vmatprep.subr.bf16.mxu0 0
        %639 = vmatpush1.bf16.msra.mxu0 0
        %640 = vmatprep.subr.bf16.mxu0 0
        %641 = vmatpush1.bf16.msra.mxu0 0
        %642 = vmatprep.subr.bf16.mxu0 0
        %643 = vmatpush1.bf16.msra.mxu0 0
        %644 = vmatprep.subr.bf16.mxu0 0
        %645 = vmatpush1.bf16.msra.mxu0 0
        %646 = vmatprep.subr.bf16.mxu0 0
        %647 = vmatpush1.bf16.msra.mxu0 0
        %648 = vmatprep.subr.bf16.mxu0 0
        %649 = vmatpush1.bf16.msra.mxu0 0
        %650 = vmatprep.subr.bf16.mxu0 0
        %651 = vmatpush1.bf16.msra.mxu0 0
        %652 = vmatprep.subr.bf16.mxu0 0
        %653 = vmatpush1.bf16.msra.mxu0 0
        %654 = vmatprep.subr.bf16.mxu0 0
        %655 = vmatpush1.bf16.msra.mxu0 0
        %656 = vmatprep.subr.bf16.mxu0 0
        %657 = vmatpush1.bf16.msra.mxu0 0
        %658 = vmatprep.subr.bf16.mxu0 0
        %659 = vmatpush1.bf16.msra.mxu0 0
        %660 = vmatprep.mubr.bf16.mxu0 0
        %661 = vmatmul.mubr.bf16.gmra.mrb[0].mxu0 %v626
        %v662 = vpop.f32.mrb[0].mxu0
        %v663 = vadd.f32 0.0, %v662
        %v664 = vpop.f32.mrb[0].mxu0
        %v665 = vpop.f32.mrb[0].mxu0
        %v666 = vpop.f32.mrb[0].mxu0
        %667 = vdwg.mxu0
        %v670 = vunpack.c.l.b16 %v332
        %v671 = vunpack.c.l.b16 %v333
        %v672 = vpack.c.b16 %v671, %v670
        %v675 = vsel %vm624, %v615, 0
        %677 = vmatprep.subr.bf16.mxu0 0
        %678 = vmatpush1.bf16.msra.mxu0 %v672
        %679 = vmatprep.subr.bf16.mxu0 0
        %680 = vmatpush1.bf16.msra.mxu0 0
        %681 = vmatprep.subr.bf16.mxu0 0
        %682 = vmatpush1.bf16.msra.mxu0 0
        %683 = vmatprep.subr.bf16.mxu0 0
        %684 = vmatpush1.bf16.msra.mxu0 0
        %685 = vmatprep.subr.bf16.mxu0 0
        %686 = vmatpush1.bf16.msra.mxu0 0
        %687 = vmatprep.subr.bf16.mxu0 0
        %688 = vmatpush1.bf16.msra.mxu0 0
        %689 = vmatprep.subr.bf16.mxu0 0
        %690 = vmatpush1.bf16.msra.mxu0 0
        %691 = vmatprep.subr.bf16.mxu0 0
        %692 = vmatpush1.bf16.msra.mxu0 0
        %693 = vmatprep.subr.bf16.mxu0 0
        %694 = vmatpush1.bf16.msra.mxu0 0
        %695 = vmatprep.subr.bf16.mxu0 0
        %696 = vmatpush1.bf16.msra.mxu0 0
        %697 = vmatprep.subr.bf16.mxu0 0
        %698 = vmatpush1.bf16.msra.mxu0 0
        %699 = vmatprep.subr.bf16.mxu0 0
        %700 = vmatpush1.bf16.msra.mxu0 0
        %701 = vmatprep.subr.bf16.mxu0 0
        %702 = vmatpush1.bf16.msra.mxu0 0
        %703 = vmatprep.subr.bf16.mxu0 0
        %704 = vmatpush1.bf16.msra.mxu0 0
        %705 = vmatprep.subr.bf16.mxu0 0
        %706 = vmatpush1.bf16.msra.mxu0 0
        %707 = vmatprep.subr.bf16.mxu0 0
        %708 = vmatpush1.bf16.msra.mxu0 0
        %709 = vmatprep.mubr.bf16.mxu0 0
        %710 = vmatmul.mubr.bf16.gmra.mrb[0].mxu0 %v675
        %v711 = vpop.f32.mrb[0].mxu0
        %v712 = vadd.f32 %v663, %v711
        %v713 = vpop.f32.mrb[0].mxu0
        %v714 = vpop.f32.mrb[0].mxu0
        %v715 = vpop.f32.mrb[0].mxu0
        %716 = vdwg.mxu0
        %v717 = vpack.c.bf16 %v712, %v712
        %v720 = vunpack.c.l.s4 1966171168
        %v721 = vunpack.c.0.s8 %v720
        %v722 = vlaneseq
        %v723 = vshrl.u32 %v722, 7
        %v724 = vsub.s32 %v721, %v723
        %v725 = vrot.slane %v717, %v724
        %v726 = vcombine.high %v725, %v725
        %v728 = vunpack.c.l.s4 1966171168
        %v729 = vunpack.c.0.s8 %v728
        %v730 = vlaneseq
        %v731 = vshrl.u32 %v730, 7
        %v732 = vsub.s32 %v729, %v731
        %v733 = vrot.slane %v725, %v732
        %v735 = vunpack.c.l.s4 1966171168
        %v736 = vunpack.c.0.s8 %v735
        %v737 = vlaneseq
        %v738 = vshrl.u32 %v737, 7
        %v739 = vsub.s32 %v736, %v738
        %v740 = vrot.slane %v726, %v739
        %v741 = vunpack.i.l.s16 %v733
        %v742 = vunpack.i.h.s16 %v733
        %v743 = vunpack.i.l.s16 %v740
        %v744 = vunpack.i.h.s16 %v740
        %v745 = vpack.i.b16 %v741, %v741
        %v746 = vpack.i.b16 %v742, %v742
        %v747 = vpack.i.b16 %v743, %v743
        %v748 = vpack.i.b16 %v744, %v744
        %v750 = vunpack.c.l.s4 286326784
        %v751 = vunpack.c.0.s8 %v750
        %v752 = vlaneseq
        %v753 = vshrl.u32 %v752, 7
        %v754 = vsub.s32 %v751, %v753
        %v755 = vrot.slane %v745, %v754
        %v757 = vunpack.c.l.s4 286326784
        %v758 = vunpack.c.0.s8 %v757
        %v759 = vlaneseq
        %v760 = vshrl.u32 %v759, 7
        %v761 = vsub.s32 %v758, %v760
        %v762 = vrot.slane %v746, %v761
        %v764 = vunpack.c.l.s4 286326784
        %v765 = vunpack.c.0.s8 %v764
        %v766 = vlaneseq
        %v767 = vshrl.u32 %v766, 7
        %v768 = vsub.s32 %v765, %v767
        %v769 = vrot.slane %v747, %v768
        %v771 = vunpack.c.l.s4 286326784
        %v772 = vunpack.c.0.s8 %v771
        %v773 = vlaneseq
        %v774 = vshrl.u32 %v773, 7
        %v775 = vsub.s32 %v772, %v774
        %v776 = vrot.slane %v748, %v775
        %vm781 = vcmask 253952
        %vm782 = vsmask.f32 256
        %vm783 = vmand %vm781, %vm782
        %v784 = vld [vmem:[%s317] sm:$0x1]
        %v785 = vsel %vm783, %v755, %v784
        %786 = vst [vmem:[%s317] sm:$0x1] %v785
        %v787 = vld [vmem:[%s317 + $0x8] sm:$0x1]
        %v788 = vsel %vm783, %v762, %v787
        %789 = vst [vmem:[%s317 + $0x8] sm:$0x1] %v788
        %v790 = vld [vmem:[%s317 + $0x10] sm:$0x1]
        %v791 = vsel %vm783, %v769, %v790
        %792 = vst [vmem:[%s317 + $0x10] sm:$0x1] %v791
        %v793 = vld [vmem:[%s317 + $0x18] sm:$0x1]
        %v794 = vsel %vm783, %v776, %v793
        %795 = vst [vmem:[%s317 + $0x18] sm:$0x1] %v794
        %v796 = vcombine.high %v733, %v733
        %v797 = vcombine.high %v740, %v740
        %v798 = vunpack.i.l.s16 %v796
        %v799 = vunpack.i.h.s16 %v796
        %v800 = vunpack.i.l.s16 %v797
        %v801 = vunpack.i.h.s16 %v797
        %v802 = vpack.i.b16 %v798, %v798
        %v803 = vpack.i.b16 %v799, %v799
        %v804 = vpack.i.b16 %v800, %v800
        %v805 = vpack.i.b16 %v801, %v801
        %v807 = vunpack.c.l.s4 286326784
        %v808 = vunpack.c.0.s8 %v807
        %v809 = vlaneseq
        %v810 = vshrl.u32 %v809, 7
        %v811 = vsub.s32 %v808, %v810
        %v812 = vrot.slane %v802, %v811
        %v814 = vunpack.c.l.s4 286326784
        %v815 = vunpack.c.0.s8 %v814
        %v816 = vlaneseq
        %v817 = vshrl.u32 %v816, 7
        %v818 = vsub.s32 %v815, %v817
        %v819 = vrot.slane %v803, %v818
        %v821 = vunpack.c.l.s4 286326784
        %v822 = vunpack.c.0.s8 %v821
        %v823 = vlaneseq
        %v824 = vshrl.u32 %v823, 7
        %v825 = vsub.s32 %v822, %v824
        %v826 = vrot.slane %v804, %v825
        %v828 = vunpack.c.l.s4 286326784
        %v829 = vunpack.c.0.s8 %v828
        %v830 = vlaneseq
        %v831 = vshrl.u32 %v830, 7
        %v832 = vsub.s32 %v829, %v831
        %v833 = vrot.slane %v805, %v832
        %vm838 = vsmask.f32 7938
        %vm839 = vmand %vm781, %vm838
        %v840 = vld [vmem:[%s317] sm:$0x1]
        %v841 = vsel %vm839, %v812, %v840
        %842 = vst [vmem:[%s317] sm:$0x1] %v841
        %v843 = vld [vmem:[%s317 + $0x8] sm:$0x1]
        %v844 = vsel %vm839, %v819, %v843
        %845 = vst [vmem:[%s317 + $0x8] sm:$0x1] %v844
        %v846 = vld [vmem:[%s317 + $0x10] sm:$0x1]
        %v847 = vsel %vm839, %v826, %v846
        %848 = vst [vmem:[%s317 + $0x10] sm:$0x1] %v847
        %v849 = vld [vmem:[%s317 + $0x18] sm:$0x1]
        %v850 = vsel %vm839, %v833, %v849
        %851 = vst [vmem:[%s317 + $0x18] sm:$0x1] %v850
        %v852 = vld [vmem:[%s275] sm:$0x1]
        %v853 = vld [vmem:[%s275 + $0x4] sm:$0x1]
        %v854 = vld [vmem:[%s275 + $0x8] sm:$0x1]
        %v855 = vld [vmem:[%s275 + $0xc] sm:$0x1]
        %v856 = vld [vmem:[%s275 + $0x10] sm:$0x1]
        %v857 = vld [vmem:[%s275 + $0x14] sm:$0x1]
        %v858 = vld [vmem:[%s275 + $0x18] sm:$0x1]
        %v859 = vld [vmem:[%s275 + $0x1c] sm:$0x1]
        %v860 = vld [vmem:[%s275 + $0x20] sm:$0x1]
        %v861 = vld [vmem:[%s275 + $0x24] sm:$0x1]
        %v862 = vld [vmem:[%s275 + $0x28] sm:$0x1]
        %v863 = vld [vmem:[%s275 + $0x2c] sm:$0x1]
        %v876 = vunpack.c.l.b16 %v852
        %v877 = vunpack.c.l.b16 %v853
        %v878 = vunpack.c.l.b16 %v854
        %v879 = vunpack.c.l.b16 %v855
        %v880 = vunpack.c.l.b16 %v856
        %v881 = vunpack.c.l.b16 %v857
        %v882 = vunpack.c.l.b16 %v858
        %v883 = vunpack.c.l.b16 %v859
        %v884 = vunpack.c.l.b16 %v860
        %v885 = vunpack.c.l.b16 %v861
        %v886 = vunpack.c.l.b16 %v862
        %v887 = vunpack.c.l.b16 %v863
        %v888 = vpack.c.b16 %v876, %v876
        %v889 = vpack.c.b16 %v877, %v877
        %v890 = vpack.c.b16 %v878, %v878
        %v891 = vpack.c.b16 %v879, %v879
        %v892 = vpack.c.b16 %v880, %v880
        %v893 = vpack.c.b16 %v881, %v881
        %v894 = vpack.c.b16 %v882, %v882
        %v895 = vpack.c.b16 %v883, %v883
        %v896 = vpack.c.b16 %v884, %v884
        %v897 = vpack.c.b16 %v885, %v885
        %v898 = vpack.c.b16 %v886, %v886
        %v899 = vpack.c.b16 %v887, %v887
        %v900 = vunpack.c.l.b16 %v888
        %v901 = vunpack.c.l.b16 %v889
        %v902 = vunpack.c.l.b16 %v890
        %v903 = vunpack.c.l.b16 %v891
        %v904 = vunpack.c.l.b16 %v892
        %v905 = vunpack.c.l.b16 %v893
        %v906 = vunpack.c.l.b16 %v894
        %v907 = vunpack.c.l.b16 %v895
        %v908 = vunpack.c.l.b16 %v896
        %v909 = vunpack.c.l.b16 %v897
        %v910 = vunpack.c.l.b16 %v898
        %v911 = vunpack.c.l.b16 %v899
        %v912 = vrot.slane %v900, 1
        %v913 = vsel %vm403, %v901, %v912
        %v914 = vrot.slane %v902, 7
        %v915 = vsel %vm406, %v914, %v913
        %v916 = vrot.slane %v903, 6
        %v917 = vsel %vm409, %v916, %v915
        %v918 = vrot.slane %v904, 5
        %v919 = vsel %vm412, %v918, %v917
        %v920 = vrot.slane %v905, 4
        %v921 = vsel %vm415, %v920, %v919
        %v922 = vrot.slane %v906, 3
        %v923 = vsel %vm418, %v922, %v921
        %v924 = vrot.slane %v907, 2
        %v925 = vsel %vm421, %v924, %v923
        %v926 = vrot.slane %v908, 1
        %v927 = vsel %vm403, %v909, %v926
        %v928 = vrot.slane %v910, 7
        %v929 = vsel %vm406, %v928, %v927
        %v930 = vrot.slane %v911, 6
        %v931 = vsel %vm409, %v930, %v929
        %v932 = vpack.c.b16 %v931, %v925
        %933 = vrot.lane.b32.xlu0 %v932, 127
        %v934 = vpop.permute.xlu0 %933
        %v936 = vsel %vm436, %v934, 0
        %938 = vmatprep.subr.bf16.mxu0 0
        %939 = vmatpush1.bf16.msra.mxu0 %v936
        %940 = vmatprep.subr.bf16.mxu0 0
        %941 = vmatpush1.bf16.msra.mxu0 0
        %942 = vmatprep.subr.bf16.mxu0 0
        %943 = vmatpush1.bf16.msra.mxu0 0
        %944 = vmatprep.subr.bf16.mxu0 0
        %945 = vmatpush1.bf16.msra.mxu0 0
        %946 = vmatprep.subr.bf16.mxu0 0
        %947 = vmatpush1.bf16.msra.mxu0 0
        %948 = vmatprep.subr.bf16.mxu0 0
        %949 = vmatpush1.bf16.msra.mxu0 0
        %950 = vmatprep.subr.bf16.mxu0 0
        %951 = vmatpush1.bf16.msra.mxu0 0
        %952 = vmatprep.subr.bf16.mxu0 0
        %953 = vmatpush1.bf16.msra.mxu0 0
        %954 = vmatprep.subr.bf16.mxu0 0
        %955 = vmatpush1.bf16.msra.mxu0 0
        %956 = vmatprep.subr.bf16.mxu0 0
        %957 = vmatpush1.bf16.msra.mxu0 0
        %958 = vmatprep.subr.bf16.mxu0 0
        %959 = vmatpush1.bf16.msra.mxu0 0
        %960 = vmatprep.subr.bf16.mxu0 0
        %961 = vmatpush1.bf16.msra.mxu0 0
        %962 = vmatprep.subr.bf16.mxu0 0
        %963 = vmatpush1.bf16.msra.mxu0 0
        %964 = vmatprep.subr.bf16.mxu0 0
        %965 = vmatpush1.bf16.msra.mxu0 0
        %966 = vmatprep.subr.bf16.mxu0 0
        %967 = vmatpush1.bf16.msra.mxu0 0
        %968 = vmatprep.subr.bf16.mxu0 0
        %969 = vmatpush1.bf16.msra.mxu0 0
        %970 = vmatprep.mubr.bf16.mxu0 0
        %971 = vmatmul.mubr.bf16.gmra.mrb[0].mxu0 %v434
        %v972 = vpop.f32.mrb[0].mxu0
        %v973 = vadd.f32 0.0, %v972
        %v974 = vpop.f32.mrb[0].mxu0
        %v975 = vpop.f32.mrb[0].mxu0
        %v976 = vadd.f32 0.0, %v975
        %v977 = vpop.f32.mrb[0].mxu0
        %978 = vdwg.mxu0
        %v980 = vsel %vm436, %v932, 0
        %982 = vmatprep.subr.bf16.mxu0 0
        %983 = vmatpush1.bf16.msra.mxu0 %v980
        %984 = vmatprep.subr.bf16.mxu0 0
        %985 = vmatpush1.bf16.msra.mxu0 0
        %986 = vmatprep.subr.bf16.mxu0 0
        %987 = vmatpush1.bf16.msra.mxu0 0
        %988 = vmatprep.subr.bf16.mxu0 0
        %989 = vmatpush1.bf16.msra.mxu0 0
        %990 = vmatprep.subr.bf16.mxu0 0
        %991 = vmatpush1.bf16.msra.mxu0 0
        %992 = vmatprep.subr.bf16.mxu0 0
        %993 = vmatpush1.bf16.msra.mxu0 0
        %994 = vmatprep.subr.bf16.mxu0 0
        %995 = vmatpush1.bf16.msra.mxu0 0
        %996 = vmatprep.subr.bf16.mxu0 0
        %997 = vmatpush1.bf16.msra.mxu0 0
        %998 = vmatprep.subr.bf16.mxu0 0
        %999 = vmatpush1.bf16.msra.mxu0 0
        %1000 = vmatprep.subr.bf16.mxu0 0
        %1001 = vmatpush1.bf16.msra.mxu0 0
        %1002 = vmatprep.subr.bf16.mxu0 0
        %1003 = vmatpush1.bf16.msra.mxu0 0
        %1004 = vmatprep.subr.bf16.mxu0 0
        %1005 = vmatpush1.bf16.msra.mxu0 0
        %1006 = vmatprep.subr.bf16.mxu0 0
        %1007 = vmatpush1.bf16.msra.mxu0 0
        %1008 = vmatprep.subr.bf16.mxu0 0
        %1009 = vmatpush1.bf16.msra.mxu0 0
        %1010 = vmatprep.subr.bf16.mxu0 0
        %1011 = vmatpush1.bf16.msra.mxu0 0
        %1012 = vmatprep.subr.bf16.mxu0 0
        %1013 = vmatpush1.bf16.msra.mxu0 0
        %1014 = vmatprep.mubr.bf16.mxu0 0
        %1015 = vmatmul.mubr.bf16.gmra.mrb[0].mxu0 %v487
        %v1016 = vpop.f32.mrb[0].mxu0
        %v1017 = vadd.f32 %v973, %v1016
        %v1018 = vpop.f32.mrb[0].mxu0
        %v1019 = vpop.f32.mrb[0].mxu0
        %v1020 = vadd.f32 %v976, %v1019
        %v1021 = vpop.f32.mrb[0].mxu0
        %1022 = vdwg.mxu0
        %1023 = vrot.lane.b32.xlu0 %v932, 126
        %v1024 = vpop.permute.xlu0 %1023
        %v1026 = vsel %vm436, %v1024, 0
        %1028 = vmatprep.subr.bf16.mxu0 0
        %1029 = vmatpush1.bf16.msra.mxu0 %v1026
        %1030 = vmatprep.subr.bf16.mxu0 0
        %1031 = vmatpush1.bf16.msra.mxu0 0
        %1032 = vmatprep.subr.bf16.mxu0 0
        %1033 = vmatpush1.bf16.msra.mxu0 0
        %1034 = vmatprep.subr.bf16.mxu0 0
        %1035 = vmatpush1.bf16.msra.mxu0 0
        %1036 = vmatprep.subr.bf16.mxu0 0
        %1037 = vmatpush1.bf16.msra.mxu0 0
        %1038 = vmatprep.subr.bf16.mxu0 0
        %1039 = vmatpush1.bf16.msra.mxu0 0
        %1040 = vmatprep.subr.bf16.mxu0 0
        %1041 = vmatpush1.bf16.msra.mxu0 0
        %1042 = vmatprep.subr.bf16.mxu0 0
        %1043 = vmatpush1.bf16.msra.mxu0 0
        %1044 = vmatprep.subr.bf16.mxu0 0
        %1045 = vmatpush1.bf16.msra.mxu0 0
        %1046 = vmatprep.subr.bf16.mxu0 0
        %1047 = vmatpush1.bf16.msra.mxu0 0
        %1048 = vmatprep.subr.bf16.mxu0 0
        %1049 = vmatpush1.bf16.msra.mxu0 0
        %1050 = vmatprep.subr.bf16.mxu0 0
        %1051 = vmatpush1.bf16.msra.mxu0 0
        %1052 = vmatprep.subr.bf16.mxu0 0
        %1053 = vmatpush1.bf16.msra.mxu0 0
        %1054 = vmatprep.subr.bf16.mxu0 0
        %1055 = vmatpush1.bf16.msra.mxu0 0
        %1056 = vmatprep.subr.bf16.mxu0 0
        %1057 = vmatpush1.bf16.msra.mxu0 0
        %1058 = vmatprep.subr.bf16.mxu0 0
        %1059 = vmatpush1.bf16.msra.mxu0 0
        %1060 = vmatprep.mubr.bf16.mxu0 0
        %1061 = vmatmul.mubr.bf16.gmra.mrb[0].mxu0 %v541
        %v1062 = vpop.f32.mrb[0].mxu0
        %v1063 = vadd.f32 0.0, %v1062
        %v1064 = vpop.f32.mrb[0].mxu0
        %v1065 = vpop.f32.mrb[0].mxu0
        %v1066 = vadd.f32 0.0, %v1065
        %v1067 = vpop.f32.mrb[0].mxu0
        %1068 = vdwg.mxu0
        %v1069 = vadd.f32 %v1017, %v1063
        %v1070 = vadd.f32 %v1020, %v1066
        %v1071 = vmul.f32 %v1069, %v592
        %v1072 = vmul.f32 %v1070, %v597
        %v1073 = vadd.f32 %v1071, %v604
        %v1074 = vadd.f32 %v1072, %v609
        %v1075 = vmax.f32 %v1073, 0.0
        %v1076 = vmax.f32 %v1074, 0.0
        %v1077 = vpack.c.bf16 %v1076, %v1075
        %v1079 = vrot.slane %v1077, 4
        %v1081 = vsel %vm624, %v1079, 0
        %1083 = vmatprep.subr.bf16.mxu0 0
        %1084 = vmatpush1.bf16.msra.mxu0 %v622
        %1085 = vmatprep.subr.bf16.mxu0 0
        %1086 = vmatpush1.bf16.msra.mxu0 0
        %1087 = vmatprep.subr.bf16.mxu0 0
        %1088 = vmatpush1.bf16.msra.mxu0 0
        %1089 = vmatprep.subr.bf16.mxu0 0
        %1090 = vmatpush1.bf16.msra.mxu0 0
        %1091 = vmatprep.subr.bf16.mxu0 0
        %1092 = vmatpush1.bf16.msra.mxu0 0
        %1093 = vmatprep.subr.bf16.mxu0 0
        %1094 = vmatpush1.bf16.msra.mxu0 0
        %1095 = vmatprep.subr.bf16.mxu0 0
        %1096 = vmatpush1.bf16.msra.mxu0 0
        %1097 = vmatprep.subr.bf16.mxu0 0
        %1098 = vmatpush1.bf16.msra.mxu0 0
        %1099 = vmatprep.subr.bf16.mxu0 0
        %1100 = vmatpush1.bf16.msra.mxu0 0
        %1101 = vmatprep.subr.bf16.mxu0 0
        %1102 = vmatpush1.bf16.msra.mxu0 0
        %1103 = vmatprep.subr.bf16.mxu0 0
        %1104 = vmatpush1.bf16.msra.mxu0 0
        %1105 = vmatprep.subr.bf16.mxu0 0
        %1106 = vmatpush1.bf16.msra.mxu0 0
        %1107 = vmatprep.subr.bf16.mxu0 0
        %1108 = vmatpush1.bf16.msra.mxu0 0
        %1109 = vmatprep.subr.bf16.mxu0 0
        %1110 = vmatpush1.bf16.msra.mxu0 0
        %1111 = vmatprep.subr.bf16.mxu0 0
        %1112 = vmatpush1.bf16.msra.mxu0 0
        %1113 = vmatprep.subr.bf16.mxu0 0
        %1114 = vmatpush1.bf16.msra.mxu0 0
        %1115 = vmatprep.mubr.bf16.mxu0 0
        %1116 = vmatmul.mubr.bf16.gmra.mrb[0].mxu0 %v1081
        %v1117 = vpop.f32.mrb[0].mxu0
        %v1118 = vadd.f32 0.0, %v1117
        %v1119 = vpop.f32.mrb[0].mxu0
        %v1120 = vpop.f32.mrb[0].mxu0
        %v1121 = vpop.f32.mrb[0].mxu0
        %1122 = vdwg.mxu0
        %v1124 = vsel %vm624, %v1077, 0
        %1126 = vmatprep.subr.bf16.mxu0 0
        %1127 = vmatpush1.bf16.msra.mxu0 %v672
        %1128 = vmatprep.subr.bf16.mxu0 0
        %1129 = vmatpush1.bf16.msra.mxu0 0
        %1130 = vmatprep.subr.bf16.mxu0 0
        %1131 = vmatpush1.bf16.msra.mxu0 0
        %1132 = vmatprep.subr.bf16.mxu0 0
        %1133 = vmatpush1.bf16.msra.mxu0 0
        %1134 = vmatprep.subr.bf16.mxu0 0
        %1135 = vmatpush1.bf16.msra.mxu0 0
        %1136 = vmatprep.subr.bf16.mxu0 0
        %1137 = vmatpush1.bf16.msra.mxu0 0
        %1138 = vmatprep.subr.bf16.mxu0 0
        %1139 = vmatpush1.bf16.msra.mxu0 0
        %1140 = vmatprep.subr.bf16.mxu0 0
        %1141 = vmatpush1.bf16.msra.mxu0 0
        %1142 = vmatprep.subr.bf16.mxu0 0
        %1143 = vmatpush1.bf16.msra.mxu0 0
        %1144 = vmatprep.subr.bf16.mxu0 0
        %1145 = vmatpush1.bf16.msra.mxu0 0
        %1146 = vmatprep.subr.bf16.mxu0 0
        %1147 = vmatpush1.bf16.msra.mxu0 0
        %1148 = vmatprep.subr.bf16.mxu0 0
        %1149 = vmatpush1.bf16.msra.mxu0 0
        %1150 = vmatprep.subr.bf16.mxu0 0
        %1151 = vmatpush1.bf16.msra.mxu0 0
        %1152 = vmatprep.subr.bf16.mxu0 0
        %1153 = vmatpush1.bf16.msra.mxu0 0
        %1154 = vmatprep.subr.bf16.mxu0 0
        %1155 = vmatpush1.bf16.msra.mxu0 0
        %1156 = vmatprep.subr.bf16.mxu0 0
        %1157 = vmatpush1.bf16.msra.mxu0 0
        %1158 = vmatprep.mubr.bf16.mxu0 0
        %1159 = vmatmul.mubr.bf16.gmra.mrb[0].mxu0 %v1124
        %v1160 = vpop.f32.mrb[0].mxu0
        %v1161 = vadd.f32 %v1118, %v1160
        %v1162 = vpop.f32.mrb[0].mxu0
        %v1163 = vpop.f32.mrb[0].mxu0
        %v1164 = vpop.f32.mrb[0].mxu0
        %1165 = vdwg.mxu0
        %v1166 = vpack.c.bf16 %v1161, %v1161
        %v1169 = vunpack.c.l.s4 1966171168
        %v1170 = vunpack.c.0.s8 %v1169
        %v1171 = vlaneseq
        %v1172 = vshrl.u32 %v1171, 7
        %v1173 = vsub.s32 %v1170, %v1172
        %v1174 = vrot.slane %v1166, %v1173
        %v1175 = vcombine.high %v1174, %v1174
        %v1177 = vunpack.c.l.s4 1966171168
        %v1178 = vunpack.c.0.s8 %v1177
        %v1179 = vlaneseq
        %v1180 = vshrl.u32 %v1179, 7
        %v1181 = vsub.s32 %v1178, %v1180
        %v1182 = vrot.slane %v1174, %v1181
        %v1184 = vunpack.c.l.s4 1966171168
        %v1185 = vunpack.c.0.s8 %v1184
        %v1186 = vlaneseq
        %v1187 = vshrl.u32 %v1186, 7
        %v1188 = vsub.s32 %v1185, %v1187
        %v1189 = vrot.slane %v1175, %v1188
        %v1190 = vunpack.i.l.s16 %v1182
        %v1191 = vunpack.i.h.s16 %v1182
        %v1192 = vunpack.i.l.s16 %v1189
        %v1193 = vunpack.i.h.s16 %v1189
        %v1194 = vpack.i.b16 %v1190, %v1190
        %v1195 = vpack.i.b16 %v1191, %v1191
        %v1196 = vpack.i.b16 %v1192, %v1192
        %v1197 = vpack.i.b16 %v1193, %v1193
        %v1199 = vunpack.c.l.s4 286326784
        %v1200 = vunpack.c.0.s8 %v1199
        %v1201 = vlaneseq
        %v1202 = vshrl.u32 %v1201, 7
        %v1203 = vsub.s32 %v1200, %v1202
        %v1204 = vrot.slane %v1194, %v1203
        %v1206 = vunpack.c.l.s4 286326784
        %v1207 = vunpack.c.0.s8 %v1206
        %v1208 = vlaneseq
        %v1209 = vshrl.u32 %v1208, 7
        %v1210 = vsub.s32 %v1207, %v1209
        %v1211 = vrot.slane %v1195, %v1210
        %v1213 = vunpack.c.l.s4 286326784
        %v1214 = vunpack.c.0.s8 %v1213
        %v1215 = vlaneseq
        %v1216 = vshrl.u32 %v1215, 7
        %v1217 = vsub.s32 %v1214, %v1216
        %v1218 = vrot.slane %v1196, %v1217
        %v1220 = vunpack.c.l.s4 286326784
        %v1221 = vunpack.c.0.s8 %v1220
        %v1222 = vlaneseq
        %v1223 = vshrl.u32 %v1222, 7
        %v1224 = vsub.s32 %v1221, %v1223
        %v1225 = vrot.slane %v1197, %v1224
        %vm1230 = vcmask 254977
        %vm1231 = vsmask.f32 1280
        %vm1232 = vmand %vm1230, %vm1231
        %v1233 = vld [vmem:[%s317] sm:$0x2]
        %v1234 = vsel %vm1232, %v1204, %v1233
        %1235 = vst [vmem:[%s317] sm:$0x2] %v1234
        %v1236 = vld [vmem:[%s317 + $0x8] sm:$0x2]
        %v1237 = vsel %vm1232, %v1211, %v1236
        %1238 = vst [vmem:[%s317 + $0x8] sm:$0x2] %v1237
        %v1239 = vld [vmem:[%s317 + $0x10] sm:$0x2]
        %v1240 = vsel %vm1232, %v1218, %v1239
        %1241 = vst [vmem:[%s317 + $0x10] sm:$0x2] %v1240
        %v1242 = vld [vmem:[%s317 + $0x18] sm:$0x2]
        %v1243 = vsel %vm1232, %v1225, %v1242
        %1244 = vst [vmem:[%s317 + $0x18] sm:$0x2] %v1243
        %v1245 = vcombine.high %v1182, %v1182
        %v1246 = vcombine.high %v1189, %v1189
        %v1247 = vunpack.i.l.s16 %v1245
        %v1248 = vunpack.i.h.s16 %v1245
        %v1249 = vunpack.i.l.s16 %v1246
        %v1250 = vunpack.i.h.s16 %v1246
        %v1251 = vpack.i.b16 %v1247, %v1247
        %v1252 = vpack.i.b16 %v1248, %v1248
        %v1253 = vpack.i.b16 %v1249, %v1249
        %v1254 = vpack.i.b16 %v1250, %v1250
        %v1256 = vunpack.c.l.s4 286326784
        %v1257 = vunpack.c.0.s8 %v1256
        %v1258 = vlaneseq
        %v1259 = vshrl.u32 %v1258, 7
        %v1260 = vsub.s32 %v1257, %v1259
        %v1261 = vrot.slane %v1251, %v1260
        %v1263 = vunpack.c.l.s4 286326784
        %v1264 = vunpack.c.0.s8 %v1263
        %v1265 = vlaneseq
        %v1266 = vshrl.u32 %v1265, 7
        %v1267 = vsub.s32 %v1264, %v1266
        %v1268 = vrot.slane %v1252, %v1267
        %v1270 = vunpack.c.l.s4 286326784
        %v1271 = vunpack.c.0.s8 %v1270
        %v1272 = vlaneseq
        %v1273 = vshrl.u32 %v1272, 7
        %v1274 = vsub.s32 %v1271, %v1273
        %v1275 = vrot.slane %v1253, %v1274
        %v1277 = vunpack.c.l.s4 286326784
        %v1278 = vunpack.c.0.s8 %v1277
        %v1279 = vlaneseq
        %v1280 = vshrl.u32 %v1279, 7
        %v1281 = vsub.s32 %v1278, %v1280
        %v1282 = vrot.slane %v1254, %v1281
        %vm1287 = vsmask.f32 7942
        %vm1288 = vmand %vm1230, %vm1287
        %v1289 = vld [vmem:[%s317] sm:$0x2]
        %v1290 = vsel %vm1288, %v1261, %v1289
        %1291 = vst [vmem:[%s317] sm:$0x2] %v1290
        %v1292 = vld [vmem:[%s317 + $0x8] sm:$0x2]
        %v1293 = vsel %vm1288, %v1268, %v1292
        %1294 = vst [vmem:[%s317 + $0x8] sm:$0x2] %v1293
        %v1295 = vld [vmem:[%s317 + $0x10] sm:$0x2]
        %v1296 = vsel %vm1288, %v1275, %v1295
        %1297 = vst [vmem:[%s317 + $0x10] sm:$0x2] %v1296
        %v1298 = vld [vmem:[%s317 + $0x18] sm:$0x2]
        %v1299 = vsel %vm1288, %v1282, %v1298
        %1300 = vst [vmem:[%s317 + $0x18] sm:$0x2] %v1299
        %v1301 = vld [vmem:[%s275] sm:$0x2]
        %v1302 = vld [vmem:[%s275 + $0x4] sm:$0x2]
        %v1303 = vld [vmem:[%s275 + $0x8] sm:$0x2]
        %v1304 = vld [vmem:[%s275 + $0xc] sm:$0x2]
        %v1305 = vld [vmem:[%s275 + $0x10] sm:$0x2]
        %v1306 = vld [vmem:[%s275 + $0x14] sm:$0x2]
        %v1307 = vld [vmem:[%s275 + $0x18] sm:$0x2]
        %v1308 = vld [vmem:[%s275 + $0x1c] sm:$0x2]
        %v1309 = vld [vmem:[%s275 + $0x20] sm:$0x2]
        %v1310 = vld [vmem:[%s275 + $0x24] sm:$0x2]
        %v1311 = vld [vmem:[%s275 + $0x28] sm:$0x2]
        %v1312 = vld [vmem:[%s275 + $0x2c] sm:$0x2]
        %v1325 = vunpack.c.l.b16 %v1301
        %v1326 = vunpack.c.l.b16 %v1302
        %v1327 = vunpack.c.l.b16 %v1303
        %v1328 = vunpack.c.l.b16 %v1304
        %v1329 = vunpack.c.l.b16 %v1305
        %v1330 = vunpack.c.l.b16 %v1306
        %v1331 = vunpack.c.l.b16 %v1307
        %v1332 = vunpack.c.l.b16 %v1308
        %v1333 = vunpack.c.l.b16 %v1309
        %v1334 = vunpack.c.l.b16 %v1310
        %v1335 = vunpack.c.l.b16 %v1311
        %v1336 = vunpack.c.l.b16 %v1312
        %v1337 = vpack.c.b16 %v1325, %v1325
        %v1338 = vpack.c.b16 %v1326, %v1326
        %v1339 = vpack.c.b16 %v1327, %v1327
        %v1340 = vpack.c.b16 %v1328, %v1328
        %v1341 = vpack.c.b16 %v1329, %v1329
        %v1342 = vpack.c.b16 %v1330, %v1330
        %v1343 = vpack.c.b16 %v1331, %v1331
        %v1344 = vpack.c.b16 %v1332, %v1332
        %v1345 = vpack.c.b16 %v1333, %v1333
        %v1346 = vpack.c.b16 %v1334, %v1334
        %v1347 = vpack.c.b16 %v1335, %v1335
        %v1348 = vpack.c.b16 %v1336, %v1336
        %v1349 = vunpack.c.l.b16 %v1337
        %v1350 = vunpack.c.l.b16 %v1338
        %v1351 = vunpack.c.l.b16 %v1339
        %v1352 = vunpack.c.l.b16 %v1340
        %v1353 = vunpack.c.l.b16 %v1341
        %v1354 = vunpack.c.l.b16 %v1342
        %v1355 = vunpack.c.l.b16 %v1343
        %v1356 = vunpack.c.l.b16 %v1344
        %v1357 = vunpack.c.l.b16 %v1345
        %v1358 = vunpack.c.l.b16 %v1346
        %v1359 = vunpack.c.l.b16 %v1347
        %v1360 = vunpack.c.l.b16 %v1348
        %v1361 = vrot.slane %v1349, 2
        %v1362 = vrot.slane %v1350, 1
        %v1363 = vsel %vm403, %v1362, %v1361
        %v1364 = vsel %vm406, %v1351, %v1363
        %v1365 = vrot.slane %v1352, 7
        %v1366 = vsel %vm409, %v1365, %v1364
        %v1367 = vrot.slane %v1353, 6
        %v1368 = vsel %vm412, %v1367, %v1366
        %v1369 = vrot.slane %v1354, 5
        %v1370 = vsel %vm415, %v1369, %v1368
        %v1371 = vrot.slane %v1355, 4
        %v1372 = vsel %vm418, %v1371, %v1370
        %v1373 = vrot.slane %v1356, 3
        %v1374 = vsel %vm421, %v1373, %v1372
        %v1375 = vrot.slane %v1357, 2
        %v1376 = vrot.slane %v1358, 1
        %v1377 = vsel %vm403, %v1376, %v1375
        %v1378 = vsel %vm406, %v1359, %v1377
        %v1379 = vrot.slane %v1360, 7
        %v1380 = vsel %vm409, %v1379, %v1378
        %v1381 = vpack.c.b16 %v1380, %v1374
        %1382 = vrot.lane.b32.xlu0 %v1381, 127
        %v1383 = vpop.permute.xlu0 %1382
        %v1385 = vsel %vm436, %v1383, 0
        %1387 = vmatprep.subr.bf16.mxu0 0
        %1388 = vmatpush1.bf16.msra.mxu0 %v1385
        %1389 = vmatprep.subr.bf16.mxu0 0
        %1390 = vmatpush1.bf16.msra.mxu0 0
        %1391 = vmatprep.subr.bf16.mxu0 0
        %1392 = vmatpush1.bf16.msra.mxu0 0
        %1393 = vmatprep.subr.bf16.mxu0 0
        %1394 = vmatpush1.bf16.msra.mxu0 0
        %1395 = vmatprep.subr.bf16.mxu0 0
        %1396 = vmatpush1.bf16.msra.mxu0 0
        %1397 = vmatprep.subr.bf16.mxu0 0
        %1398 = vmatpush1.bf16.msra.mxu0 0
        %1399 = vmatprep.subr.bf16.mxu0 0
        %1400 = vmatpush1.bf16.msra.mxu0 0
        %1401 = vmatprep.subr.bf16.mxu0 0
        %1402 = vmatpush1.bf16.msra.mxu0 0
        %1403 = vmatprep.subr.bf16.mxu0 0
        %1404 = vmatpush1.bf16.msra.mxu0 0
        %1405 = vmatprep.subr.bf16.mxu0 0
        %1406 = vmatpush1.bf16.msra.mxu0 0
        %1407 = vmatprep.subr.bf16.mxu0 0
        %1408 = vmatpush1.bf16.msra.mxu0 0
        %1409 = vmatprep.subr.bf16.mxu0 0
        %1410 = vmatpush1.bf16.msra.mxu0 0
        %1411 = vmatprep.subr.bf16.mxu0 0
        %1412 = vmatpush1.bf16.msra.mxu0 0
        %1413 = vmatprep.subr.bf16.mxu0 0
        %1414 = vmatpush1.bf16.msra.mxu0 0
        %1415 = vmatprep.subr.bf16.mxu0 0
        %1416 = vmatpush1.bf16.msra.mxu0 0
        %1417 = vmatprep.subr.bf16.mxu0 0
        %1418 = vmatpush1.bf16.msra.mxu0 0
        %1419 = vmatprep.mubr.bf16.mxu0 0
        %1420 = vmatmul.mubr.bf16.gmra.mrb[0].mxu0 %v434
        %v1421 = vpop.f32.mrb[0].mxu0
        %v1422 = vadd.f32 0.0, %v1421
        %v1423 = vpop.f32.mrb[0].mxu0
        %v1424 = vpop.f32.mrb[0].mxu0
        %v1425 = vadd.f32 0.0, %v1424
        %v1426 = vpop.f32.mrb[0].mxu0
        %1427 = vdwg.mxu0
        %v1429 = vsel %vm436, %v1381, 0
        %1431 = vmatprep.subr.bf16.mxu0 0
        %1432 = vmatpush1.bf16.msra.mxu0 %v1429
        %1433 = vmatprep.subr.bf16.mxu0 0
        %1434 = vmatpush1.bf16.msra.mxu0 0
        %1435 = vmatprep.subr.bf16.mxu0 0
        %1436 = vmatpush1.bf16.msra.mxu0 0
        %1437 = vmatprep.subr.bf16.mxu0 0
        %1438 = vmatpush1.bf16.msra.mxu0 0
        %1439 = vmatprep.subr.bf16.mxu0 0
        %1440 = vmatpush1.bf16.msra.mxu0 0
        %1441 = vmatprep.subr.bf16.mxu0 0
        %1442 = vmatpush1.bf16.msra.mxu0 0
        %1443 = vmatprep.subr.bf16.mxu0 0
        %1444 = vmatpush1.bf16.msra.mxu0 0
        %1445 = vmatprep.subr.bf16.mxu0 0
        %1446 = vmatpush1.bf16.msra.mxu0 0
        %1447 = vmatprep.subr.bf16.mxu0 0
        %1448 = vmatpush1.bf16.msra.mxu0 0
        %1449 = vmatprep.subr.bf16.mxu0 0
        %1450 = vmatpush1.bf16.msra.mxu0 0
        %1451 = vmatprep.subr.bf16.mxu0 0
        %1452 = vmatpush1.bf16.msra.mxu0 0
        %1453 = vmatprep.subr.bf16.mxu0 0
        %1454 = vmatpush1.bf16.msra.mxu0 0
        %1455 = vmatprep.subr.bf16.mxu0 0
        %1456 = vmatpush1.bf16.msra.mxu0 0
        %1457 = vmatprep.subr.bf16.mxu0 0
        %1458 = vmatpush1.bf16.msra.mxu0 0
        %1459 = vmatprep.subr.bf16.mxu0 0
        %1460 = vmatpush1.bf16.msra.mxu0 0
        %1461 = vmatprep.subr.bf16.mxu0 0
        %1462 = vmatpush1.bf16.msra.mxu0 0
        %1463 = vmatprep.mubr.bf16.mxu0 0
        %1464 = vmatmul.mubr.bf16.gmra.mrb[0].mxu0 %v487
        %v1465 = vpop.f32.mrb[0].mxu0
        %v1466 = vadd.f32 %v1422, %v1465
        %v1467 = vpop.f32.mrb[0].mxu0
        %v1468 = vpop.f32.mrb[0].mxu0
        %v1469 = vadd.f32 %v1425, %v1468
        %v1470 = vpop.f32.mrb[0].mxu0
        %1471 = vdwg.mxu0
        %1472 = vrot.lane.b32.xlu0 %v1381, 126
        %v1473 = vpop.permute.xlu0 %1472
        %v1475 = vsel %vm436, %v1473, 0
        %1477 = vmatprep.subr.bf16.mxu0 0
        %1478 = vmatpush1.bf16.msra.mxu0 %v1475
        %1479 = vmatprep.subr.bf16.mxu0 0
        %1480 = vmatpush1.bf16.msra.mxu0 0
        %1481 = vmatprep.subr.bf16.mxu0 0
        %1482 = vmatpush1.bf16.msra.mxu0 0
        %1483 = vmatprep.subr.bf16.mxu0 0
        %1484 = vmatpush1.bf16.msra.mxu0 0
        %1485 = vmatprep.subr.bf16.mxu0 0
        %1486 = vmatpush1.bf16.msra.mxu0 0
        %1487 = vmatprep.subr.bf16.mxu0 0
        %1488 = vmatpush1.bf16.msra.mxu0 0
        %1489 = vmatprep.subr.bf16.mxu0 0
        %1490 = vmatpush1.bf16.msra.mxu0 0
        %1491 = vmatprep.subr.bf16.mxu0 0
        %1492 = vmatpush1.bf16.msra.mxu0 0
        %1493 = vmatprep.subr.bf16.mxu0 0
        %1494 = vmatpush1.bf16.msra.mxu0 0
        %1495 = vmatprep.subr.bf16.mxu0 0
        %1496 = vmatpush1.bf16.msra.mxu0 0
        %1497 = vmatprep.subr.bf16.mxu0 0
        %1498 = vmatpush1.bf16.msra.mxu0 0
        %1499 = vmatprep.subr.bf16.mxu0 0
        %1500 = vmatpush1.bf16.msra.mxu0 0
        %1501 = vmatprep.subr.bf16.mxu0 0
        %1502 = vmatpush1.bf16.msra.mxu0 0
        %1503 = vmatprep.subr.bf16.mxu0 0
        %1504 = vmatpush1.bf16.msra.mxu0 0
        %1505 = vmatprep.subr.bf16.mxu0 0
        %1506 = vmatpush1.bf16.msra.mxu0 0
        %1507 = vmatprep.subr.bf16.mxu0 0
        %1508 = vmatpush1.bf16.msra.mxu0 0
        %1509 = vmatprep.mubr.bf16.mxu0 0
        %1510 = vmatmul.mubr.bf16.gmra.mrb[0].mxu0 %v541
        %v1511 = vpop.f32.mrb[0].mxu0
        %v1512 = vadd.f32 0.0, %v1511
        %v1513 = vpop.f32.mrb[0].mxu0
        %v1514 = vpop.f32.mrb[0].mxu0
        %v1515 = vadd.f32 0.0, %v1514
        %v1516 = vpop.f32.mrb[0].mxu0
        %1517 = vdwg.mxu0
        %v1518 = vadd.f32 %v1466, %v1512
        %v1519 = vadd.f32 %v1469, %v1515
        %v1520 = vmul.f32 %v1518, %v592
        %v1521 = vmul.f32 %v1519, %v597
        %v1522 = vadd.f32 %v1520, %v604
        %v1523 = vadd.f32 %v1521, %v609
        %v1524 = vmax.f32 %v1522, 0.0
        %v1525 = vmax.f32 %v1523, 0.0
        %v1526 = vpack.c.bf16 %v1525, %v1524
        %v1528 = vrot.slane %v1526, 4
        %v1530 = vsel %vm624, %v1528, 0
        %1532 = vmatprep.subr.bf16.mxu0 0
        %1533 = vmatpush1.bf16.msra.mxu0 %v622
        %1534 = vmatprep.subr.bf16.mxu0 0
        %1535 = vmatpush1.bf16.msra.mxu0 0
        %1536 = vmatprep.subr.bf16.mxu0 0
        %1537 = vmatpush1.bf16.msra.mxu0 0
        %1538 = vmatprep.subr.bf16.mxu0 0
        %1539 = vmatpush1.bf16.msra.mxu0 0
        %1540 = vmatprep.subr.bf16.mxu0 0
        %1541 = vmatpush1.bf16.msra.mxu0 0
        %1542 = vmatprep.subr.bf16.mxu0 0
        %1543 = vmatpush1.bf16.msra.mxu0 0
        %1544 = vmatprep.subr.bf16.mxu0 0
        %1545 = vmatpush1.bf16.msra.mxu0 0
        %1546 = vmatprep.subr.bf16.mxu0 0
        %1547 = vmatpush1.bf16.msra.mxu0 0
        %1548 = vmatprep.subr.bf16.mxu0 0
        %1549 = vmatpush1.bf16.msra.mxu0 0
        %1550 = vmatprep.subr.bf16.mxu0 0
        %1551 = vmatpush1.bf16.msra.mxu0 0
        %1552 = vmatprep.subr.bf16.mxu0 0
        %1553 = vmatpush1.bf16.msra.mxu0 0
        %1554 = vmatprep.subr.bf16.mxu0 0
        %1555 = vmatpush1.bf16.msra.mxu0 0
        %1556 = vmatprep.subr.bf16.mxu0 0
        %1557 = vmatpush1.bf16.msra.mxu0 0
        %1558 = vmatprep.subr.bf16.mxu0 0
        %1559 = vmatpush1.bf16.msra.mxu0 0
        %1560 = vmatprep.subr.bf16.mxu0 0
        %1561 = vmatpush1.bf16.msra.mxu0 0
        %1562 = vmatprep.subr.bf16.mxu0 0
        %1563 = vmatpush1.bf16.msra.mxu0 0
        %1564 = vmatprep.mubr.bf16.mxu0 0
        %1565 = vmatmul.mubr.bf16.gmra.mrb[0].mxu0 %v1530
        %v1566 = vpop.f32.mrb[0].mxu0
        %v1567 = vadd.f32 0.0, %v1566
        %v1568 = vpop.f32.mrb[0].mxu0
        %v1569 = vpop.f32.mrb[0].mxu0
        %v1570 = vpop.f32.mrb[0].mxu0
        %1571 = vdwg.mxu0
        %v1573 = vsel %vm624, %v1526, 0
        %1575 = vmatprep.subr.bf16.mxu0 0
        %1576 = vmatpush1.bf16.msra.mxu0 %v672
        %1577 = vmatprep.subr.bf16.mxu0 0
        %1578 = vmatpush1.bf16.msra.mxu0 0
        %1579 = vmatprep.subr.bf16.mxu0 0
        %1580 = vmatpush1.bf16.msra.mxu0 0
        %1581 = vmatprep.subr.bf16.mxu0 0
        %1582 = vmatpush1.bf16.msra.mxu0 0
        %1583 = vmatprep.subr.bf16.mxu0 0
        %1584 = vmatpush1.bf16.msra.mxu0 0
        %1585 = vmatprep.subr.bf16.mxu0 0
        %1586 = vmatpush1.bf16.msra.mxu0 0
        %1587 = vmatprep.subr.bf16.mxu0 0
        %1588 = vmatpush1.bf16.msra.mxu0 0
        %1589 = vmatprep.subr.bf16.mxu0 0
        %1590 = vmatpush1.bf16.msra.mxu0 0
        %1591 = vmatprep.subr.bf16.mxu0 0
        %1592 = vmatpush1.bf16.msra.mxu0 0
        %1593 = vmatprep.subr.bf16.mxu0 0
        %1594 = vmatpush1.bf16.msra.mxu0 0
        %1595 = vmatprep.subr.bf16.mxu0 0
        %1596 = vmatpush1.bf16.msra.mxu0 0
        %1597 = vmatprep.subr.bf16.mxu0 0
        %1598 = vmatpush1.bf16.msra.mxu0 0
        %1599 = vmatprep.subr.bf16.mxu0 0
        %1600 = vmatpush1.bf16.msra.mxu0 0
        %1601 = vmatprep.subr.bf16.mxu0 0
        %1602 = vmatpush1.bf16.msra.mxu0 0
        %1603 = vmatprep.subr.bf16.mxu0 0
        %1604 = vmatpush1.bf16.msra.mxu0 0
        %1605 = vmatprep.subr.bf16.mxu0 0
        %1606 = vmatpush1.bf16.msra.mxu0 0
        %1607 = vmatprep.mubr.bf16.mxu0 0
        %1608 = vmatmul.mubr.bf16.gmra.mrb[0].mxu0 %v1573
        %v1609 = vpop.f32.mrb[0].mxu0
        %v1610 = vadd.f32 %v1567, %v1609
        %v1611 = vpop.f32.mrb[0].mxu0
        %v1612 = vpop.f32.mrb[0].mxu0
        %v1613 = vpop.f32.mrb[0].mxu0
        %1614 = vdwg.mxu0
        %v1615 = vpack.c.bf16 %v1610, %v1610
        %v1618 = vunpack.c.l.s4 1966171168
        %v1619 = vunpack.c.0.s8 %v1618
        %v1620 = vlaneseq
        %v1621 = vshrl.u32 %v1620, 7
        %v1622 = vsub.s32 %v1619, %v1621
        %v1623 = vrot.slane %v1615, %v1622
        %v1624 = vcombine.high %v1623, %v1623
        %v1626 = vunpack.c.l.s4 1966171168
        %v1627 = vunpack.c.0.s8 %v1626
        %v1628 = vlaneseq
        %v1629 = vshrl.u32 %v1628, 7
        %v1630 = vsub.s32 %v1627, %v1629
        %v1631 = vrot.slane %v1623, %v1630
        %v1633 = vunpack.c.l.s4 1966171168
        %v1634 = vunpack.c.0.s8 %v1633
        %v1635 = vlaneseq
        %v1636 = vshrl.u32 %v1635, 7
        %v1637 = vsub.s32 %v1634, %v1636
        %v1638 = vrot.slane %v1624, %v1637
        %v1639 = vunpack.i.l.s16 %v1631
        %v1640 = vunpack.i.h.s16 %v1631
        %v1641 = vunpack.i.l.s16 %v1638
        %v1642 = vunpack.i.h.s16 %v1638
        %v1643 = vpack.i.b16 %v1639, %v1639
        %v1644 = vpack.i.b16 %v1640, %v1640
        %v1645 = vpack.i.b16 %v1641, %v1641
        %v1646 = vpack.i.b16 %v1642, %v1642
        %v1648 = vunpack.c.l.s4 286326784
        %v1649 = vunpack.c.0.s8 %v1648
        %v1650 = vlaneseq
        %v1651 = vshrl.u32 %v1650, 7
        %v1652 = vsub.s32 %v1649, %v1651
        %v1653 = vrot.slane %v1643, %v1652
        %v1655 = vunpack.c.l.s4 286326784
        %v1656 = vunpack.c.0.s8 %v1655
        %v1657 = vlaneseq
        %v1658 = vshrl.u32 %v1657, 7
        %v1659 = vsub.s32 %v1656, %v1658
        %v1660 = vrot.slane %v1644, %v1659
        %v1662 = vunpack.c.l.s4 286326784
        %v1663 = vunpack.c.0.s8 %v1662
        %v1664 = vlaneseq
        %v1665 = vshrl.u32 %v1664, 7
        %v1666 = vsub.s32 %v1663, %v1665
        %v1667 = vrot.slane %v1645, %v1666
        %v1669 = vunpack.c.l.s4 286326784
        %v1670 = vunpack.c.0.s8 %v1669
        %v1671 = vlaneseq
        %v1672 = vshrl.u32 %v1671, 7
        %v1673 = vsub.s32 %v1670, %v1672
        %v1674 = vrot.slane %v1646, %v1673
        %vm1679 = vcmask 256002
        %vm1680 = vsmask.f32 2304
        %vm1681 = vmand %vm1679, %vm1680
        %v1682 = vld [vmem:[%s317] sm:$0x4]
        %v1683 = vsel %vm1681, %v1653, %v1682
        %1684 = vst [vmem:[%s317] sm:$0x4] %v1683
        %v1685 = vld [vmem:[%s317 + $0x8] sm:$0x4]
        %v1686 = vsel %vm1681, %v1660, %v1685
        %1687 = vst [vmem:[%s317 + $0x8] sm:$0x4] %v1686
        %v1688 = vld [vmem:[%s317 + $0x10] sm:$0x4]
        %v1689 = vsel %vm1681, %v1667, %v1688
        %1690 = vst [vmem:[%s317 + $0x10] sm:$0x4] %v1689
        %v1691 = vld [vmem:[%s317 + $0x18] sm:$0x4]
        %v1692 = vsel %vm1681, %v1674, %v1691
        %1693 = vst [vmem:[%s317 + $0x18] sm:$0x4] %v1692
        %v1694 = vcombine.high %v1631, %v1631
        %v1695 = vcombine.high %v1638, %v1638
        %v1696 = vunpack.i.l.s16 %v1694
        %v1697 = vunpack.i.h.s16 %v1694
        %v1698 = vunpack.i.l.s16 %v1695
        %v1699 = vunpack.i.h.s16 %v1695
        %v1700 = vpack.i.b16 %v1696, %v1696
        %v1701 = vpack.i.b16 %v1697, %v1697
        %v1702 = vpack.i.b16 %v1698, %v1698
        %v1703 = vpack.i.b16 %v1699, %v1699
        %v1705 = vunpack.c.l.s4 286326784
        %v1706 = vunpack.c.0.s8 %v1705
        %v1707 = vlaneseq
        %v1708 = vshrl.u32 %v1707, 7
        %v1709 = vsub.s32 %v1706, %v1708
        %v1710 = vrot.slane %v1700, %v1709
        %v1712 = vunpack.c.l.s4 286326784
        %v1713 = vunpack.c.0.s8 %v1712
        %v1714 = vlaneseq
        %v1715 = vshrl.u32 %v1714, 7
        %v1716 = vsub.s32 %v1713, %v1715
        %v1717 = vrot.slane %v1701, %v1716
        %v1719 = vunpack.c.l.s4 286326784
        %v1720 = vunpack.c.0.s8 %v1719
        %v1721 = vlaneseq
        %v1722 = vshrl.u32 %v1721, 7
        %v1723 = vsub.s32 %v1720, %v1722
        %v1724 = vrot.slane %v1702, %v1723
        %v1726 = vunpack.c.l.s4 286326784
        %v1727 = vunpack.c.0.s8 %v1726
        %v1728 = vlaneseq
        %v1729 = vshrl.u32 %v1728, 7
        %v1730 = vsub.s32 %v1727, %v1729
        %v1731 = vrot.slane %v1703, %v1730
        %vm1736 = vsmask.f32 7946
        %vm1737 = vmand %vm1679, %vm1736
        %v1738 = vld [vmem:[%s317] sm:$0x4]
        %v1739 = vsel %vm1737, %v1710, %v1738
        %1740 = vst [vmem:[%s317] sm:$0x4] %v1739
        %v1741 = vld [vmem:[%s317 + $0x8] sm:$0x4]
        %v1742 = vsel %vm1737, %v1717, %v1741
        %1743 = vst [vmem:[%s317 + $0x8] sm:$0x4] %v1742
        %v1744 = vld [vmem:[%s317 + $0x10] sm:$0x4]
        %v1745 = vsel %vm1737, %v1724, %v1744
        %1746 = vst [vmem:[%s317 + $0x10] sm:$0x4] %v1745
        %v1747 = vld [vmem:[%s317 + $0x18] sm:$0x4]
        %v1748 = vsel %vm1737, %v1731, %v1747
        %1749 = vst [vmem:[%s317 + $0x18] sm:$0x4] %v1748
        %v1750 = vld [vmem:[%s275] sm:$0x2]
        %v1751 = vld [vmem:[%s275 + $0x4] sm:$0x2]
        %v1752 = vld [vmem:[%s275 + $0x8] sm:$0x2]
        %v1753 = vld [vmem:[%s275 + $0xc] sm:$0x2]
        %v1754 = vld [vmem:[%s275 + $0x10] sm:$0x2]
        %v1755 = vld [vmem:[%s275 + $0x14] sm:$0x2]
        %v1756 = vld [vmem:[%s275 + $0x18] sm:$0x2]
        %v1757 = vld [vmem:[%s275 + $0x1c] sm:$0x2]
        %v1758 = vld [vmem:[%s275 + $0x20] sm:$0x2]
        %v1759 = vld [vmem:[%s275 + $0x24] sm:$0x2]
        %v1760 = vld [vmem:[%s275 + $0x28] sm:$0x2]
        %v1761 = vld [vmem:[%s275 + $0x2c] sm:$0x2]
        %v1774 = vunpack.c.l.b16 %v1750
        %v1775 = vunpack.c.l.b16 %v1751
        %v1776 = vunpack.c.l.b16 %v1752
        %v1777 = vunpack.c.l.b16 %v1753
        %v1778 = vunpack.c.l.b16 %v1754
        %v1779 = vunpack.c.l.b16 %v1755
        %v1780 = vunpack.c.l.b16 %v1756
        %v1781 = vunpack.c.l.b16 %v1757
        %v1782 = vunpack.c.l.b16 %v1758
        %v1783 = vunpack.c.l.b16 %v1759
        %v1784 = vunpack.c.l.b16 %v1760
        %v1785 = vunpack.c.l.b16 %v1761
        %v1786 = vpack.c.b16 %v1774, %v1774
        %v1787 = vpack.c.b16 %v1775, %v1775
        %v1788 = vpack.c.b16 %v1776, %v1776
        %v1789 = vpack.c.b16 %v1777, %v1777
        %v1790 = vpack.c.b16 %v1778, %v1778
        %v1791 = vpack.c.b16 %v1779, %v1779
        %v1792 = vpack.c.b16 %v1780, %v1780
        %v1793 = vpack.c.b16 %v1781, %v1781
        %v1794 = vpack.c.b16 %v1782, %v1782
        %v1795 = vpack.c.b16 %v1783, %v1783
        %v1796 = vpack.c.b16 %v1784, %v1784
        %v1797 = vpack.c.b16 %v1785, %v1785
        %v1798 = vunpack.c.l.b16 %v1786
        %v1799 = vunpack.c.l.b16 %v1787
        %v1800 = vunpack.c.l.b16 %v1788
        %v1801 = vunpack.c.l.b16 %v1789
        %v1802 = vunpack.c.l.b16 %v1790
        %v1803 = vunpack.c.l.b16 %v1791
        %v1804 = vunpack.c.l.b16 %v1792
        %v1805 = vunpack.c.l.b16 %v1793
        %v1806 = vunpack.c.l.b16 %v1794
        %v1807 = vunpack.c.l.b16 %v1795
        %v1808 = vunpack.c.l.b16 %v1796
        %v1809 = vunpack.c.l.b16 %v1797
        %v1810 = vrot.slane %v1798, 3
        %v1811 = vrot.slane %v1799, 2
        %v1812 = vsel %vm403, %v1811, %v1810
        %v1813 = vrot.slane %v1800, 1
        %v1814 = vsel %vm406, %v1813, %v1812
        %v1815 = vsel %vm409, %v1801, %v1814
        %v1816 = vrot.slane %v1802, 7
        %v1817 = vsel %vm412, %v1816, %v1815
        %v1818 = vrot.slane %v1803, 6
        %v1819 = vsel %vm415, %v1818, %v1817
        %v1820 = vrot.slane %v1804, 5
        %v1821 = vsel %vm418, %v1820, %v1819
        %v1822 = vrot.slane %v1805, 4
        %v1823 = vsel %vm421, %v1822, %v1821
        %v1824 = vrot.slane %v1806, 3
        %v1825 = vrot.slane %v1807, 2
        %v1826 = vsel %vm403, %v1825, %v1824
        %v1827 = vrot.slane %v1808, 1
        %v1828 = vsel %vm406, %v1827, %v1826
        %v1829 = vsel %vm409, %v1809, %v1828
        %v1830 = vpack.c.b16 %v1829, %v1823
        %1831 = vrot.lane.b32.xlu0 %v1830, 127
        %v1832 = vpop.permute.xlu0 %1831
        %v1834 = vsel %vm436, %v1832, 0
        %1836 = vmatprep.subr.bf16.mxu0 0
        %1837 = vmatpush1.bf16.msra.mxu0 %v1834
        %1838 = vmatprep.subr.bf16.mxu0 0
        %1839 = vmatpush1.bf16.msra.mxu0 0
        %1840 = vmatprep.subr.bf16.mxu0 0
        %1841 = vmatpush1.bf16.msra.mxu0 0
        %1842 = vmatprep.subr.bf16.mxu0 0
        %1843 = vmatpush1.bf16.msra.mxu0 0
        %1844 = vmatprep.subr.bf16.mxu0 0
        %1845 = vmatpush1.bf16.msra.mxu0 0
        %1846 = vmatprep.subr.bf16.mxu0 0
        %1847 = vmatpush1.bf16.msra.mxu0 0
        %1848 = vmatprep.subr.bf16.mxu0 0
        %1849 = vmatpush1.bf16.msra.mxu0 0
        %1850 = vmatprep.subr.bf16.mxu0 0
        %1851 = vmatpush1.bf16.msra.mxu0 0
        %1852 = vmatprep.subr.bf16.mxu0 0
        %1853 = vmatpush1.bf16.msra.mxu0 0
        %1854 = vmatprep.subr.bf16.mxu0 0
        %1855 = vmatpush1.bf16.msra.mxu0 0
        %1856 = vmatprep.subr.bf16.mxu0 0
        %1857 = vmatpush1.bf16.msra.mxu0 0
        %1858 = vmatprep.subr.bf16.mxu0 0
        %1859 = vmatpush1.bf16.msra.mxu0 0
        %1860 = vmatprep.subr.bf16.mxu0 0
        %1861 = vmatpush1.bf16.msra.mxu0 0
        %1862 = vmatprep.subr.bf16.mxu0 0
        %1863 = vmatpush1.bf16.msra.mxu0 0
        %1864 = vmatprep.subr.bf16.mxu0 0
        %1865 = vmatpush1.bf16.msra.mxu0 0
        %1866 = vmatprep.subr.bf16.mxu0 0
        %1867 = vmatpush1.bf16.msra.mxu0 0
        %1868 = vmatprep.mubr.bf16.mxu0 0
        %1869 = vmatmul.mubr.bf16.gmra.mrb[0].mxu0 %v434
        %v1870 = vpop.f32.mrb[0].mxu0
        %v1871 = vadd.f32 0.0, %v1870
        %v1872 = vpop.f32.mrb[0].mxu0
        %v1873 = vpop.f32.mrb[0].mxu0
        %v1874 = vadd.f32 0.0, %v1873
        %v1875 = vpop.f32.mrb[0].mxu0
        %1876 = vdwg.mxu0
        %v1878 = vsel %vm436, %v1830, 0
        %1880 = vmatprep.subr.bf16.mxu0 0
        %1881 = vmatpush1.bf16.msra.mxu0 %v1878
        %1882 = vmatprep.subr.bf16.mxu0 0
        %1883 = vmatpush1.bf16.msra.mxu0 0
        %1884 = vmatprep.subr.bf16.mxu0 0
        %1885 = vmatpush1.bf16.msra.mxu0 0
        %1886 = vmatprep.subr.bf16.mxu0 0
        %1887 = vmatpush1.bf16.msra.mxu0 0
        %1888 = vmatprep.subr.bf16.mxu0 0
        %1889 = vmatpush1.bf16.msra.mxu0 0
        %1890 = vmatprep.subr.bf16.mxu0 0
        %1891 = vmatpush1.bf16.msra.mxu0 0
        %1892 = vmatprep.subr.bf16.mxu0 0
        %1893 = vmatpush1.bf16.msra.mxu0 0
        %1894 = vmatprep.subr.bf16.mxu0 0
        %1895 = vmatpush1.bf16.msra.mxu0 0
        %1896 = vmatprep.subr.bf16.mxu0 0
        %1897 = vmatpush1.bf16.msra.mxu0 0
        %1898 = vmatprep.subr.bf16.mxu0 0
        %1899 = vmatpush1.bf16.msra.mxu0 0
        %1900 = vmatprep.subr.bf16.mxu0 0
        %1901 = vmatpush1.bf16.msra.mxu0 0
        %1902 = vmatprep.subr.bf16.mxu0 0
        %1903 = vmatpush1.bf16.msra.mxu0 0
        %1904 = vmatprep.subr.bf16.mxu0 0
        %1905 = vmatpush1.bf16.msra.mxu0 0
        %1906 = vmatprep.subr.bf16.mxu0 0
        %1907 = vmatpush1.bf16.msra.mxu0 0
        %1908 = vmatprep.subr.bf16.mxu0 0
        %1909 = vmatpush1.bf16.msra.mxu0 0
        %1910 = vmatprep.subr.bf16.mxu0 0
        %1911 = vmatpush1.bf16.msra.mxu0 0
        %1912 = vmatprep.mubr.bf16.mxu0 0
        %1913 = vmatmul.mubr.bf16.gmra.mrb[0].mxu0 %v487
        %v1914 = vpop.f32.mrb[0].mxu0
        %v1915 = vadd.f32 %v1871, %v1914
        %v1916 = vpop.f32.mrb[0].mxu0
        %v1917 = vpop.f32.mrb[0].mxu0
        %v1918 = vadd.f32 %v1874, %v1917
        %v1919 = vpop.f32.mrb[0].mxu0
        %1920 = vdwg.mxu0
        %1921 = vrot.lane.b32.xlu0 %v1830, 126
        %v1922 = vpop.permute.xlu0 %1921
        %v1924 = vsel %vm436, %v1922, 0
        %1926 = vmatprep.subr.bf16.mxu0 0
        %1927 = vmatpush1.bf16.msra.mxu0 %v1924
        %1928 = vmatprep.subr.bf16.mxu0 0
        %1929 = vmatpush1.bf16.msra.mxu0 0
        %1930 = vmatprep.subr.bf16.mxu0 0
        %1931 = vmatpush1.bf16.msra.mxu0 0
        %1932 = vmatprep.subr.bf16.mxu0 0
        %1933 = vmatpush1.bf16.msra.mxu0 0
        %1934 = vmatprep.subr.bf16.mxu0 0
        %1935 = vmatpush1.bf16.msra.mxu0 0
        %1936 = vmatprep.subr.bf16.mxu0 0
        %1937 = vmatpush1.bf16.msra.mxu0 0
        %1938 = vmatprep.subr.bf16.mxu0 0
        %1939 = vmatpush1.bf16.msra.mxu0 0
        %1940 = vmatprep.subr.bf16.mxu0 0
        %1941 = vmatpush1.bf16.msra.mxu0 0
        %1942 = vmatprep.subr.bf16.mxu0 0
        %1943 = vmatpush1.bf16.msra.mxu0 0
        %1944 = vmatprep.subr.bf16.mxu0 0
        %1945 = vmatpush1.bf16.msra.mxu0 0
        %1946 = vmatprep.subr.bf16.mxu0 0
        %1947 = vmatpush1.bf16.msra.mxu0 0
        %1948 = vmatprep.subr.bf16.mxu0 0
        %1949 = vmatpush1.bf16.msra.mxu0 0
        %1950 = vmatprep.subr.bf16.mxu0 0
        %1951 = vmatpush1.bf16.msra.mxu0 0
        %1952 = vmatprep.subr.bf16.mxu0 0
        %1953 = vmatpush1.bf16.msra.mxu0 0
        %1954 = vmatprep.subr.bf16.mxu0 0
        %1955 = vmatpush1.bf16.msra.mxu0 0
        %1956 = vmatprep.subr.bf16.mxu0 0
        %1957 = vmatpush1.bf16.msra.mxu0 0
        %1958 = vmatprep.mubr.bf16.mxu0 0
        %1959 = vmatmul.mubr.bf16.gmra.mrb[0].mxu0 %v541
        %v1960 = vpop.f32.mrb[0].mxu0
        %v1961 = vadd.f32 0.0, %v1960
        %v1962 = vpop.f32.mrb[0].mxu0
        %v1963 = vpop.f32.mrb[0].mxu0
        %v1964 = vadd.f32 0.0, %v1963
        %v1965 = vpop.f32.mrb[0].mxu0
        %1966 = vdwg.mxu0
        %v1967 = vadd.f32 %v1915, %v1961
        %v1968 = vadd.f32 %v1918, %v1964
        %v1969 = vmul.f32 %v1967, %v592
        %v1970 = vmul.f32 %v1968, %v597
        %v1971 = vadd.f32 %v1969, %v604
        %v1972 = vadd.f32 %v1970, %v609
        %v1973 = vmax.f32 %v1971, 0.0
        %v1974 = vmax.f32 %v1972, 0.0
        %v1975 = vpack.c.bf16 %v1974, %v1973
        %v1977 = vrot.slane %v1975, 4
        %v1979 = vsel %vm624, %v1977, 0
        %1981 = vmatprep.subr.bf16.mxu0 0
        %1982 = vmatpush1.bf16.msra.mxu0 %v622
        %1983 = vmatprep.subr.bf16.mxu0 0
        %1984 = vmatpush1.bf16.msra.mxu0 0
        %1985 = vmatprep.subr.bf16.mxu0 0
        %1986 = vmatpush1.bf16.msra.mxu0 0
        %1987 = vmatprep.subr.bf16.mxu0 0
        %1988 = vmatpush1.bf16.msra.mxu0 0
        %1989 = vmatprep.subr.bf16.mxu0 0
        %1990 = vmatpush1.bf16.msra.mxu0 0
        %1991 = vmatprep.subr.bf16.mxu0 0
        %1992 = vmatpush1.bf16.msra.mxu0 0
        %1993 = vmatprep.subr.bf16.mxu0 0
        %1994 = vmatpush1.bf16.msra.mxu0 0
        %1995 = vmatprep.subr.bf16.mxu0 0
        %1996 = vmatpush1.bf16.msra.mxu0 0
        %1997 = vmatprep.subr.bf16.mxu0 0
        %1998 = vmatpush1.bf16.msra.mxu0 0
        %1999 = vmatprep.subr.bf16.mxu0 0
        %2000 = vmatpush1.bf16.msra.mxu0 0
        %2001 = vmatprep.subr.bf16.mxu0 0
        %2002 = vmatpush1.bf16.msra.mxu0 0
        %2003 = vmatprep.subr.bf16.mxu0 0
        %2004 = vmatpush1.bf16.msra.mxu0 0
        %2005 = vmatprep.subr.bf16.mxu0 0
        %2006 = vmatpush1.bf16.msra.mxu0 0
        %2007 = vmatprep.subr.bf16.mxu0 0
        %2008 = vmatpush1.bf16.msra.mxu0 0
        %2009 = vmatprep.subr.bf16.mxu0 0
        %2010 = vmatpush1.bf16.msra.mxu0 0
        %2011 = vmatprep.subr.bf16.mxu0 0
        %2012 = vmatpush1.bf16.msra.mxu0 0
        %2013 = vmatprep.mubr.bf16.mxu0 0
        %2014 = vmatmul.mubr.bf16.gmra.mrb[0].mxu0 %v1979
        %v2015 = vpop.f32.mrb[0].mxu0
        %v2016 = vadd.f32 0.0, %v2015
        %v2017 = vpop.f32.mrb[0].mxu0
        %v2018 = vpop.f32.mrb[0].mxu0
        %v2019 = vpop.f32.mrb[0].mxu0
        %2020 = vdwg.mxu0
        %v2022 = vsel %vm624, %v1975, 0
        %2024 = vmatprep.subr.bf16.mxu0 0
        %2025 = vmatpush1.bf16.msra.mxu0 %v672
        %2026 = vmatprep.subr.bf16.mxu0 0
        %2027 = vmatpush1.bf16.msra.mxu0 0
        %2028 = vmatprep.subr.bf16.mxu0 0
        %2029 = vmatpush1.bf16.msra.mxu0 0
        %2030 = vmatprep.subr.bf16.mxu0 0
        %2031 = vmatpush1.bf16.msra.mxu0 0
        %2032 = vmatprep.subr.bf16.mxu0 0
        %2033 = vmatpush1.bf16.msra.mxu0 0
        %2034 = vmatprep.subr.bf16.mxu0 0
        %2035 = vmatpush1.bf16.msra.mxu0 0
        %2036 = vmatprep.subr.bf16.mxu0 0
        %2037 = vmatpush1.bf16.msra.mxu0 0
        %2038 = vmatprep.subr.bf16.mxu0 0
        %2039 = vmatpush1.bf16.msra.mxu0 0
        %2040 = vmatprep.subr.bf16.mxu0 0
        %2041 = vmatpush1.bf16.msra.mxu0 0
        %2042 = vmatprep.subr.bf16.mxu0 0
        %2043 = vmatpush1.bf16.msra.mxu0 0
        %2044 = vmatprep.subr.bf16.mxu0 0
        %2045 = vmatpush1.bf16.msra.mxu0 0
        %2046 = vmatprep.subr.bf16.mxu0 0
        %2047 = vmatpush1.bf16.msra.mxu0 0
        %2048 = vmatprep.subr.bf16.mxu0 0
        %2049 = vmatpush1.bf16.msra.mxu0 0
        %2050 = vmatprep.subr.bf16.mxu0 0
        %2051 = vmatpush1.bf16.msra.mxu0 0
        %2052 = vmatprep.subr.bf16.mxu0 0
        %2053 = vmatpush1.bf16.msra.mxu0 0
        %2054 = vmatprep.subr.bf16.mxu0 0
        %2055 = vmatpush1.bf16.msra.mxu0 0
        %2056 = vmatprep.mubr.bf16.mxu0 0
        %2057 = vmatmul.mubr.bf16.gmra.mrb[0].mxu0 %v2022
        %v2058 = vpop.f32.mrb[0].mxu0
        %v2059 = vadd.f32 %v2016, %v2058
        %v2060 = vpop.f32.mrb[0].mxu0
        %v2061 = vpop.f32.mrb[0].mxu0
        %v2062 = vpop.f32.mrb[0].mxu0
        %2063 = vdwg.mxu0
        %v2064 = vpack.c.bf16 %v2059, %v2059
        %v2067 = vunpack.c.l.s4 1966171168
        %v2068 = vunpack.c.0.s8 %v2067
        %v2069 = vlaneseq
        %v2070 = vshrl.u32 %v2069, 7
        %v2071 = vsub.s32 %v2068, %v2070
        %v2072 = vrot.slane %v2064, %v2071
        %v2073 = vcombine.high %v2072, %v2072
        %v2075 = vunpack.c.l.s4 1966171168
        %v2076 = vunpack.c.0.s8 %v2075
        %v2077 = vlaneseq
        %v2078 = vshrl.u32 %v2077, 7
        %v2079 = vsub.s32 %v2076, %v2078
        %v2080 = vrot.slane %v2072, %v2079
        %v2082 = vunpack.c.l.s4 1966171168
        %v2083 = vunpack.c.0.s8 %v2082
        %v2084 = vlaneseq
        %v2085 = vshrl.u32 %v2084, 7
        %v2086 = vsub.s32 %v2083, %v2085
        %v2087 = vrot.slane %v2073, %v2086
        %v2088 = vunpack.i.l.s16 %v2080
        %v2089 = vunpack.i.h.s16 %v2080
        %v2090 = vunpack.i.l.s16 %v2087
        %v2091 = vunpack.i.h.s16 %v2087
        %v2092 = vpack.i.b16 %v2088, %v2088
        %v2093 = vpack.i.b16 %v2089, %v2089
        %v2094 = vpack.i.b16 %v2090, %v2090
        %v2095 = vpack.i.b16 %v2091, %v2091
        %v2097 = vunpack.c.l.s4 286326784
        %v2098 = vunpack.c.0.s8 %v2097
        %v2099 = vlaneseq
        %v2100 = vshrl.u32 %v2099, 7
        %v2101 = vsub.s32 %v2098, %v2100
        %v2102 = vrot.slane %v2092, %v2101
        %v2104 = vunpack.c.l.s4 286326784
        %v2105 = vunpack.c.0.s8 %v2104
        %v2106 = vlaneseq
        %v2107 = vshrl.u32 %v2106, 7
        %v2108 = vsub.s32 %v2105, %v2107
        %v2109 = vrot.slane %v2093, %v2108
        %v2111 = vunpack.c.l.s4 286326784
        %v2112 = vunpack.c.0.s8 %v2111
        %v2113 = vlaneseq
        %v2114 = vshrl.u32 %v2113, 7
        %v2115 = vsub.s32 %v2112, %v2114
        %v2116 = vrot.slane %v2094, %v2115
        %v2118 = vunpack.c.l.s4 286326784
        %v2119 = vunpack.c.0.s8 %v2118
        %v2120 = vlaneseq
        %v2121 = vshrl.u32 %v2120, 7
        %v2122 = vsub.s32 %v2119, %v2121
        %v2123 = vrot.slane %v2095, %v2122
        %vm2128 = vcmask 257027
        %vm2129 = vsmask.f32 3328
        %vm2130 = vmand %vm2128, %vm2129
        %v2131 = vld [vmem:[%s317] sm:$0x8]
        %v2132 = vsel %vm2130, %v2102, %v2131
        %2133 = vst [vmem:[%s317] sm:$0x8] %v2132
        %v2134 = vld [vmem:[%s317 + $0x8] sm:$0x8]
        %v2135 = vsel %vm2130, %v2109, %v2134
        %2136 = vst [vmem:[%s317 + $0x8] sm:$0x8] %v2135
        %v2137 = vld [vmem:[%s317 + $0x10] sm:$0x8]
        %v2138 = vsel %vm2130, %v2116, %v2137
        %2139 = vst [vmem:[%s317 + $0x10] sm:$0x8] %v2138
        %v2140 = vld [vmem:[%s317 + $0x18] sm:$0x8]
        %v2141 = vsel %vm2130, %v2123, %v2140
        %2142 = vst [vmem:[%s317 + $0x18] sm:$0x8] %v2141
        %v2143 = vcombine.high %v2080, %v2080
        %v2144 = vcombine.high %v2087, %v2087
        %v2145 = vunpack.i.l.s16 %v2143
        %v2146 = vunpack.i.h.s16 %v2143
        %v2147 = vunpack.i.l.s16 %v2144
        %v2148 = vunpack.i.h.s16 %v2144
        %v2149 = vpack.i.b16 %v2145, %v2145
        %v2150 = vpack.i.b16 %v2146, %v2146
        %v2151 = vpack.i.b16 %v2147, %v2147
        %v2152 = vpack.i.b16 %v2148, %v2148
        %v2154 = vunpack.c.l.s4 286326784
        %v2155 = vunpack.c.0.s8 %v2154
        %v2156 = vlaneseq
        %v2157 = vshrl.u32 %v2156, 7
        %v2158 = vsub.s32 %v2155, %v2157
        %v2159 = vrot.slane %v2149, %v2158
        %v2161 = vunpack.c.l.s4 286326784
        %v2162 = vunpack.c.0.s8 %v2161
        %v2163 = vlaneseq
        %v2164 = vshrl.u32 %v2163, 7
        %v2165 = vsub.s32 %v2162, %v2164
        %v2166 = vrot.slane %v2150, %v2165
        %v2168 = vunpack.c.l.s4 286326784
        %v2169 = vunpack.c.0.s8 %v2168
        %v2170 = vlaneseq
        %v2171 = vshrl.u32 %v2170, 7
        %v2172 = vsub.s32 %v2169, %v2171
        %v2173 = vrot.slane %v2151, %v2172
        %v2175 = vunpack.c.l.s4 286326784
        %v2176 = vunpack.c.0.s8 %v2175
        %v2177 = vlaneseq
        %v2178 = vshrl.u32 %v2177, 7
        %v2179 = vsub.s32 %v2176, %v2178
        %v2180 = vrot.slane %v2152, %v2179
        %vm2185 = vsmask.f32 7950
        %vm2186 = vmand %vm2128, %vm2185
        %v2187 = vld [vmem:[%s317] sm:$0x8]
        %v2188 = vsel %vm2186, %v2159, %v2187
        %2189 = vst [vmem:[%s317] sm:$0x8] %v2188
        %v2190 = vld [vmem:[%s317 + $0x8] sm:$0x8]
        %v2191 = vsel %vm2186, %v2166, %v2190
        %2192 = vst [vmem:[%s317 + $0x8] sm:$0x8] %v2191
        %v2193 = vld [vmem:[%s317 + $0x10] sm:$0x8]
        %v2194 = vsel %vm2186, %v2173, %v2193
        %2195 = vst [vmem:[%s317 + $0x10] sm:$0x8] %v2194
        %v2196 = vld [vmem:[%s317 + $0x18] sm:$0x8]
        %v2197 = vsel %vm2186, %v2180, %v2196
        %2198 = vst [vmem:[%s317 + $0x18] sm:$0x8] %v2197
        %v2199 = vld [vmem:[%s275] sm:$0x4]
        %v2200 = vld [vmem:[%s275 + $0x4] sm:$0x4]
        %v2201 = vld [vmem:[%s275 + $0x8] sm:$0x4]
        %v2202 = vld [vmem:[%s275 + $0xc] sm:$0x4]
        %v2203 = vld [vmem:[%s275 + $0x10] sm:$0x4]
        %v2204 = vld [vmem:[%s275 + $0x14] sm:$0x4]
        %v2205 = vld [vmem:[%s275 + $0x18] sm:$0x4]
        %v2206 = vld [vmem:[%s275 + $0x1c] sm:$0x4]
        %v2207 = vld [vmem:[%s275 + $0x20] sm:$0x4]
        %v2208 = vld [vmem:[%s275 + $0x24] sm:$0x4]
        %v2209 = vld [vmem:[%s275 + $0x28] sm:$0x4]
        %v2210 = vld [vmem:[%s275 + $0x2c] sm:$0x4]
        %v2223 = vunpack.c.l.b16 %v2199
        %v2224 = vunpack.c.l.b16 %v2200
        %v2225 = vunpack.c.l.b16 %v2201
        %v2226 = vunpack.c.l.b16 %v2202
        %v2227 = vunpack.c.l.b16 %v2203
        %v2228 = vunpack.c.l.b16 %v2204
        %v2229 = vunpack.c.l.b16 %v2205
        %v2230 = vunpack.c.l.b16 %v2206
        %v2231 = vunpack.c.l.b16 %v2207
        %v2232 = vunpack.c.l.b16 %v2208
        %v2233 = vunpack.c.l.b16 %v2209
        %v2234 = vunpack.c.l.b16 %v2210
        %v2235 = vpack.c.b16 %v2223, %v2223
        %v2236 = vpack.c.b16 %v2224, %v2224
        %v2237 = vpack.c.b16 %v2225, %v2225
        %v2238 = vpack.c.b16 %v2226, %v2226
        %v2239 = vpack.c.b16 %v2227, %v2227
        %v2240 = vpack.c.b16 %v2228, %v2228
        %v2241 = vpack.c.b16 %v2229, %v2229
        %v2242 = vpack.c.b16 %v2230, %v2230
        %v2243 = vpack.c.b16 %v2231, %v2231
        %v2244 = vpack.c.b16 %v2232, %v2232
        %v2245 = vpack.c.b16 %v2233, %v2233
        %v2246 = vpack.c.b16 %v2234, %v2234
        %v2247 = vunpack.c.l.b16 %v2235
        %v2248 = vunpack.c.l.b16 %v2236
        %v2249 = vunpack.c.l.b16 %v2237
        %v2250 = vunpack.c.l.b16 %v2238
        %v2251 = vunpack.c.l.b16 %v2239
        %v2252 = vunpack.c.l.b16 %v2240
        %v2253 = vunpack.c.l.b16 %v2241
        %v2254 = vunpack.c.l.b16 %v2242
        %v2255 = vunpack.c.l.b16 %v2243
        %v2256 = vunpack.c.l.b16 %v2244
        %v2257 = vunpack.c.l.b16 %v2245
        %v2258 = vunpack.c.l.b16 %v2246
        %v2259 = vrot.slane %v2247, 4
        %v2260 = vrot.slane %v2248, 3
        %v2261 = vsel %vm403, %v2260, %v2259
        %v2262 = vrot.slane %v2249, 2
        %v2263 = vsel %vm406, %v2262, %v2261
        %v2264 = vrot.slane %v2250, 1
        %v2265 = vsel %vm409, %v2264, %v2263
        %v2266 = vsel %vm412, %v2251, %v2265
        %v2267 = vrot.slane %v2252, 7
        %v2268 = vsel %vm415, %v2267, %v2266
        %v2269 = vrot.slane %v2253, 6
        %v2270 = vsel %vm418, %v2269, %v2268
        %v2271 = vrot.slane %v2254, 5
        %v2272 = vsel %vm421, %v2271, %v2270
        %v2273 = vrot.slane %v2255, 4
        %v2274 = vrot.slane %v2256, 3
        %v2275 = vsel %vm403, %v2274, %v2273
        %v2276 = vrot.slane %v2257, 2
        %v2277 = vsel %vm406, %v2276, %v2275
        %v2278 = vrot.slane %v2258, 1
        %v2279 = vsel %vm409, %v2278, %v2277
        %v2280 = vpack.c.b16 %v2279, %v2272
        %2281 = vrot.lane.b32.xlu0 %v2280, 127
        %v2282 = vpop.permute.xlu0 %2281
        %v2284 = vsel %vm436, %v2282, 0
        %2286 = vmatprep.subr.bf16.mxu0 0
        %2287 = vmatpush1.bf16.msra.mxu0 %v2284
        %2288 = vmatprep.subr.bf16.mxu0 0
        %2289 = vmatpush1.bf16.msra.mxu0 0
        %2290 = vmatprep.subr.bf16.mxu0 0
        %2291 = vmatpush1.bf16.msra.mxu0 0
        %2292 = vmatprep.subr.bf16.mxu0 0
        %2293 = vmatpush1.bf16.msra.mxu0 0
        %2294 = vmatprep.subr.bf16.mxu0 0
        %2295 = vmatpush1.bf16.msra.mxu0 0
        %2296 = vmatprep.subr.bf16.mxu0 0
        %2297 = vmatpush1.bf16.msra.mxu0 0
        %2298 = vmatprep.subr.bf16.mxu0 0
        %2299 = vmatpush1.bf16.msra.mxu0 0
        %2300 = vmatprep.subr.bf16.mxu0 0
        %2301 = vmatpush1.bf16.msra.mxu0 0
        %2302 = vmatprep.subr.bf16.mxu0 0
        %2303 = vmatpush1.bf16.msra.mxu0 0
        %2304 = vmatprep.subr.bf16.mxu0 0
        %2305 = vmatpush1.bf16.msra.mxu0 0
        %2306 = vmatprep.subr.bf16.mxu0 0
        %2307 = vmatpush1.bf16.msra.mxu0 0
        %2308 = vmatprep.subr.bf16.mxu0 0
        %2309 = vmatpush1.bf16.msra.mxu0 0
        %2310 = vmatprep.subr.bf16.mxu0 0
        %2311 = vmatpush1.bf16.msra.mxu0 0
        %2312 = vmatprep.subr.bf16.mxu0 0
        %2313 = vmatpush1.bf16.msra.mxu0 0
        %2314 = vmatprep.subr.bf16.mxu0 0
        %2315 = vmatpush1.bf16.msra.mxu0 0
        %2316 = vmatprep.subr.bf16.mxu0 0
        %2317 = vmatpush1.bf16.msra.mxu0 0
        %2318 = vmatprep.mubr.bf16.mxu0 0
        %2319 = vmatmul.mubr.bf16.gmra.mrb[0].mxu0 %v434
        %v2320 = vpop.f32.mrb[0].mxu0
        %v2321 = vadd.f32 0.0, %v2320
        %v2322 = vpop.f32.mrb[0].mxu0
        %v2323 = vpop.f32.mrb[0].mxu0
        %v2324 = vadd.f32 0.0, %v2323
        %v2325 = vpop.f32.mrb[0].mxu0
        %2326 = vdwg.mxu0
        %v2328 = vsel %vm436, %v2280, 0
        %2330 = vmatprep.subr.bf16.mxu0 0
        %2331 = vmatpush1.bf16.msra.mxu0 %v2328
        %2332 = vmatprep.subr.bf16.mxu0 0
        %2333 = vmatpush1.bf16.msra.mxu0 0
        %2334 = vmatprep.subr.bf16.mxu0 0
        %2335 = vmatpush1.bf16.msra.mxu0 0
        %2336 = vmatprep.subr.bf16.mxu0 0
        %2337 = vmatpush1.bf16.msra.mxu0 0
        %2338 = vmatprep.subr.bf16.mxu0 0
        %2339 = vmatpush1.bf16.msra.mxu0 0
        %2340 = vmatprep.subr.bf16.mxu0 0
        %2341 = vmatpush1.bf16.msra.mxu0 0
        %2342 = vmatprep.subr.bf16.mxu0 0
        %2343 = vmatpush1.bf16.msra.mxu0 0
        %2344 = vmatprep.subr.bf16.mxu0 0
        %2345 = vmatpush1.bf16.msra.mxu0 0
        %2346 = vmatprep.subr.bf16.mxu0 0
        %2347 = vmatpush1.bf16.msra.mxu0 0
        %2348 = vmatprep.subr.bf16.mxu0 0
        %2349 = vmatpush1.bf16.msra.mxu0 0
        %2350 = vmatprep.subr.bf16.mxu0 0
        %2351 = vmatpush1.bf16.msra.mxu0 0
        %2352 = vmatprep.subr.bf16.mxu0 0
        %2353 = vmatpush1.bf16.msra.mxu0 0
        %2354 = vmatprep.subr.bf16.mxu0 0
        %2355 = vmatpush1.bf16.msra.mxu0 0
        %2356 = vmatprep.subr.bf16.mxu0 0
        %2357 = vmatpush1.bf16.msra.mxu0 0
        %2358 = vmatprep.subr.bf16.mxu0 0
        %2359 = vmatpush1.bf16.msra.mxu0 0
        %2360 = vmatprep.subr.bf16.mxu0 0
        %2361 = vmatpush1.bf16.msra.mxu0 0
        %2362 = vmatprep.mubr.bf16.mxu0 0
        %2363 = vmatmul.mubr.bf16.gmra.mrb[0].mxu0 %v487
        %v2364 = vpop.f32.mrb[0].mxu0
        %v2365 = vadd.f32 %v2321, %v2364
        %v2366 = vpop.f32.mrb[0].mxu0
        %v2367 = vpop.f32.mrb[0].mxu0
        %v2368 = vadd.f32 %v2324, %v2367
        %v2369 = vpop.f32.mrb[0].mxu0
        %2370 = vdwg.mxu0
        %2371 = vrot.lane.b32.xlu0 %v2280, 126
        %v2372 = vpop.permute.xlu0 %2371
        %v2374 = vsel %vm436, %v2372, 0
        %2376 = vmatprep.subr.bf16.mxu0 0
        %2377 = vmatpush1.bf16.msra.mxu0 %v2374
        %2378 = vmatprep.subr.bf16.mxu0 0
        %2379 = vmatpush1.bf16.msra.mxu0 0
        %2380 = vmatprep.subr.bf16.mxu0 0
        %2381 = vmatpush1.bf16.msra.mxu0 0
        %2382 = vmatprep.subr.bf16.mxu0 0
        %2383 = vmatpush1.bf16.msra.mxu0 0
        %2384 = vmatprep.subr.bf16.mxu0 0
        %2385 = vmatpush1.bf16.msra.mxu0 0
        %2386 = vmatprep.subr.bf16.mxu0 0
        %2387 = vmatpush1.bf16.msra.mxu0 0
        %2388 = vmatprep.subr.bf16.mxu0 0
        %2389 = vmatpush1.bf16.msra.mxu0 0
        %2390 = vmatprep.subr.bf16.mxu0 0
        %2391 = vmatpush1.bf16.msra.mxu0 0
        %2392 = vmatprep.subr.bf16.mxu0 0
        %2393 = vmatpush1.bf16.msra.mxu0 0
        %2394 = vmatprep.subr.bf16.mxu0 0
        %2395 = vmatpush1.bf16.msra.mxu0 0
        %2396 = vmatprep.subr.bf16.mxu0 0
        %2397 = vmatpush1.bf16.msra.mxu0 0
        %2398 = vmatprep.subr.bf16.mxu0 0
        %2399 = vmatpush1.bf16.msra.mxu0 0
        %2400 = vmatprep.subr.bf16.mxu0 0
        %2401 = vmatpush1.bf16.msra.mxu0 0
        %2402 = vmatprep.subr.bf16.mxu0 0
        %2403 = vmatpush1.bf16.msra.mxu0 0
        %2404 = vmatprep.subr.bf16.mxu0 0
        %2405 = vmatpush1.bf16.msra.mxu0 0
        %2406 = vmatprep.subr.bf16.mxu0 0
        %2407 = vmatpush1.bf16.msra.mxu0 0
        %2408 = vmatprep.mubr.bf16.mxu0 0
        %2409 = vmatmul.mubr.bf16.gmra.mrb[0].mxu0 %v541
        %v2410 = vpop.f32.mrb[0].mxu0
        %v2411 = vadd.f32 0.0, %v2410
        %v2412 = vpop.f32.mrb[0].mxu0
        %v2413 = vpop.f32.mrb[0].mxu0
        %v2414 = vadd.f32 0.0, %v2413
        %v2415 = vpop.f32.mrb[0].mxu0
        %2416 = vdwg.mxu0
        %v2417 = vadd.f32 %v2365, %v2411
        %v2418 = vadd.f32 %v2368, %v2414
        %v2419 = vmul.f32 %v2417, %v592
        %v2420 = vmul.f32 %v2418, %v597
        %v2421 = vadd.f32 %v2419, %v604
        %v2422 = vadd.f32 %v2420, %v609
        %v2423 = vmax.f32 %v2421, 0.0
        %v2424 = vmax.f32 %v2422, 0.0
        %v2425 = vpack.c.bf16 %v2424, %v2423
        %v2427 = vrot.slane %v2425, 4
        %v2429 = vsel %vm624, %v2427, 0
        %2431 = vmatprep.subr.bf16.mxu0 0
        %2432 = vmatpush1.bf16.msra.mxu0 %v622
        %2433 = vmatprep.subr.bf16.mxu0 0
        %2434 = vmatpush1.bf16.msra.mxu0 0
        %2435 = vmatprep.subr.bf16.mxu0 0
        %2436 = vmatpush1.bf16.msra.mxu0 0
        %2437 = vmatprep.subr.bf16.mxu0 0
        %2438 = vmatpush1.bf16.msra.mxu0 0
        %2439 = vmatprep.subr.bf16.mxu0 0
        %2440 = vmatpush1.bf16.msra.mxu0 0
        %2441 = vmatprep.subr.bf16.mxu0 0
        %2442 = vmatpush1.bf16.msra.mxu0 0
        %2443 = vmatprep.subr.bf16.mxu0 0
        %2444 = vmatpush1.bf16.msra.mxu0 0
        %2445 = vmatprep.subr.bf16.mxu0 0
        %2446 = vmatpush1.bf16.msra.mxu0 0
        %2447 = vmatprep.subr.bf16.mxu0 0
        %2448 = vmatpush1.bf16.msra.mxu0 0
        %2449 = vmatprep.subr.bf16.mxu0 0
        %2450 = vmatpush1.bf16.msra.mxu0 0
        %2451 = vmatprep.subr.bf16.mxu0 0
        %2452 = vmatpush1.bf16.msra.mxu0 0
        %2453 = vmatprep.subr.bf16.mxu0 0
        %2454 = vmatpush1.bf16.msra.mxu0 0
        %2455 = vmatprep.subr.bf16.mxu0 0
        %2456 = vmatpush1.bf16.msra.mxu0 0
        %2457 = vmatprep.subr.bf16.mxu0 0
        %2458 = vmatpush1.bf16.msra.mxu0 0
        %2459 = vmatprep.subr.bf16.mxu0 0
        %2460 = vmatpush1.bf16.msra.mxu0 0
        %2461 = vmatprep.subr.bf16.mxu0 0
        %2462 = vmatpush1.bf16.msra.mxu0 0
        %2463 = vmatprep.mubr.bf16.mxu0 0
        %2464 = vmatmul.mubr.bf16.gmra.mrb[0].mxu0 %v2429
        %v2465 = vpop.f32.mrb[0].mxu0
        %v2466 = vadd.f32 0.0, %v2465
        %v2467 = vpop.f32.mrb[0].mxu0
        %v2468 = vpop.f32.mrb[0].mxu0
        %v2469 = vpop.f32.mrb[0].mxu0
        %2470 = vdwg.mxu0
        %v2472 = vsel %vm624, %v2425, 0
        %2474 = vmatprep.subr.bf16.mxu0 0
        %2475 = vmatpush1.bf16.msra.mxu0 %v672
        %2476 = vmatprep.subr.bf16.mxu0 0
        %2477 = vmatpush1.bf16.msra.mxu0 0
        %2478 = vmatprep.subr.bf16.mxu0 0
        %2479 = vmatpush1.bf16.msra.mxu0 0
        %2480 = vmatprep.subr.bf16.mxu0 0
        %2481 = vmatpush1.bf16.msra.mxu0 0
        %2482 = vmatprep.subr.bf16.mxu0 0
        %2483 = vmatpush1.bf16.msra.mxu0 0
        %2484 = vmatprep.subr.bf16.mxu0 0
        %2485 = vmatpush1.bf16.msra.mxu0 0
        %2486 = vmatprep.subr.bf16.mxu0 0
        %2487 = vmatpush1.bf16.msra.mxu0 0
        %2488 = vmatprep.subr.bf16.mxu0 0
        %2489 = vmatpush1.bf16.msra.mxu0 0
        %2490 = vmatprep.subr.bf16.mxu0 0
        %2491 = vmatpush1.bf16.msra.mxu0 0
        %2492 = vmatprep.subr.bf16.mxu0 0
        %2493 = vmatpush1.bf16.msra.mxu0 0
        %2494 = vmatprep.subr.bf16.mxu0 0
        %2495 = vmatpush1.bf16.msra.mxu0 0
        %2496 = vmatprep.subr.bf16.mxu0 0
        %2497 = vmatpush1.bf16.msra.mxu0 0
        %2498 = vmatprep.subr.bf16.mxu0 0
        %2499 = vmatpush1.bf16.msra.mxu0 0
        %2500 = vmatprep.subr.bf16.mxu0 0
        %2501 = vmatpush1.bf16.msra.mxu0 0
        %2502 = vmatprep.subr.bf16.mxu0 0
        %2503 = vmatpush1.bf16.msra.mxu0 0
        %2504 = vmatprep.subr.bf16.mxu0 0
        %2505 = vmatpush1.bf16.msra.mxu0 0
        %2506 = vmatprep.mubr.bf16.mxu0 0
        %2507 = vmatmul.mubr.bf16.gmra.mrb[0].mxu0 %v2472
        %v2508 = vpop.f32.mrb[0].mxu0
        %v2509 = vadd.f32 %v2466, %v2508
        %v2510 = vpop.f32.mrb[0].mxu0
        %v2511 = vpop.f32.mrb[0].mxu0
        %v2512 = vpop.f32.mrb[0].mxu0
        %2513 = vdwg.mxu0
        %v2514 = vpack.c.bf16 %v2509, %v2509
        %v2517 = vunpack.c.l.s4 1966171168
        %v2518 = vunpack.c.0.s8 %v2517
        %v2519 = vlaneseq
        %v2520 = vshrl.u32 %v2519, 7
        %v2521 = vsub.s32 %v2518, %v2520
        %v2522 = vrot.slane %v2514, %v2521
        %v2523 = vcombine.high %v2522, %v2522
        %v2525 = vunpack.c.l.s4 1966171168
        %v2526 = vunpack.c.0.s8 %v2525
        %v2527 = vlaneseq
        %v2528 = vshrl.u32 %v2527, 7
        %v2529 = vsub.s32 %v2526, %v2528
        %v2530 = vrot.slane %v2522, %v2529
        %v2532 = vunpack.c.l.s4 1966171168
        %v2533 = vunpack.c.0.s8 %v2532
        %v2534 = vlaneseq
        %v2535 = vshrl.u32 %v2534, 7
        %v2536 = vsub.s32 %v2533, %v2535
        %v2537 = vrot.slane %v2523, %v2536
        %v2538 = vunpack.i.l.s16 %v2530
        %v2539 = vunpack.i.h.s16 %v2530
        %v2540 = vunpack.i.l.s16 %v2537
        %v2541 = vunpack.i.h.s16 %v2537
        %v2542 = vpack.i.b16 %v2538, %v2538
        %v2543 = vpack.i.b16 %v2539, %v2539
        %v2544 = vpack.i.b16 %v2540, %v2540
        %v2545 = vpack.i.b16 %v2541, %v2541
        %v2547 = vunpack.c.l.s4 286326784
        %v2548 = vunpack.c.0.s8 %v2547
        %v2549 = vlaneseq
        %v2550 = vshrl.u32 %v2549, 7
        %v2551 = vsub.s32 %v2548, %v2550
        %v2552 = vrot.slane %v2542, %v2551
        %v2554 = vunpack.c.l.s4 286326784
        %v2555 = vunpack.c.0.s8 %v2554
        %v2556 = vlaneseq
        %v2557 = vshrl.u32 %v2556, 7
        %v2558 = vsub.s32 %v2555, %v2557
        %v2559 = vrot.slane %v2543, %v2558
        %v2561 = vunpack.c.l.s4 286326784
        %v2562 = vunpack.c.0.s8 %v2561
        %v2563 = vlaneseq
        %v2564 = vshrl.u32 %v2563, 7
        %v2565 = vsub.s32 %v2562, %v2564
        %v2566 = vrot.slane %v2544, %v2565
        %v2568 = vunpack.c.l.s4 286326784
        %v2569 = vunpack.c.0.s8 %v2568
        %v2570 = vlaneseq
        %v2571 = vshrl.u32 %v2570, 7
        %v2572 = vsub.s32 %v2569, %v2571
        %v2573 = vrot.slane %v2545, %v2572
        %v2578 = vld [vmem:[%s317 + $0x4] sm:$0x1]
        %v2579 = vsel %vm783, %v2552, %v2578
        %2580 = vst [vmem:[%s317 + $0x4] sm:$0x1] %v2579
        %v2581 = vld [vmem:[%s317 + $0xc] sm:$0x1]
        %v2582 = vsel %vm783, %v2559, %v2581
        %2583 = vst [vmem:[%s317 + $0xc] sm:$0x1] %v2582
        %v2584 = vld [vmem:[%s317 + $0x14] sm:$0x1]
        %v2585 = vsel %vm783, %v2566, %v2584
        %2586 = vst [vmem:[%s317 + $0x14] sm:$0x1] %v2585
        %v2587 = vld [vmem:[%s317 + $0x1c] sm:$0x1]
        %v2588 = vsel %vm783, %v2573, %v2587
        %2589 = vst [vmem:[%s317 + $0x1c] sm:$0x1] %v2588
        %v2590 = vcombine.high %v2530, %v2530
        %v2591 = vcombine.high %v2537, %v2537
        %v2592 = vunpack.i.l.s16 %v2590
        %v2593 = vunpack.i.h.s16 %v2590
        %v2594 = vunpack.i.l.s16 %v2591
        %v2595 = vunpack.i.h.s16 %v2591
        %v2596 = vpack.i.b16 %v2592, %v2592
        %v2597 = vpack.i.b16 %v2593, %v2593
        %v2598 = vpack.i.b16 %v2594, %v2594
        %v2599 = vpack.i.b16 %v2595, %v2595
        %v2601 = vunpack.c.l.s4 286326784
        %v2602 = vunpack.c.0.s8 %v2601
        %v2603 = vlaneseq
        %v2604 = vshrl.u32 %v2603, 7
        %v2605 = vsub.s32 %v2602, %v2604
        %v2606 = vrot.slane %v2596, %v2605
        %v2608 = vunpack.c.l.s4 286326784
        %v2609 = vunpack.c.0.s8 %v2608
        %v2610 = vlaneseq
        %v2611 = vshrl.u32 %v2610, 7
        %v2612 = vsub.s32 %v2609, %v2611
        %v2613 = vrot.slane %v2597, %v2612
        %v2615 = vunpack.c.l.s4 286326784
        %v2616 = vunpack.c.0.s8 %v2615
        %v2617 = vlaneseq
        %v2618 = vshrl.u32 %v2617, 7
        %v2619 = vsub.s32 %v2616, %v2618
        %v2620 = vrot.slane %v2598, %v2619
        %v2622 = vunpack.c.l.s4 286326784
        %v2623 = vunpack.c.0.s8 %v2622
        %v2624 = vlaneseq
        %v2625 = vshrl.u32 %v2624, 7
        %v2626 = vsub.s32 %v2623, %v2625
        %v2627 = vrot.slane %v2599, %v2626
        %v2632 = vld [vmem:[%s317 + $0x4] sm:$0x1]
        %v2633 = vsel %vm839, %v2606, %v2632
        %2634 = vst [vmem:[%s317 + $0x4] sm:$0x1] %v2633
        %v2635 = vld [vmem:[%s317 + $0xc] sm:$0x1]
        %v2636 = vsel %vm839, %v2613, %v2635
        %2637 = vst [vmem:[%s317 + $0xc] sm:$0x1] %v2636
        %v2638 = vld [vmem:[%s317 + $0x14] sm:$0x1]
        %v2639 = vsel %vm839, %v2620, %v2638
        %2640 = vst [vmem:[%s317 + $0x14] sm:$0x1] %v2639
        %v2641 = vld [vmem:[%s317 + $0x1c] sm:$0x1]
        %v2642 = vsel %vm839, %v2627, %v2641
        %2643 = vst [vmem:[%s317 + $0x1c] sm:$0x1] %v2642
        %v2644 = vld [vmem:[%s275] sm:$0x4]
        %v2645 = vld [vmem:[%s275 + $0x4] sm:$0x4]
        %v2646 = vld [vmem:[%s275 + $0x8] sm:$0x4]
        %v2647 = vld [vmem:[%s275 + $0xc] sm:$0x4]
        %v2648 = vld [vmem:[%s275 + $0x10] sm:$0x4]
        %v2649 = vld [vmem:[%s275 + $0x14] sm:$0x4]
        %v2650 = vld [vmem:[%s275 + $0x18] sm:$0x4]
        %v2651 = vld [vmem:[%s275 + $0x1c] sm:$0x4]
        %v2652 = vld [vmem:[%s275 + $0x20] sm:$0x4]
        %v2653 = vld [vmem:[%s275 + $0x24] sm:$0x4]
        %v2654 = vld [vmem:[%s275 + $0x28] sm:$0x4]
        %v2655 = vld [vmem:[%s275 + $0x2c] sm:$0x4]
        %v2668 = vunpack.c.l.b16 %v2644
        %v2669 = vunpack.c.l.b16 %v2645
        %v2670 = vunpack.c.l.b16 %v2646
        %v2671 = vunpack.c.l.b16 %v2647
        %v2672 = vunpack.c.l.b16 %v2648
        %v2673 = vunpack.c.l.b16 %v2649
        %v2674 = vunpack.c.l.b16 %v2650
        %v2675 = vunpack.c.l.b16 %v2651
        %v2676 = vunpack.c.l.b16 %v2652
        %v2677 = vunpack.c.l.b16 %v2653
        %v2678 = vunpack.c.l.b16 %v2654
        %v2679 = vunpack.c.l.b16 %v2655
        %v2680 = vpack.c.b16 %v2668, %v2668
        %v2681 = vpack.c.b16 %v2669, %v2669
        %v2682 = vpack.c.b16 %v2670, %v2670
        %v2683 = vpack.c.b16 %v2671, %v2671
        %v2684 = vpack.c.b16 %v2672, %v2672
        %v2685 = vpack.c.b16 %v2673, %v2673
        %v2686 = vpack.c.b16 %v2674, %v2674
        %v2687 = vpack.c.b16 %v2675, %v2675
        %v2688 = vpack.c.b16 %v2676, %v2676
        %v2689 = vpack.c.b16 %v2677, %v2677
        %v2690 = vpack.c.b16 %v2678, %v2678
        %v2691 = vpack.c.b16 %v2679, %v2679
        %v2692 = vunpack.c.l.b16 %v2680
        %v2693 = vunpack.c.l.b16 %v2681
        %v2694 = vunpack.c.l.b16 %v2682
        %v2695 = vunpack.c.l.b16 %v2683
        %v2696 = vunpack.c.l.b16 %v2684
        %v2697 = vunpack.c.l.b16 %v2685
        %v2698 = vunpack.c.l.b16 %v2686
        %v2699 = vunpack.c.l.b16 %v2687
        %v2700 = vunpack.c.l.b16 %v2688
        %v2701 = vunpack.c.l.b16 %v2689
        %v2702 = vunpack.c.l.b16 %v2690
        %v2703 = vunpack.c.l.b16 %v2691
        %v2704 = vrot.slane %v2692, 5
        %v2705 = vrot.slane %v2693, 4
        %v2706 = vsel %vm403, %v2705, %v2704
        %v2707 = vrot.slane %v2694, 3
        %v2708 = vsel %vm406, %v2707, %v2706
        %v2709 = vrot.slane %v2695, 2
        %v2710 = vsel %vm409, %v2709, %v2708
        %v2711 = vrot.slane %v2696, 1
        %v2712 = vsel %vm412, %v2711, %v2710
        %v2713 = vsel %vm415, %v2697, %v2712
        %v2714 = vrot.slane %v2698, 7
        %v2715 = vsel %vm418, %v2714, %v2713
        %v2716 = vrot.slane %v2699, 6
        %v2717 = vsel %vm421, %v2716, %v2715
        %v2718 = vrot.slane %v2700, 5
        %v2719 = vrot.slane %v2701, 4
        %v2720 = vsel %vm403, %v2719, %v2718
        %v2721 = vrot.slane %v2702, 3
        %v2722 = vsel %vm406, %v2721, %v2720
        %v2723 = vrot.slane %v2703, 2
        %v2724 = vsel %vm409, %v2723, %v2722
        %v2725 = vpack.c.b16 %v2724, %v2717
        %2726 = vrot.lane.b32.xlu0 %v2725, 127
        %v2727 = vpop.permute.xlu0 %2726
        %v2729 = vsel %vm436, %v2727, 0
        %2731 = vmatprep.subr.bf16.mxu0 0
        %2732 = vmatpush1.bf16.msra.mxu0 %v2729
        %2733 = vmatprep.subr.bf16.mxu0 0
        %2734 = vmatpush1.bf16.msra.mxu0 0
        %2735 = vmatprep.subr.bf16.mxu0 0
        %2736 = vmatpush1.bf16.msra.mxu0 0
        %2737 = vmatprep.subr.bf16.mxu0 0
        %2738 = vmatpush1.bf16.msra.mxu0 0
        %2739 = vmatprep.subr.bf16.mxu0 0
        %2740 = vmatpush1.bf16.msra.mxu0 0
        %2741 = vmatprep.subr.bf16.mxu0 0
        %2742 = vmatpush1.bf16.msra.mxu0 0
        %2743 = vmatprep.subr.bf16.mxu0 0
        %2744 = vmatpush1.bf16.msra.mxu0 0
        %2745 = vmatprep.subr.bf16.mxu0 0
        %2746 = vmatpush1.bf16.msra.mxu0 0
        %2747 = vmatprep.subr.bf16.mxu0 0
        %2748 = vmatpush1.bf16.msra.mxu0 0
        %2749 = vmatprep.subr.bf16.mxu0 0
        %2750 = vmatpush1.bf16.msra.mxu0 0
        %2751 = vmatprep.subr.bf16.mxu0 0
        %2752 = vmatpush1.bf16.msra.mxu0 0
        %2753 = vmatprep.subr.bf16.mxu0 0
        %2754 = vmatpush1.bf16.msra.mxu0 0
        %2755 = vmatprep.subr.bf16.mxu0 0
        %2756 = vmatpush1.bf16.msra.mxu0 0
        %2757 = vmatprep.subr.bf16.mxu0 0
        %2758 = vmatpush1.bf16.msra.mxu0 0
        %2759 = vmatprep.subr.bf16.mxu0 0
        %2760 = vmatpush1.bf16.msra.mxu0 0
        %2761 = vmatprep.subr.bf16.mxu0 0
        %2762 = vmatpush1.bf16.msra.mxu0 0
        %2763 = vmatprep.mubr.bf16.mxu0 0
        %2764 = vmatmul.mubr.bf16.gmra.mrb[0].mxu0 %v434
        %v2765 = vpop.f32.mrb[0].mxu0
        %v2766 = vadd.f32 0.0, %v2765
        %v2767 = vpop.f32.mrb[0].mxu0
        %v2768 = vpop.f32.mrb[0].mxu0
        %v2769 = vadd.f32 0.0, %v2768
        %v2770 = vpop.f32.mrb[0].mxu0
        %2771 = vdwg.mxu0
        %v2773 = vsel %vm436, %v2725, 0
        %2775 = vmatprep.subr.bf16.mxu0 0
        %2776 = vmatpush1.bf16.msra.mxu0 %v2773
        %2777 = vmatprep.subr.bf16.mxu0 0
        %2778 = vmatpush1.bf16.msra.mxu0 0
        %2779 = vmatprep.subr.bf16.mxu0 0
        %2780 = vmatpush1.bf16.msra.mxu0 0
        %2781 = vmatprep.subr.bf16.mxu0 0
        %2782 = vmatpush1.bf16.msra.mxu0 0
        %2783 = vmatprep.subr.bf16.mxu0 0
        %2784 = vmatpush1.bf16.msra.mxu0 0
        %2785 = vmatprep.subr.bf16.mxu0 0
        %2786 = vmatpush1.bf16.msra.mxu0 0
        %2787 = vmatprep.subr.bf16.mxu0 0
        %2788 = vmatpush1.bf16.msra.mxu0 0
        %2789 = vmatprep.subr.bf16.mxu0 0
        %2790 = vmatpush1.bf16.msra.mxu0 0
        %2791 = vmatprep.subr.bf16.mxu0 0
        %2792 = vmatpush1.bf16.msra.mxu0 0
        %2793 = vmatprep.subr.bf16.mxu0 0
        %2794 = vmatpush1.bf16.msra.mxu0 0
        %2795 = vmatprep.subr.bf16.mxu0 0
        %2796 = vmatpush1.bf16.msra.mxu0 0
        %2797 = vmatprep.subr.bf16.mxu0 0
        %2798 = vmatpush1.bf16.msra.mxu0 0
        %2799 = vmatprep.subr.bf16.mxu0 0
        %2800 = vmatpush1.bf16.msra.mxu0 0
        %2801 = vmatprep.subr.bf16.mxu0 0
        %2802 = vmatpush1.bf16.msra.mxu0 0
        %2803 = vmatprep.subr.bf16.mxu0 0
        %2804 = vmatpush1.bf16.msra.mxu0 0
        %2805 = vmatprep.subr.bf16.mxu0 0
        %2806 = vmatpush1.bf16.msra.mxu0 0
        %2807 = vmatprep.mubr.bf16.mxu0 0
        %2808 = vmatmul.mubr.bf16.gmra.mrb[0].mxu0 %v487
        %v2809 = vpop.f32.mrb[0].mxu0
        %v2810 = vadd.f32 %v2766, %v2809
        %v2811 = vpop.f32.mrb[0].mxu0
        %v2812 = vpop.f32.mrb[0].mxu0
        %v2813 = vadd.f32 %v2769, %v2812
        %v2814 = vpop.f32.mrb[0].mxu0
        %2815 = vdwg.mxu0
        %2816 = vrot.lane.b32.xlu0 %v2725, 126
        %v2817 = vpop.permute.xlu0 %2816
        %v2819 = vsel %vm436, %v2817, 0
        %2821 = vmatprep.subr.bf16.mxu0 0
        %2822 = vmatpush1.bf16.msra.mxu0 %v2819
        %2823 = vmatprep.subr.bf16.mxu0 0
        %2824 = vmatpush1.bf16.msra.mxu0 0
        %2825 = vmatprep.subr.bf16.mxu0 0
        %2826 = vmatpush1.bf16.msra.mxu0 0
        %2827 = vmatprep.subr.bf16.mxu0 0
        %2828 = vmatpush1.bf16.msra.mxu0 0
        %2829 = vmatprep.subr.bf16.mxu0 0
        %2830 = vmatpush1.bf16.msra.mxu0 0
        %2831 = vmatprep.subr.bf16.mxu0 0
        %2832 = vmatpush1.bf16.msra.mxu0 0
        %2833 = vmatprep.subr.bf16.mxu0 0
        %2834 = vmatpush1.bf16.msra.mxu0 0
        %2835 = vmatprep.subr.bf16.mxu0 0
        %2836 = vmatpush1.bf16.msra.mxu0 0
        %2837 = vmatprep.subr.bf16.mxu0 0
        %2838 = vmatpush1.bf16.msra.mxu0 0
        %2839 = vmatprep.subr.bf16.mxu0 0
        %2840 = vmatpush1.bf16.msra.mxu0 0
        %2841 = vmatprep.subr.bf16.mxu0 0
        %2842 = vmatpush1.bf16.msra.mxu0 0
        %2843 = vmatprep.subr.bf16.mxu0 0
        %2844 = vmatpush1.bf16.msra.mxu0 0
        %2845 = vmatprep.subr.bf16.mxu0 0
        %2846 = vmatpush1.bf16.msra.mxu0 0
        %2847 = vmatprep.subr.bf16.mxu0 0
        %2848 = vmatpush1.bf16.msra.mxu0 0
        %2849 = vmatprep.subr.bf16.mxu0 0
        %2850 = vmatpush1.bf16.msra.mxu0 0
        %2851 = vmatprep.subr.bf16.mxu0 0
        %2852 = vmatpush1.bf16.msra.mxu0 0
        %2853 = vmatprep.mubr.bf16.mxu0 0
        %2854 = vmatmul.mubr.bf16.gmra.mrb[0].mxu0 %v541
        %v2855 = vpop.f32.mrb[0].mxu0
        %v2856 = vadd.f32 0.0, %v2855
        %v2857 = vpop.f32.mrb[0].mxu0
        %v2858 = vpop.f32.mrb[0].mxu0
        %v2859 = vadd.f32 0.0, %v2858
        %v2860 = vpop.f32.mrb[0].mxu0
        %2861 = vdwg.mxu0
        %v2862 = vadd.f32 %v2810, %v2856
        %v2863 = vadd.f32 %v2813, %v2859
        %v2864 = vmul.f32 %v2862, %v592
        %v2865 = vmul.f32 %v2863, %v597
        %v2866 = vadd.f32 %v2864, %v604
        %v2867 = vadd.f32 %v2865, %v609
        %v2868 = vmax.f32 %v2866, 0.0
        %v2869 = vmax.f32 %v2867, 0.0
        %v2870 = vpack.c.bf16 %v2869, %v2868
        %v2872 = vrot.slane %v2870, 4
        %v2874 = vsel %vm624, %v2872, 0
        %2876 = vmatprep.subr.bf16.mxu0 0
        %2877 = vmatpush1.bf16.msra.mxu0 %v622
        %2878 = vmatprep.subr.bf16.mxu0 0
        %2879 = vmatpush1.bf16.msra.mxu0 0
        %2880 = vmatprep.subr.bf16.mxu0 0
        %2881 = vmatpush1.bf16.msra.mxu0 0
        %2882 = vmatprep.subr.bf16.mxu0 0
        %2883 = vmatpush1.bf16.msra.mxu0 0
        %2884 = vmatprep.subr.bf16.mxu0 0
        %2885 = vmatpush1.bf16.msra.mxu0 0
        %2886 = vmatprep.subr.bf16.mxu0 0
        %2887 = vmatpush1.bf16.msra.mxu0 0
        %2888 = vmatprep.subr.bf16.mxu0 0
        %2889 = vmatpush1.bf16.msra.mxu0 0
        %2890 = vmatprep.subr.bf16.mxu0 0
        %2891 = vmatpush1.bf16.msra.mxu0 0
        %2892 = vmatprep.subr.bf16.mxu0 0
        %2893 = vmatpush1.bf16.msra.mxu0 0
        %2894 = vmatprep.subr.bf16.mxu0 0
        %2895 = vmatpush1.bf16.msra.mxu0 0
        %2896 = vmatprep.subr.bf16.mxu0 0
        %2897 = vmatpush1.bf16.msra.mxu0 0
        %2898 = vmatprep.subr.bf16.mxu0 0
        %2899 = vmatpush1.bf16.msra.mxu0 0
        %2900 = vmatprep.subr.bf16.mxu0 0
        %2901 = vmatpush1.bf16.msra.mxu0 0
        %2902 = vmatprep.subr.bf16.mxu0 0
        %2903 = vmatpush1.bf16.msra.mxu0 0
        %2904 = vmatprep.subr.bf16.mxu0 0
        %2905 = vmatpush1.bf16.msra.mxu0 0
        %2906 = vmatprep.subr.bf16.mxu0 0
        %2907 = vmatpush1.bf16.msra.mxu0 0
        %2908 = vmatprep.mubr.bf16.mxu0 0
        %2909 = vmatmul.mubr.bf16.gmra.mrb[0].mxu0 %v2874
        %v2910 = vpop.f32.mrb[0].mxu0
        %v2911 = vadd.f32 0.0, %v2910
        %v2912 = vpop.f32.mrb[0].mxu0
        %v2913 = vpop.f32.mrb[0].mxu0
        %v2914 = vpop.f32.mrb[0].mxu0
        %2915 = vdwg.mxu0
        %v2917 = vsel %vm624, %v2870, 0
        %2919 = vmatprep.subr.bf16.mxu0 0
        %2920 = vmatpush1.bf16.msra.mxu0 %v672
        %2921 = vmatprep.subr.bf16.mxu0 0
        %2922 = vmatpush1.bf16.msra.mxu0 0
        %2923 = vmatprep.subr.bf16.mxu0 0
        %2924 = vmatpush1.bf16.msra.mxu0 0
        %2925 = vmatprep.subr.bf16.mxu0 0
        %2926 = vmatpush1.bf16.msra.mxu0 0
        %2927 = vmatprep.subr.bf16.mxu0 0
        %2928 = vmatpush1.bf16.msra.mxu0 0
        %2929 = vmatprep.subr.bf16.mxu0 0
        %2930 = vmatpush1.bf16.msra.mxu0 0
        %2931 = vmatprep.subr.bf16.mxu0 0
        %2932 = vmatpush1.bf16.msra.mxu0 0
        %2933 = vmatprep.subr.bf16.mxu0 0
        %2934 = vmatpush1.bf16.msra.mxu0 0
        %2935 = vmatprep.subr.bf16.mxu0 0
        %2936 = vmatpush1.bf16.msra.mxu0 0
        %2937 = vmatprep.subr.bf16.mxu0 0
        %2938 = vmatpush1.bf16.msra.mxu0 0
        %2939 = vmatprep.subr.bf16.mxu0 0
        %2940 = vmatpush1.bf16.msra.mxu0 0
        %2941 = vmatprep.subr.bf16.mxu0 0
        %2942 = vmatpush1.bf16.msra.mxu0 0
        %2943 = vmatprep.subr.bf16.mxu0 0
        %2944 = vmatpush1.bf16.msra.mxu0 0
        %2945 = vmatprep.subr.bf16.mxu0 0
        %2946 = vmatpush1.bf16.msra.mxu0 0
        %2947 = vmatprep.subr.bf16.mxu0 0
        %2948 = vmatpush1.bf16.msra.mxu0 0
        %2949 = vmatprep.subr.bf16.mxu0 0
        %2950 = vmatpush1.bf16.msra.mxu0 0
        %2951 = vmatprep.mubr.bf16.mxu0 0
        %2952 = vmatmul.mubr.bf16.gmra.mrb[0].mxu0 %v2917
        %v2953 = vpop.f32.mrb[0].mxu0
        %v2954 = vadd.f32 %v2911, %v2953
        %v2955 = vpop.f32.mrb[0].mxu0
        %v2956 = vpop.f32.mrb[0].mxu0
        %v2957 = vpop.f32.mrb[0].mxu0
        %2958 = vdwg.mxu0
        %v2959 = vpack.c.bf16 %v2954, %v2954
        %v2962 = vunpack.c.l.s4 1966171168
        %v2963 = vunpack.c.0.s8 %v2962
        %v2964 = vlaneseq
        %v2965 = vshrl.u32 %v2964, 7
        %v2966 = vsub.s32 %v2963, %v2965
        %v2967 = vrot.slane %v2959, %v2966
        %v2968 = vcombine.high %v2967, %v2967
        %v2970 = vunpack.c.l.s4 1966171168
        %v2971 = vunpack.c.0.s8 %v2970
        %v2972 = vlaneseq
        %v2973 = vshrl.u32 %v2972, 7
        %v2974 = vsub.s32 %v2971, %v2973
        %v2975 = vrot.slane %v2967, %v2974
        %v2977 = vunpack.c.l.s4 1966171168
        %v2978 = vunpack.c.0.s8 %v2977
        %v2979 = vlaneseq
        %v2980 = vshrl.u32 %v2979, 7
        %v2981 = vsub.s32 %v2978, %v2980
        %v2982 = vrot.slane %v2968, %v2981
        %v2983 = vunpack.i.l.s16 %v2975
        %v2984 = vunpack.i.h.s16 %v2975
        %v2985 = vunpack.i.l.s16 %v2982
        %v2986 = vunpack.i.h.s16 %v2982
        %v2987 = vpack.i.b16 %v2983, %v2983
        %v2988 = vpack.i.b16 %v2984, %v2984
        %v2989 = vpack.i.b16 %v2985, %v2985
        %v2990 = vpack.i.b16 %v2986, %v2986
        %v2992 = vunpack.c.l.s4 286326784
        %v2993 = vunpack.c.0.s8 %v2992
        %v2994 = vlaneseq
        %v2995 = vshrl.u32 %v2994, 7
        %v2996 = vsub.s32 %v2993, %v2995
        %v2997 = vrot.slane %v2987, %v2996
        %v2999 = vunpack.c.l.s4 286326784
        %v3000 = vunpack.c.0.s8 %v2999
        %v3001 = vlaneseq
        %v3002 = vshrl.u32 %v3001, 7
        %v3003 = vsub.s32 %v3000, %v3002
        %v3004 = vrot.slane %v2988, %v3003
        %v3006 = vunpack.c.l.s4 286326784
        %v3007 = vunpack.c.0.s8 %v3006
        %v3008 = vlaneseq
        %v3009 = vshrl.u32 %v3008, 7
        %v3010 = vsub.s32 %v3007, %v3009
        %v3011 = vrot.slane %v2989, %v3010
        %v3013 = vunpack.c.l.s4 286326784
        %v3014 = vunpack.c.0.s8 %v3013
        %v3015 = vlaneseq
        %v3016 = vshrl.u32 %v3015, 7
        %v3017 = vsub.s32 %v3014, %v3016
        %v3018 = vrot.slane %v2990, %v3017
        %v3023 = vld [vmem:[%s317 + $0x4] sm:$0x2]
        %v3024 = vsel %vm1232, %v2997, %v3023
        %3025 = vst [vmem:[%s317 + $0x4] sm:$0x2] %v3024
        %v3026 = vld [vmem:[%s317 + $0xc] sm:$0x2]
        %v3027 = vsel %vm1232, %v3004, %v3026
        %3028 = vst [vmem:[%s317 + $0xc] sm:$0x2] %v3027
        %v3029 = vld [vmem:[%s317 + $0x14] sm:$0x2]
        %v3030 = vsel %vm1232, %v3011, %v3029
        %3031 = vst [vmem:[%s317 + $0x14] sm:$0x2] %v3030
        %v3032 = vld [vmem:[%s317 + $0x1c] sm:$0x2]
        %v3033 = vsel %vm1232, %v3018, %v3032
        %3034 = vst [vmem:[%s317 + $0x1c] sm:$0x2] %v3033
        %v3035 = vcombine.high %v2975, %v2975
        %v3036 = vcombine.high %v2982, %v2982
        %v3037 = vunpack.i.l.s16 %v3035
        %v3038 = vunpack.i.h.s16 %v3035
        %v3039 = vunpack.i.l.s16 %v3036
        %v3040 = vunpack.i.h.s16 %v3036
        %v3041 = vpack.i.b16 %v3037, %v3037
        %v3042 = vpack.i.b16 %v3038, %v3038
        %v3043 = vpack.i.b16 %v3039, %v3039
        %v3044 = vpack.i.b16 %v3040, %v3040
        %v3046 = vunpack.c.l.s4 286326784
        %v3047 = vunpack.c.0.s8 %v3046
        %v3048 = vlaneseq
        %v3049 = vshrl.u32 %v3048, 7
        %v3050 = vsub.s32 %v3047, %v3049
        %v3051 = vrot.slane %v3041, %v3050
        %v3053 = vunpack.c.l.s4 286326784
        %v3054 = vunpack.c.0.s8 %v3053
        %v3055 = vlaneseq
        %v3056 = vshrl.u32 %v3055, 7
        %v3057 = vsub.s32 %v3054, %v3056
        %v3058 = vrot.slane %v3042, %v3057
        %v3060 = vunpack.c.l.s4 286326784
        %v3061 = vunpack.c.0.s8 %v3060
        %v3062 = vlaneseq
        %v3063 = vshrl.u32 %v3062, 7
        %v3064 = vsub.s32 %v3061, %v3063
        %v3065 = vrot.slane %v3043, %v3064
        %v3067 = vunpack.c.l.s4 286326784
        %v3068 = vunpack.c.0.s8 %v3067
        %v3069 = vlaneseq
        %v3070 = vshrl.u32 %v3069, 7
        %v3071 = vsub.s32 %v3068, %v3070
        %v3072 = vrot.slane %v3044, %v3071
        %v3077 = vld [vmem:[%s317 + $0x4] sm:$0x2]
        %v3078 = vsel %vm1288, %v3051, %v3077
        %3079 = vst [vmem:[%s317 + $0x4] sm:$0x2] %v3078
        %v3080 = vld [vmem:[%s317 + $0xc] sm:$0x2]
        %v3081 = vsel %vm1288, %v3058, %v3080
        %3082 = vst [vmem:[%s317 + $0xc] sm:$0x2] %v3081
        %v3083 = vld [vmem:[%s317 + $0x14] sm:$0x2]
        %v3084 = vsel %vm1288, %v3065, %v3083
        %3085 = vst [vmem:[%s317 + $0x14] sm:$0x2] %v3084
        %v3086 = vld [vmem:[%s317 + $0x1c] sm:$0x2]
        %v3087 = vsel %vm1288, %v3072, %v3086
        %3088 = vst [vmem:[%s317 + $0x1c] sm:$0x2] %v3087
        %v3089 = vld [vmem:[%s275] sm:$0x8]
        %v3090 = vld [vmem:[%s275 + $0x4] sm:$0x8]
        %v3091 = vld [vmem:[%s275 + $0x8] sm:$0x8]
        %v3092 = vld [vmem:[%s275 + $0xc] sm:$0x8]
        %v3093 = vld [vmem:[%s275 + $0x10] sm:$0x8]
        %v3094 = vld [vmem:[%s275 + $0x14] sm:$0x8]
        %v3095 = vld [vmem:[%s275 + $0x18] sm:$0x8]
        %v3096 = vld [vmem:[%s275 + $0x1c] sm:$0x8]
        %v3097 = vld [vmem:[%s275 + $0x20] sm:$0x8]
        %v3098 = vld [vmem:[%s275 + $0x24] sm:$0x8]
        %v3099 = vld [vmem:[%s275 + $0x28] sm:$0x8]
        %v3100 = vld [vmem:[%s275 + $0x2c] sm:$0x8]
        %v3113 = vunpack.c.l.b16 %v3089
        %v3114 = vunpack.c.l.b16 %v3090
        %v3115 = vunpack.c.l.b16 %v3091
        %v3116 = vunpack.c.l.b16 %v3092
        %v3117 = vunpack.c.l.b16 %v3093
        %v3118 = vunpack.c.l.b16 %v3094
        %v3119 = vunpack.c.l.b16 %v3095
        %v3120 = vunpack.c.l.b16 %v3096
        %v3121 = vunpack.c.l.b16 %v3097
        %v3122 = vunpack.c.l.b16 %v3098
        %v3123 = vunpack.c.l.b16 %v3099
        %v3124 = vunpack.c.l.b16 %v3100
        %v3125 = vpack.c.b16 %v3113, %v3113
        %v3126 = vpack.c.b16 %v3114, %v3114
        %v3127 = vpack.c.b16 %v3115, %v3115
        %v3128 = vpack.c.b16 %v3116, %v3116
        %v3129 = vpack.c.b16 %v3117, %v3117
        %v3130 = vpack.c.b16 %v3118, %v3118
        %v3131 = vpack.c.b16 %v3119, %v3119
        %v3132 = vpack.c.b16 %v3120, %v3120
        %v3133 = vpack.c.b16 %v3121, %v3121
        %v3134 = vpack.c.b16 %v3122, %v3122
        %v3135 = vpack.c.b16 %v3123, %v3123
        %v3136 = vpack.c.b16 %v3124, %v3124
        %v3137 = vunpack.c.l.b16 %v3125
        %v3138 = vunpack.c.l.b16 %v3126
        %v3139 = vunpack.c.l.b16 %v3127
        %v3140 = vunpack.c.l.b16 %v3128
        %v3141 = vunpack.c.l.b16 %v3129
        %v3142 = vunpack.c.l.b16 %v3130
        %v3143 = vunpack.c.l.b16 %v3131
        %v3144 = vunpack.c.l.b16 %v3132
        %v3145 = vunpack.c.l.b16 %v3133
        %v3146 = vunpack.c.l.b16 %v3134
        %v3147 = vunpack.c.l.b16 %v3135
        %v3148 = vunpack.c.l.b16 %v3136
        %v3149 = vrot.slane %v3137, 6
        %v3150 = vrot.slane %v3138, 5
        %v3151 = vsel %vm403, %v3150, %v3149
        %v3152 = vrot.slane %v3139, 4
        %v3153 = vsel %vm406, %v3152, %v3151
        %v3154 = vrot.slane %v3140, 3
        %v3155 = vsel %vm409, %v3154, %v3153
        %v3156 = vrot.slane %v3141, 2
        %v3157 = vsel %vm412, %v3156, %v3155
        %v3158 = vrot.slane %v3142, 1
        %v3159 = vsel %vm415, %v3158, %v3157
        %v3160 = vsel %vm418, %v3143, %v3159
        %v3161 = vrot.slane %v3144, 7
        %v3162 = vsel %vm421, %v3161, %v3160
        %v3163 = vrot.slane %v3145, 6
        %v3164 = vrot.slane %v3146, 5
        %v3165 = vsel %vm403, %v3164, %v3163
        %v3166 = vrot.slane %v3147, 4
        %v3167 = vsel %vm406, %v3166, %v3165
        %v3168 = vrot.slane %v3148, 3
        %v3169 = vsel %vm409, %v3168, %v3167
        %v3170 = vpack.c.b16 %v3169, %v3162
        %3171 = vrot.lane.b32.xlu0 %v3170, 127
        %v3172 = vpop.permute.xlu0 %3171
        %v3174 = vsel %vm436, %v3172, 0
        %3176 = vmatprep.subr.bf16.mxu0 0
        %3177 = vmatpush1.bf16.msra.mxu0 %v3174
        %3178 = vmatprep.subr.bf16.mxu0 0
        %3179 = vmatpush1.bf16.msra.mxu0 0
        %3180 = vmatprep.subr.bf16.mxu0 0
        %3181 = vmatpush1.bf16.msra.mxu0 0
        %3182 = vmatprep.subr.bf16.mxu0 0
        %3183 = vmatpush1.bf16.msra.mxu0 0
        %3184 = vmatprep.subr.bf16.mxu0 0
        %3185 = vmatpush1.bf16.msra.mxu0 0
        %3186 = vmatprep.subr.bf16.mxu0 0
        %3187 = vmatpush1.bf16.msra.mxu0 0
        %3188 = vmatprep.subr.bf16.mxu0 0
        %3189 = vmatpush1.bf16.msra.mxu0 0
        %3190 = vmatprep.subr.bf16.mxu0 0
        %3191 = vmatpush1.bf16.msra.mxu0 0
        %3192 = vmatprep.subr.bf16.mxu0 0
        %3193 = vmatpush1.bf16.msra.mxu0 0
        %3194 = vmatprep.subr.bf16.mxu0 0
        %3195 = vmatpush1.bf16.msra.mxu0 0
        %3196 = vmatprep.subr.bf16.mxu0 0
        %3197 = vmatpush1.bf16.msra.mxu0 0
        %3198 = vmatprep.subr.bf16.mxu0 0
        %3199 = vmatpush1.bf16.msra.mxu0 0
        %3200 = vmatprep.subr.bf16.mxu0 0
        %3201 = vmatpush1.bf16.msra.mxu0 0
        %3202 = vmatprep.subr.bf16.mxu0 0
        %3203 = vmatpush1.bf16.msra.mxu0 0
        %3204 = vmatprep.subr.bf16.mxu0 0
        %3205 = vmatpush1.bf16.msra.mxu0 0
        %3206 = vmatprep.subr.bf16.mxu0 0
        %3207 = vmatpush1.bf16.msra.mxu0 0
        %3208 = vmatprep.mubr.bf16.mxu0 0
        %3209 = vmatmul.mubr.bf16.gmra.mrb[0].mxu0 %v434
        %v3210 = vpop.f32.mrb[0].mxu0
        %v3211 = vadd.f32 0.0, %v3210
        %v3212 = vpop.f32.mrb[0].mxu0
        %v3213 = vpop.f32.mrb[0].mxu0
        %v3214 = vadd.f32 0.0, %v3213
        %v3215 = vpop.f32.mrb[0].mxu0
        %3216 = vdwg.mxu0
        %v3218 = vsel %vm436, %v3170, 0
        %3220 = vmatprep.subr.bf16.mxu0 0
        %3221 = vmatpush1.bf16.msra.mxu0 %v3218
        %3222 = vmatprep.subr.bf16.mxu0 0
        %3223 = vmatpush1.bf16.msra.mxu0 0
        %3224 = vmatprep.subr.bf16.mxu0 0
        %3225 = vmatpush1.bf16.msra.mxu0 0
        %3226 = vmatprep.subr.bf16.mxu0 0
        %3227 = vmatpush1.bf16.msra.mxu0 0
        %3228 = vmatprep.subr.bf16.mxu0 0
        %3229 = vmatpush1.bf16.msra.mxu0 0
        %3230 = vmatprep.subr.bf16.mxu0 0
        %3231 = vmatpush1.bf16.msra.mxu0 0
        %3232 = vmatprep.subr.bf16.mxu0 0
        %3233 = vmatpush1.bf16.msra.mxu0 0
        %3234 = vmatprep.subr.bf16.mxu0 0
        %3235 = vmatpush1.bf16.msra.mxu0 0
        %3236 = vmatprep.subr.bf16.mxu0 0
        %3237 = vmatpush1.bf16.msra.mxu0 0
        %3238 = vmatprep.subr.bf16.mxu0 0
        %3239 = vmatpush1.bf16.msra.mxu0 0
        %3240 = vmatprep.subr.bf16.mxu0 0
        %3241 = vmatpush1.bf16.msra.mxu0 0
        %3242 = vmatprep.subr.bf16.mxu0 0
        %3243 = vmatpush1.bf16.msra.mxu0 0
        %3244 = vmatprep.subr.bf16.mxu0 0
        %3245 = vmatpush1.bf16.msra.mxu0 0
        %3246 = vmatprep.subr.bf16.mxu0 0
        %3247 = vmatpush1.bf16.msra.mxu0 0
        %3248 = vmatprep.subr.bf16.mxu0 0
        %3249 = vmatpush1.bf16.msra.mxu0 0
        %3250 = vmatprep.subr.bf16.mxu0 0
        %3251 = vmatpush1.bf16.msra.mxu0 0
        %3252 = vmatprep.mubr.bf16.mxu0 0
        %3253 = vmatmul.mubr.bf16.gmra.mrb[0].mxu0 %v487
        %v3254 = vpop.f32.mrb[0].mxu0
        %v3255 = vadd.f32 %v3211, %v3254
        %v3256 = vpop.f32.mrb[0].mxu0
        %v3257 = vpop.f32.mrb[0].mxu0
        %v3258 = vadd.f32 %v3214, %v3257
        %v3259 = vpop.f32.mrb[0].mxu0
        %3260 = vdwg.mxu0
        %3261 = vrot.lane.b32.xlu0 %v3170, 126
        %v3262 = vpop.permute.xlu0 %3261
        %v3264 = vsel %vm436, %v3262, 0
        %3266 = vmatprep.subr.bf16.mxu0 0
        %3267 = vmatpush1.bf16.msra.mxu0 %v3264
        %3268 = vmatprep.subr.bf16.mxu0 0
        %3269 = vmatpush1.bf16.msra.mxu0 0
        %3270 = vmatprep.subr.bf16.mxu0 0
        %3271 = vmatpush1.bf16.msra.mxu0 0
        %3272 = vmatprep.subr.bf16.mxu0 0
        %3273 = vmatpush1.bf16.msra.mxu0 0
        %3274 = vmatprep.subr.bf16.mxu0 0
        %3275 = vmatpush1.bf16.msra.mxu0 0
        %3276 = vmatprep.subr.bf16.mxu0 0
        %3277 = vmatpush1.bf16.msra.mxu0 0
        %3278 = vmatprep.subr.bf16.mxu0 0
        %3279 = vmatpush1.bf16.msra.mxu0 0
        %3280 = vmatprep.subr.bf16.mxu0 0
        %3281 = vmatpush1.bf16.msra.mxu0 0
        %3282 = vmatprep.subr.bf16.mxu0 0
        %3283 = vmatpush1.bf16.msra.mxu0 0
        %3284 = vmatprep.subr.bf16.mxu0 0
        %3285 = vmatpush1.bf16.msra.mxu0 0
        %3286 = vmatprep.subr.bf16.mxu0 0
        %3287 = vmatpush1.bf16.msra.mxu0 0
        %3288 = vmatprep.subr.bf16.mxu0 0
        %3289 = vmatpush1.bf16.msra.mxu0 0
        %3290 = vmatprep.subr.bf16.mxu0 0
        %3291 = vmatpush1.bf16.msra.mxu0 0
        %3292 = vmatprep.subr.bf16.mxu0 0
        %3293 = vmatpush1.bf16.msra.mxu0 0
        %3294 = vmatprep.subr.bf16.mxu0 0
        %3295 = vmatpush1.bf16.msra.mxu0 0
        %3296 = vmatprep.subr.bf16.mxu0 0
        %3297 = vmatpush1.bf16.msra.mxu0 0
        %3298 = vmatprep.mubr.bf16.mxu0 0
        %3299 = vmatmul.mubr.bf16.gmra.mrb[0].mxu0 %v541
        %v3300 = vpop.f32.mrb[0].mxu0
        %v3301 = vadd.f32 0.0, %v3300
        %v3302 = vpop.f32.mrb[0].mxu0
        %v3303 = vpop.f32.mrb[0].mxu0
        %v3304 = vadd.f32 0.0, %v3303
        %v3305 = vpop.f32.mrb[0].mxu0
        %3306 = vdwg.mxu0
        %v3307 = vadd.f32 %v3255, %v3301
        %v3308 = vadd.f32 %v3258, %v3304
        %v3309 = vmul.f32 %v3307, %v592
        %v3310 = vmul.f32 %v3308, %v597
        %v3311 = vadd.f32 %v3309, %v604
        %v3312 = vadd.f32 %v3310, %v609
        %v3313 = vmax.f32 %v3311, 0.0
        %v3314 = vmax.f32 %v3312, 0.0
        %v3315 = vpack.c.bf16 %v3314, %v3313
        %v3317 = vrot.slane %v3315, 4
        %v3319 = vsel %vm624, %v3317, 0
        %3321 = vmatprep.subr.bf16.mxu0 0
        %3322 = vmatpush1.bf16.msra.mxu0 %v622
        %3323 = vmatprep.subr.bf16.mxu0 0
        %3324 = vmatpush1.bf16.msra.mxu0 0
        %3325 = vmatprep.subr.bf16.mxu0 0
        %3326 = vmatpush1.bf16.msra.mxu0 0
        %3327 = vmatprep.subr.bf16.mxu0 0
        %3328 = vmatpush1.bf16.msra.mxu0 0
        %3329 = vmatprep.subr.bf16.mxu0 0
        %3330 = vmatpush1.bf16.msra.mxu0 0
        %3331 = vmatprep.subr.bf16.mxu0 0
        %3332 = vmatpush1.bf16.msra.mxu0 0
        %3333 = vmatprep.subr.bf16.mxu0 0
        %3334 = vmatpush1.bf16.msra.mxu0 0
        %3335 = vmatprep.subr.bf16.mxu0 0
        %3336 = vmatpush1.bf16.msra.mxu0 0
        %3337 = vmatprep.subr.bf16.mxu0 0
        %3338 = vmatpush1.bf16.msra.mxu0 0
        %3339 = vmatprep.subr.bf16.mxu0 0
        %3340 = vmatpush1.bf16.msra.mxu0 0
        %3341 = vmatprep.subr.bf16.mxu0 0
        %3342 = vmatpush1.bf16.msra.mxu0 0
        %3343 = vmatprep.subr.bf16.mxu0 0
        %3344 = vmatpush1.bf16.msra.mxu0 0
        %3345 = vmatprep.subr.bf16.mxu0 0
        %3346 = vmatpush1.bf16.msra.mxu0 0
        %3347 = vmatprep.subr.bf16.mxu0 0
        %3348 = vmatpush1.bf16.msra.mxu0 0
        %3349 = vmatprep.subr.bf16.mxu0 0
        %3350 = vmatpush1.bf16.msra.mxu0 0
        %3351 = vmatprep.subr.bf16.mxu0 0
        %3352 = vmatpush1.bf16.msra.mxu0 0
        %3353 = vmatprep.mubr.bf16.mxu0 0
        %3354 = vmatmul.mubr.bf16.gmra.mrb[0].mxu0 %v3319
        %v3355 = vpop.f32.mrb[0].mxu0
        %v3356 = vadd.f32 0.0, %v3355
        %v3357 = vpop.f32.mrb[0].mxu0
        %v3358 = vpop.f32.mrb[0].mxu0
        %v3359 = vpop.f32.mrb[0].mxu0
        %3360 = vdwg.mxu0
        %v3362 = vsel %vm624, %v3315, 0
        %3364 = vmatprep.subr.bf16.mxu0 0
        %3365 = vmatpush1.bf16.msra.mxu0 %v672
        %3366 = vmatprep.subr.bf16.mxu0 0
        %3367 = vmatpush1.bf16.msra.mxu0 0
        %3368 = vmatprep.subr.bf16.mxu0 0
        %3369 = vmatpush1.bf16.msra.mxu0 0
        %3370 = vmatprep.subr.bf16.mxu0 0
        %3371 = vmatpush1.bf16.msra.mxu0 0
        %3372 = vmatprep.subr.bf16.mxu0 0
        %3373 = vmatpush1.bf16.msra.mxu0 0
        %3374 = vmatprep.subr.bf16.mxu0 0
        %3375 = vmatpush1.bf16.msra.mxu0 0
        %3376 = vmatprep.subr.bf16.mxu0 0
        %3377 = vmatpush1.bf16.msra.mxu0 0
        %3378 = vmatprep.subr.bf16.mxu0 0
        %3379 = vmatpush1.bf16.msra.mxu0 0
        %3380 = vmatprep.subr.bf16.mxu0 0
        %3381 = vmatpush1.bf16.msra.mxu0 0
        %3382 = vmatprep.subr.bf16.mxu0 0
        %3383 = vmatpush1.bf16.msra.mxu0 0
        %3384 = vmatprep.subr.bf16.mxu0 0
        %3385 = vmatpush1.bf16.msra.mxu0 0
        %3386 = vmatprep.subr.bf16.mxu0 0
        %3387 = vmatpush1.bf16.msra.mxu0 0
        %3388 = vmatprep.subr.bf16.mxu0 0
        %3389 = vmatpush1.bf16.msra.mxu0 0
        %3390 = vmatprep.subr.bf16.mxu0 0
        %3391 = vmatpush1.bf16.msra.mxu0 0
        %3392 = vmatprep.subr.bf16.mxu0 0
        %3393 = vmatpush1.bf16.msra.mxu0 0
        %3394 = vmatprep.subr.bf16.mxu0 0
        %3395 = vmatpush1.bf16.msra.mxu0 0
        %3396 = vmatprep.mubr.bf16.mxu0 0
        %3397 = vmatmul.mubr.bf16.gmra.mrb[0].mxu0 %v3362
        %v3398 = vpop.f32.mrb[0].mxu0
        %v3399 = vadd.f32 %v3356, %v3398
        %v3400 = vpop.f32.mrb[0].mxu0
        %v3401 = vpop.f32.mrb[0].mxu0
        %v3402 = vpop.f32.mrb[0].mxu0
        %3403 = vdwg.mxu0
        %v3404 = vpack.c.bf16 %v3399, %v3399
        %v3407 = vunpack.c.l.s4 1966171168
        %v3408 = vunpack.c.0.s8 %v3407
        %v3409 = vlaneseq
        %v3410 = vshrl.u32 %v3409, 7
        %v3411 = vsub.s32 %v3408, %v3410
        %v3412 = vrot.slane %v3404, %v3411
        %v3413 = vcombine.high %v3412, %v3412
        %v3415 = vunpack.c.l.s4 1966171168
        %v3416 = vunpack.c.0.s8 %v3415
        %v3417 = vlaneseq
        %v3418 = vshrl.u32 %v3417, 7
        %v3419 = vsub.s32 %v3416, %v3418
        %v3420 = vrot.slane %v3412, %v3419
        %v3422 = vunpack.c.l.s4 1966171168
        %v3423 = vunpack.c.0.s8 %v3422
        %v3424 = vlaneseq
        %v3425 = vshrl.u32 %v3424, 7
        %v3426 = vsub.s32 %v3423, %v3425
        %v3427 = vrot.slane %v3413, %v3426
        %v3428 = vunpack.i.l.s16 %v3420
        %v3429 = vunpack.i.h.s16 %v3420
        %v3430 = vunpack.i.l.s16 %v3427
        %v3431 = vunpack.i.h.s16 %v3427
        %v3432 = vpack.i.b16 %v3428, %v3428
        %v3433 = vpack.i.b16 %v3429, %v3429
        %v3434 = vpack.i.b16 %v3430, %v3430
        %v3435 = vpack.i.b16 %v3431, %v3431
        %v3437 = vunpack.c.l.s4 286326784
        %v3438 = vunpack.c.0.s8 %v3437
        %v3439 = vlaneseq
        %v3440 = vshrl.u32 %v3439, 7
        %v3441 = vsub.s32 %v3438, %v3440
        %v3442 = vrot.slane %v3432, %v3441
        %v3444 = vunpack.c.l.s4 286326784
        %v3445 = vunpack.c.0.s8 %v3444
        %v3446 = vlaneseq
        %v3447 = vshrl.u32 %v3446, 7
        %v3448 = vsub.s32 %v3445, %v3447
        %v3449 = vrot.slane %v3433, %v3448
        %v3451 = vunpack.c.l.s4 286326784
        %v3452 = vunpack.c.0.s8 %v3451
        %v3453 = vlaneseq
        %v3454 = vshrl.u32 %v3453, 7
        %v3455 = vsub.s32 %v3452, %v3454
        %v3456 = vrot.slane %v3434, %v3455
        %v3458 = vunpack.c.l.s4 286326784
        %v3459 = vunpack.c.0.s8 %v3458
        %v3460 = vlaneseq
        %v3461 = vshrl.u32 %v3460, 7
        %v3462 = vsub.s32 %v3459, %v3461
        %v3463 = vrot.slane %v3435, %v3462
        %v3468 = vld [vmem:[%s317 + $0x4] sm:$0x4]
        %v3469 = vsel %vm1681, %v3442, %v3468
        %3470 = vst [vmem:[%s317 + $0x4] sm:$0x4] %v3469
        %v3471 = vld [vmem:[%s317 + $0xc] sm:$0x4]
        %v3472 = vsel %vm1681, %v3449, %v3471
        %3473 = vst [vmem:[%s317 + $0xc] sm:$0x4] %v3472
        %v3474 = vld [vmem:[%s317 + $0x14] sm:$0x4]
        %v3475 = vsel %vm1681, %v3456, %v3474
        %3476 = vst [vmem:[%s317 + $0x14] sm:$0x4] %v3475
        %v3477 = vld [vmem:[%s317 + $0x1c] sm:$0x4]
        %v3478 = vsel %vm1681, %v3463, %v3477
        %3479 = vst [vmem:[%s317 + $0x1c] sm:$0x4] %v3478
        %v3480 = vcombine.high %v3420, %v3420
        %v3481 = vcombine.high %v3427, %v3427
        %v3482 = vunpack.i.l.s16 %v3480
        %v3483 = vunpack.i.h.s16 %v3480
        %v3484 = vunpack.i.l.s16 %v3481
        %v3485 = vunpack.i.h.s16 %v3481
        %v3486 = vpack.i.b16 %v3482, %v3482
        %v3487 = vpack.i.b16 %v3483, %v3483
        %v3488 = vpack.i.b16 %v3484, %v3484
        %v3489 = vpack.i.b16 %v3485, %v3485
        %v3491 = vunpack.c.l.s4 286326784
        %v3492 = vunpack.c.0.s8 %v3491
        %v3493 = vlaneseq
        %v3494 = vshrl.u32 %v3493, 7
        %v3495 = vsub.s32 %v3492, %v3494
        %v3496 = vrot.slane %v3486, %v3495
        %v3498 = vunpack.c.l.s4 286326784
        %v3499 = vunpack.c.0.s8 %v3498
        %v3500 = vlaneseq
        %v3501 = vshrl.u32 %v3500, 7
        %v3502 = vsub.s32 %v3499, %v3501
        %v3503 = vrot.slane %v3487, %v3502
        %v3505 = vunpack.c.l.s4 286326784
        %v3506 = vunpack.c.0.s8 %v3505
        %v3507 = vlaneseq
        %v3508 = vshrl.u32 %v3507, 7
        %v3509 = vsub.s32 %v3506, %v3508
        %v3510 = vrot.slane %v3488, %v3509
        %v3512 = vunpack.c.l.s4 286326784
        %v3513 = vunpack.c.0.s8 %v3512
        %v3514 = vlaneseq
        %v3515 = vshrl.u32 %v3514, 7
        %v3516 = vsub.s32 %v3513, %v3515
        %v3517 = vrot.slane %v3489, %v3516
        %v3522 = vld [vmem:[%s317 + $0x4] sm:$0x4]
        %v3523 = vsel %vm1737, %v3496, %v3522
        %3524 = vst [vmem:[%s317 + $0x4] sm:$0x4] %v3523
        %v3525 = vld [vmem:[%s317 + $0xc] sm:$0x4]
        %v3526 = vsel %vm1737, %v3503, %v3525
        %3527 = vst [vmem:[%s317 + $0xc] sm:$0x4] %v3526
        %v3528 = vld [vmem:[%s317 + $0x14] sm:$0x4]
        %v3529 = vsel %vm1737, %v3510, %v3528
        %3530 = vst [vmem:[%s317 + $0x14] sm:$0x4] %v3529
        %v3531 = vld [vmem:[%s317 + $0x1c] sm:$0x4]
        %v3532 = vsel %vm1737, %v3517, %v3531
        %3533 = vst [vmem:[%s317 + $0x1c] sm:$0x4] %v3532
        %v3534 = vld [vmem:[%s275] sm:$0x8]
        %v3535 = vld [vmem:[%s275 + $0x4] sm:$0x8]
        %v3536 = vld [vmem:[%s275 + $0x8] sm:$0x8]
        %v3537 = vld [vmem:[%s275 + $0xc] sm:$0x8]
        %v3538 = vld [vmem:[%s275 + $0x10] sm:$0x8]
        %v3539 = vld [vmem:[%s275 + $0x14] sm:$0x8]
        %v3540 = vld [vmem:[%s275 + $0x18] sm:$0x8]
        %v3541 = vld [vmem:[%s275 + $0x1c] sm:$0x8]
        %v3542 = vld [vmem:[%s275 + $0x20] sm:$0x8]
        %v3543 = vld [vmem:[%s275 + $0x24] sm:$0x8]
        %v3544 = vld [vmem:[%s275 + $0x28] sm:$0x8]
        %v3545 = vld [vmem:[%s275 + $0x2c] sm:$0x8]
        %v3558 = vunpack.c.l.b16 %v3534
        %v3559 = vunpack.c.l.b16 %v3535
        %v3560 = vunpack.c.l.b16 %v3536
        %v3561 = vunpack.c.l.b16 %v3537
        %v3562 = vunpack.c.l.b16 %v3538
        %v3563 = vunpack.c.l.b16 %v3539
        %v3564 = vunpack.c.l.b16 %v3540
        %v3565 = vunpack.c.l.b16 %v3541
        %v3566 = vunpack.c.l.b16 %v3542
        %v3567 = vunpack.c.l.b16 %v3543
        %v3568 = vunpack.c.l.b16 %v3544
        %v3569 = vunpack.c.l.b16 %v3545
        %v3570 = vpack.c.b16 %v3558, %v3558
        %v3571 = vpack.c.b16 %v3559, %v3559
        %v3572 = vpack.c.b16 %v3560, %v3560
        %v3573 = vpack.c.b16 %v3561, %v3561
        %v3574 = vpack.c.b16 %v3562, %v3562
        %v3575 = vpack.c.b16 %v3563, %v3563
        %v3576 = vpack.c.b16 %v3564, %v3564
        %v3577 = vpack.c.b16 %v3565, %v3565
        %v3578 = vpack.c.b16 %v3566, %v3566
        %v3579 = vpack.c.b16 %v3567, %v3567
        %v3580 = vpack.c.b16 %v3568, %v3568
        %v3581 = vpack.c.b16 %v3569, %v3569
        %v3582 = vunpack.c.l.b16 %v3570
        %v3583 = vunpack.c.l.b16 %v3571
        %v3584 = vunpack.c.l.b16 %v3572
        %v3585 = vunpack.c.l.b16 %v3573
        %v3586 = vunpack.c.l.b16 %v3574
        %v3587 = vunpack.c.l.b16 %v3575
        %v3588 = vunpack.c.l.b16 %v3576
        %v3589 = vunpack.c.l.b16 %v3577
        %v3590 = vunpack.c.l.b16 %v3578
        %v3591 = vunpack.c.l.b16 %v3579
        %v3592 = vunpack.c.l.b16 %v3580
        %v3593 = vunpack.c.l.b16 %v3581
        %v3594 = vrot.slane %v3582, 7
        %v3595 = vrot.slane %v3583, 6
        %v3596 = vsel %vm403, %v3595, %v3594
        %v3597 = vrot.slane %v3584, 5
        %v3598 = vsel %vm406, %v3597, %v3596
        %v3599 = vrot.slane %v3585, 4
        %v3600 = vsel %vm409, %v3599, %v3598
        %v3601 = vrot.slane %v3586, 3
        %v3602 = vsel %vm412, %v3601, %v3600
        %v3603 = vrot.slane %v3587, 2
        %v3604 = vsel %vm415, %v3603, %v3602
        %v3605 = vrot.slane %v3588, 1
        %v3606 = vsel %vm418, %v3605, %v3604
        %v3607 = vsel %vm421, %v3589, %v3606
        %v3608 = vrot.slane %v3590, 7
        %v3609 = vrot.slane %v3591, 6
        %v3610 = vsel %vm403, %v3609, %v3608
        %v3611 = vrot.slane %v3592, 5
        %v3612 = vsel %vm406, %v3611, %v3610
        %v3613 = vrot.slane %v3593, 4
        %v3614 = vsel %vm409, %v3613, %v3612
        %v3615 = vpack.c.b16 %v3614, %v3607
        %3616 = vrot.lane.b32.xlu0 %v3615, 127
        %v3617 = vpop.permute.xlu0 %3616
        %v3619 = vsel %vm436, %v3617, 0
        %3621 = vmatprep.subr.bf16.mxu0 0
        %3622 = vmatpush1.bf16.msra.mxu0 %v3619
        %3623 = vmatprep.subr.bf16.mxu0 0
        %3624 = vmatpush1.bf16.msra.mxu0 0
        %3625 = vmatprep.subr.bf16.mxu0 0
        %3626 = vmatpush1.bf16.msra.mxu0 0
        %3627 = vmatprep.subr.bf16.mxu0 0
        %3628 = vmatpush1.bf16.msra.mxu0 0
        %3629 = vmatprep.subr.bf16.mxu0 0
        %3630 = vmatpush1.bf16.msra.mxu0 0
        %3631 = vmatprep.subr.bf16.mxu0 0
        %3632 = vmatpush1.bf16.msra.mxu0 0
        %3633 = vmatprep.subr.bf16.mxu0 0
        %3634 = vmatpush1.bf16.msra.mxu0 0
        %3635 = vmatprep.subr.bf16.mxu0 0
        %3636 = vmatpush1.bf16.msra.mxu0 0
        %3637 = vmatprep.subr.bf16.mxu0 0
        %3638 = vmatpush1.bf16.msra.mxu0 0
        %3639 = vmatprep.subr.bf16.mxu0 0
        %3640 = vmatpush1.bf16.msra.mxu0 0
        %3641 = vmatprep.subr.bf16.mxu0 0
        %3642 = vmatpush1.bf16.msra.mxu0 0
        %3643 = vmatprep.subr.bf16.mxu0 0
        %3644 = vmatpush1.bf16.msra.mxu0 0
        %3645 = vmatprep.subr.bf16.mxu0 0
        %3646 = vmatpush1.bf16.msra.mxu0 0
        %3647 = vmatprep.subr.bf16.mxu0 0
        %3648 = vmatpush1.bf16.msra.mxu0 0
        %3649 = vmatprep.subr.bf16.mxu0 0
        %3650 = vmatpush1.bf16.msra.mxu0 0
        %3651 = vmatprep.subr.bf16.mxu0 0
        %3652 = vmatpush1.bf16.msra.mxu0 0
        %3653 = vmatprep.mubr.bf16.mxu0 0
        %3654 = vmatmul.mubr.bf16.gmra.mrb[0].mxu0 %v434
        %v3655 = vpop.f32.mrb[0].mxu0
        %v3656 = vadd.f32 0.0, %v3655
        %v3657 = vpop.f32.mrb[0].mxu0
        %v3658 = vpop.f32.mrb[0].mxu0
        %v3659 = vadd.f32 0.0, %v3658
        %v3660 = vpop.f32.mrb[0].mxu0
        %3661 = vdwg.mxu0
        %v3663 = vsel %vm436, %v3615, 0
        %3665 = vmatprep.subr.bf16.mxu0 0
        %3666 = vmatpush1.bf16.msra.mxu0 %v3663
        %3667 = vmatprep.subr.bf16.mxu0 0
        %3668 = vmatpush1.bf16.msra.mxu0 0
        %3669 = vmatprep.subr.bf16.mxu0 0
        %3670 = vmatpush1.bf16.msra.mxu0 0
        %3671 = vmatprep.subr.bf16.mxu0 0
        %3672 = vmatpush1.bf16.msra.mxu0 0
        %3673 = vmatprep.subr.bf16.mxu0 0
        %3674 = vmatpush1.bf16.msra.mxu0 0
        %3675 = vmatprep.subr.bf16.mxu0 0
        %3676 = vmatpush1.bf16.msra.mxu0 0
        %3677 = vmatprep.subr.bf16.mxu0 0
        %3678 = vmatpush1.bf16.msra.mxu0 0
        %3679 = vmatprep.subr.bf16.mxu0 0
        %3680 = vmatpush1.bf16.msra.mxu0 0
        %3681 = vmatprep.subr.bf16.mxu0 0
        %3682 = vmatpush1.bf16.msra.mxu0 0
        %3683 = vmatprep.subr.bf16.mxu0 0
        %3684 = vmatpush1.bf16.msra.mxu0 0
        %3685 = vmatprep.subr.bf16.mxu0 0
        %3686 = vmatpush1.bf16.msra.mxu0 0
        %3687 = vmatprep.subr.bf16.mxu0 0
        %3688 = vmatpush1.bf16.msra.mxu0 0
        %3689 = vmatprep.subr.bf16.mxu0 0
        %3690 = vmatpush1.bf16.msra.mxu0 0
        %3691 = vmatprep.subr.bf16.mxu0 0
        %3692 = vmatpush1.bf16.msra.mxu0 0
        %3693 = vmatprep.subr.bf16.mxu0 0
        %3694 = vmatpush1.bf16.msra.mxu0 0
        %3695 = vmatprep.subr.bf16.mxu0 0
        %3696 = vmatpush1.bf16.msra.mxu0 0
        %3697 = vmatprep.mubr.bf16.mxu0 0
        %3698 = vmatmul.mubr.bf16.gmra.mrb[0].mxu0 %v487
        %v3699 = vpop.f32.mrb[0].mxu0
        %v3700 = vadd.f32 %v3656, %v3699
        %v3701 = vpop.f32.mrb[0].mxu0
        %v3702 = vpop.f32.mrb[0].mxu0
        %v3703 = vadd.f32 %v3659, %v3702
        %v3704 = vpop.f32.mrb[0].mxu0
        %3705 = vdwg.mxu0
        %3706 = vrot.lane.b32.xlu0 %v3615, 126
        %v3707 = vpop.permute.xlu0 %3706
        %v3709 = vsel %vm436, %v3707, 0
        %3711 = vmatprep.subr.bf16.mxu0 0
        %3712 = vmatpush1.bf16.msra.mxu0 %v3709
        %3713 = vmatprep.subr.bf16.mxu0 0
        %3714 = vmatpush1.bf16.msra.mxu0 0
        %3715 = vmatprep.subr.bf16.mxu0 0
        %3716 = vmatpush1.bf16.msra.mxu0 0
        %3717 = vmatprep.subr.bf16.mxu0 0
        %3718 = vmatpush1.bf16.msra.mxu0 0
        %3719 = vmatprep.subr.bf16.mxu0 0
        %3720 = vmatpush1.bf16.msra.mxu0 0
        %3721 = vmatprep.subr.bf16.mxu0 0
        %3722 = vmatpush1.bf16.msra.mxu0 0
        %3723 = vmatprep.subr.bf16.mxu0 0
        %3724 = vmatpush1.bf16.msra.mxu0 0
        %3725 = vmatprep.subr.bf16.mxu0 0
        %3726 = vmatpush1.bf16.msra.mxu0 0
        %3727 = vmatprep.subr.bf16.mxu0 0
        %3728 = vmatpush1.bf16.msra.mxu0 0
        %3729 = vmatprep.subr.bf16.mxu0 0
        %3730 = vmatpush1.bf16.msra.mxu0 0
        %3731 = vmatprep.subr.bf16.mxu0 0
        %3732 = vmatpush1.bf16.msra.mxu0 0
        %3733 = vmatprep.subr.bf16.mxu0 0
        %3734 = vmatpush1.bf16.msra.mxu0 0
        %3735 = vmatprep.subr.bf16.mxu0 0
        %3736 = vmatpush1.bf16.msra.mxu0 0
        %3737 = vmatprep.subr.bf16.mxu0 0
        %3738 = vmatpush1.bf16.msra.mxu0 0
        %3739 = vmatprep.subr.bf16.mxu0 0
        %3740 = vmatpush1.bf16.msra.mxu0 0
        %3741 = vmatprep.subr.bf16.mxu0 0
        %3742 = vmatpush1.bf16.msra.mxu0 0
        %3743 = vmatprep.mubr.bf16.mxu0 0
        %3744 = vmatmul.mubr.bf16.gmra.mrb[0].mxu0 %v541
        %v3745 = vpop.f32.mrb[0].mxu0
        %v3746 = vadd.f32 0.0, %v3745
        %v3747 = vpop.f32.mrb[0].mxu0
        %v3748 = vpop.f32.mrb[0].mxu0
        %v3749 = vadd.f32 0.0, %v3748
        %v3750 = vpop.f32.mrb[0].mxu0
        %3751 = vdwg.mxu0
        %v3752 = vadd.f32 %v3700, %v3746
        %v3753 = vadd.f32 %v3703, %v3749
        %v3754 = vmul.f32 %v3752, %v592
        %v3755 = vmul.f32 %v3753, %v597
        %v3756 = vadd.f32 %v3754, %v604
        %v3757 = vadd.f32 %v3755, %v609
        %v3758 = vmax.f32 %v3756, 0.0
        %v3759 = vmax.f32 %v3757, 0.0
        %v3760 = vpack.c.bf16 %v3759, %v3758
        %v3762 = vrot.slane %v3760, 4
        %v3764 = vsel %vm624, %v3762, 0
        %3766 = vmatprep.subr.bf16.mxu0 0
        %3767 = vmatpush1.bf16.msra.mxu0 %v622
        %3768 = vmatprep.subr.bf16.mxu0 0
        %3769 = vmatpush1.bf16.msra.mxu0 0
        %3770 = vmatprep.subr.bf16.mxu0 0
        %3771 = vmatpush1.bf16.msra.mxu0 0
        %3772 = vmatprep.subr.bf16.mxu0 0
        %3773 = vmatpush1.bf16.msra.mxu0 0
        %3774 = vmatprep.subr.bf16.mxu0 0
        %3775 = vmatpush1.bf16.msra.mxu0 0
        %3776 = vmatprep.subr.bf16.mxu0 0
        %3777 = vmatpush1.bf16.msra.mxu0 0
        %3778 = vmatprep.subr.bf16.mxu0 0
        %3779 = vmatpush1.bf16.msra.mxu0 0
        %3780 = vmatprep.subr.bf16.mxu0 0
        %3781 = vmatpush1.bf16.msra.mxu0 0
        %3782 = vmatprep.subr.bf16.mxu0 0
        %3783 = vmatpush1.bf16.msra.mxu0 0
        %3784 = vmatprep.subr.bf16.mxu0 0
        %3785 = vmatpush1.bf16.msra.mxu0 0
        %3786 = vmatprep.subr.bf16.mxu0 0
        %3787 = vmatpush1.bf16.msra.mxu0 0
        %3788 = vmatprep.subr.bf16.mxu0 0
        %3789 = vmatpush1.bf16.msra.mxu0 0
        %3790 = vmatprep.subr.bf16.mxu0 0
        %3791 = vmatpush1.bf16.msra.mxu0 0
        %3792 = vmatprep.subr.bf16.mxu0 0
        %3793 = vmatpush1.bf16.msra.mxu0 0
        %3794 = vmatprep.subr.bf16.mxu0 0
        %3795 = vmatpush1.bf16.msra.mxu0 0
        %3796 = vmatprep.subr.bf16.mxu0 0
        %3797 = vmatpush1.bf16.msra.mxu0 0
        %3798 = vmatprep.mubr.bf16.mxu0 0
        %3799 = vmatmul.mubr.bf16.gmra.mrb[0].mxu0 %v3764
        %v3800 = vpop.f32.mrb[0].mxu0
        %v3801 = vadd.f32 0.0, %v3800
        %v3802 = vpop.f32.mrb[0].mxu0
        %v3803 = vpop.f32.mrb[0].mxu0
        %v3804 = vpop.f32.mrb[0].mxu0
        %3805 = vdwg.mxu0
        %v3807 = vsel %vm624, %v3760, 0
        %3809 = vmatprep.subr.bf16.mxu0 0
        %3810 = vmatpush1.bf16.msra.mxu0 %v672
        %3811 = vmatprep.subr.bf16.mxu0 0
        %3812 = vmatpush1.bf16.msra.mxu0 0
        %3813 = vmatprep.subr.bf16.mxu0 0
        %3814 = vmatpush1.bf16.msra.mxu0 0
        %3815 = vmatprep.subr.bf16.mxu0 0
        %3816 = vmatpush1.bf16.msra.mxu0 0
        %3817 = vmatprep.subr.bf16.mxu0 0
        %3818 = vmatpush1.bf16.msra.mxu0 0
        %3819 = vmatprep.subr.bf16.mxu0 0
        %3820 = vmatpush1.bf16.msra.mxu0 0
        %3821 = vmatprep.subr.bf16.mxu0 0
        %3822 = vmatpush1.bf16.msra.mxu0 0
        %3823 = vmatprep.subr.bf16.mxu0 0
        %3824 = vmatpush1.bf16.msra.mxu0 0
        %3825 = vmatprep.subr.bf16.mxu0 0
        %3826 = vmatpush1.bf16.msra.mxu0 0
        %3827 = vmatprep.subr.bf16.mxu0 0
        %3828 = vmatpush1.bf16.msra.mxu0 0
        %3829 = vmatprep.subr.bf16.mxu0 0
        %3830 = vmatpush1.bf16.msra.mxu0 0
        %3831 = vmatprep.subr.bf16.mxu0 0
        %3832 = vmatpush1.bf16.msra.mxu0 0
        %3833 = vmatprep.subr.bf16.mxu0 0
        %3834 = vmatpush1.bf16.msra.mxu0 0
        %3835 = vmatprep.subr.bf16.mxu0 0
        %3836 = vmatpush1.bf16.msra.mxu0 0
        %3837 = vmatprep.subr.bf16.mxu0 0
        %3838 = vmatpush1.bf16.msra.mxu0 0
        %3839 = vmatprep.subr.bf16.mxu0 0
        %3840 = vmatpush1.bf16.msra.mxu0 0
        %3841 = vmatprep.mubr.bf16.mxu0 0
        %3842 = vmatmul.mubr.bf16.gmra.mrb[0].mxu0 %v3807
        %v3843 = vpop.f32.mrb[0].mxu0
        %v3844 = vadd.f32 %v3801, %v3843
        %v3845 = vpop.f32.mrb[0].mxu0
        %v3846 = vpop.f32.mrb[0].mxu0
        %v3847 = vpop.f32.mrb[0].mxu0
        %3848 = vdwg.mxu0
        %v3849 = vpack.c.bf16 %v3844, %v3844
        %v3852 = vunpack.c.l.s4 1966171168
        %v3853 = vunpack.c.0.s8 %v3852
        %v3854 = vlaneseq
        %v3855 = vshrl.u32 %v3854, 7
        %v3856 = vsub.s32 %v3853, %v3855
        %v3857 = vrot.slane %v3849, %v3856
        %v3858 = vcombine.high %v3857, %v3857
        %v3860 = vunpack.c.l.s4 1966171168
        %v3861 = vunpack.c.0.s8 %v3860
        %v3862 = vlaneseq
        %v3863 = vshrl.u32 %v3862, 7
        %v3864 = vsub.s32 %v3861, %v3863
        %v3865 = vrot.slane %v3857, %v3864
        %v3867 = vunpack.c.l.s4 1966171168
        %v3868 = vunpack.c.0.s8 %v3867
        %v3869 = vlaneseq
        %v3870 = vshrl.u32 %v3869, 7
        %v3871 = vsub.s32 %v3868, %v3870
        %v3872 = vrot.slane %v3858, %v3871
        %v3873 = vunpack.i.l.s16 %v3865
        %v3874 = vunpack.i.h.s16 %v3865
        %v3875 = vunpack.i.l.s16 %v3872
        %v3876 = vunpack.i.h.s16 %v3872
        %v3877 = vpack.i.b16 %v3873, %v3873
        %v3878 = vpack.i.b16 %v3874, %v3874
        %v3879 = vpack.i.b16 %v3875, %v3875
        %v3880 = vpack.i.b16 %v3876, %v3876
        %v3882 = vunpack.c.l.s4 286326784
        %v3883 = vunpack.c.0.s8 %v3882
        %v3884 = vlaneseq
        %v3885 = vshrl.u32 %v3884, 7
        %v3886 = vsub.s32 %v3883, %v3885
        %v3887 = vrot.slane %v3877, %v3886
        %v3889 = vunpack.c.l.s4 286326784
        %v3890 = vunpack.c.0.s8 %v3889
        %v3891 = vlaneseq
        %v3892 = vshrl.u32 %v3891, 7
        %v3893 = vsub.s32 %v3890, %v3892
        %v3894 = vrot.slane %v3878, %v3893
        %v3896 = vunpack.c.l.s4 286326784
        %v3897 = vunpack.c.0.s8 %v3896
        %v3898 = vlaneseq
        %v3899 = vshrl.u32 %v3898, 7
        %v3900 = vsub.s32 %v3897, %v3899
        %v3901 = vrot.slane %v3879, %v3900
        %v3903 = vunpack.c.l.s4 286326784
        %v3904 = vunpack.c.0.s8 %v3903
        %v3905 = vlaneseq
        %v3906 = vshrl.u32 %v3905, 7
        %v3907 = vsub.s32 %v3904, %v3906
        %v3908 = vrot.slane %v3880, %v3907
        %v3913 = vld [vmem:[%s317 + $0x4] sm:$0x8]
        %v3914 = vsel %vm2130, %v3887, %v3913
        %3915 = vst [vmem:[%s317 + $0x4] sm:$0x8] %v3914
        %v3916 = vld [vmem:[%s317 + $0xc] sm:$0x8]
        %v3917 = vsel %vm2130, %v3894, %v3916
        %3918 = vst [vmem:[%s317 + $0xc] sm:$0x8] %v3917
        %v3919 = vld [vmem:[%s317 + $0x14] sm:$0x8]
        %v3920 = vsel %vm2130, %v3901, %v3919
        %3921 = vst [vmem:[%s317 + $0x14] sm:$0x8] %v3920
        %v3922 = vld [vmem:[%s317 + $0x1c] sm:$0x8]
        %v3923 = vsel %vm2130, %v3908, %v3922
        %3924 = vst [vmem:[%s317 + $0x1c] sm:$0x8] %v3923
        %v3925 = vcombine.high %v3865, %v3865
        %v3926 = vcombine.high %v3872, %v3872
        %v3927 = vunpack.i.l.s16 %v3925
        %v3928 = vunpack.i.h.s16 %v3925
        %v3929 = vunpack.i.l.s16 %v3926
        %v3930 = vunpack.i.h.s16 %v3926
        %v3931 = vpack.i.b16 %v3927, %v3927
        %v3932 = vpack.i.b16 %v3928, %v3928
        %v3933 = vpack.i.b16 %v3929, %v3929
        %v3934 = vpack.i.b16 %v3930, %v3930
        %v3936 = vunpack.c.l.s4 286326784
        %v3937 = vunpack.c.0.s8 %v3936
        %v3938 = vlaneseq
        %v3939 = vshrl.u32 %v3938, 7
        %v3940 = vsub.s32 %v3937, %v3939
        %v3941 = vrot.slane %v3931, %v3940
        %v3943 = vunpack.c.l.s4 286326784
        %v3944 = vunpack.c.0.s8 %v3943
        %v3945 = vlaneseq
        %v3946 = vshrl.u32 %v3945, 7
        %v3947 = vsub.s32 %v3944, %v3946
        %v3948 = vrot.slane %v3932, %v3947
        %v3950 = vunpack.c.l.s4 286326784
        %v3951 = vunpack.c.0.s8 %v3950
        %v3952 = vlaneseq
        %v3953 = vshrl.u32 %v3952, 7
        %v3954 = vsub.s32 %v3951, %v3953
        %v3955 = vrot.slane %v3933, %v3954
        %v3957 = vunpack.c.l.s4 286326784
        %v3958 = vunpack.c.0.s8 %v3957
        %v3959 = vlaneseq
        %v3960 = vshrl.u32 %v3959, 7
        %v3961 = vsub.s32 %v3958, %v3960
        %v3962 = vrot.slane %v3934, %v3961
        %v3967 = vld [vmem:[%s317 + $0x4] sm:$0x8]
        %v3968 = vsel %vm2186, %v3941, %v3967
        %3969 = vst [vmem:[%s317 + $0x4] sm:$0x8] %v3968
        %v3970 = vld [vmem:[%s317 + $0xc] sm:$0x8]
        %v3971 = vsel %vm2186, %v3948, %v3970
        %3972 = vst [vmem:[%s317 + $0xc] sm:$0x8] %v3971
        %v3973 = vld [vmem:[%s317 + $0x14] sm:$0x8]
        %v3974 = vsel %vm2186, %v3955, %v3973
        %3975 = vst [vmem:[%s317 + $0x14] sm:$0x8] %v3974
        %v3976 = vld [vmem:[%s317 + $0x1c] sm:$0x8]
        %v3977 = vsel %vm2186, %v3962, %v3976
        %3978 = vst [vmem:[%s317 + $0x1c] sm:$0x8] %v3977
        %s3979 = sand.u32 %s158, 1
        %s3980 = scalar_lea.sflag [#allocation4], %s3979
        %s3981 = sand.u32 %s158, 1
        %s3982 = smul.addr %s3981, 32
        %s3983 = scalar_lea.vmem [#allocation11], %s3982
        // Predicated region
        $region61: #{dense_upsampling_convolution.1} parent=39 // pred_check
          %p3984 = pneg %p168
        $region62: #{dense_upsampling_convolution.1} parent=39 // pred_check_branch
          %3986 = sbr.rel (%p3984) target = $region64
        $region63: #{dense_upsampling_convolution.1} parent=39 // pred_region
          #allocation13 [shape = 'u32[6]{0}', space=smem, size = 0x18, scoped, tag = 'DMA stride descriptor']
          %s3987 = smul.u32 2, %s29
          %s3989 = ssub.s32 512, 512
          %3990 = vsyncadd %s3980, %s3989
          %s3991 = smul.addr %s28, 16
          %s3992 = sadd.s32 %s3987, %s3991
          %s3993 = smul.addr %s3992, 64
          %s3994 = scalar_lea.hbm %s5, %s3993
          %s3996 = sshll.u32 1, 14
          %s3997 = sxor.u32 4294967295, %s3996
          %s4000 = sshll.u32 7, 18
          %s4001 = sxor.u32 4294967295, %s4000
          %s4002 = sand.u32 0, %s4001
          %s4004 = sor.u32 %s4002, 0
          %s4006 = sshll.u32 3, 24
          %s4007 = sxor.u32 4294967295, %s4006
          %s4008 = sand.u32 %s4004, %s4007
          %s4010 = sor.u32 %s4008, 0
          %s4011 = sshll.u32 %s3983, 4
          %s4012 = int_to_ptr.vmem [resolvable:$true] %s4011
          %4018 = sst [smem:[#allocation13]] 128
          %s4019 = scalar_lea.smem [#allocation13], 1
          %4020 = sst [smem:[%s4019]] 256
          %s4021 = scalar_lea.smem [#allocation13], 2
          %4022 = sst [smem:[%s4021]] 2
          %s4023 = scalar_lea.smem [#allocation13], 3
          %4024 = sst [smem:[%s4023]] 64
          %s4025 = scalar_lea.smem [#allocation13], 4
          %4026 = sst [smem:[%s4025]] 64
          %s4027 = scalar_lea.smem [#allocation13], 5
          %4028 = sst [smem:[%s4027]] 4
          %4030 = dma.general %s4012, 512, %s3994, %s3980, [#allocation12], [#allocation13], %s4010, 0
        $region64: #{dense_upsampling_convolution.1} parent=39 // pred_fallthru
          _
      $region40: #{dense_upsampling_convolution.1} parent=5 // pred_fallthru
        _
      %p4031 = scmp.le.s32.totalorder 2, %s19
      // Predicated region
      $region65: #{dense_upsampling_convolution.1} parent=5 // pred_check
        %p4032 = pneg %p4031
      $region66: #{dense_upsampling_convolution.1} parent=5 // pred_check_branch
        %4034 = sbr.rel (%p4032) target = $region68
      $region67: #{dense_upsampling_convolution.1} parent=5 // pred_region
        %s4035 = ssub.s32 %s19, 2
        // Predicated region
        $region69: #{dense_upsampling_convolution.1} parent=67 // pred_check
          %p4036 = pneg %p174
        $region70: #{dense_upsampling_convolution.1} parent=67 // pred_check_branch
          %4038 = sbr.rel (%p4036) target = $region72
        $region71: #{dense_upsampling_convolution.1} parent=67 // pred_region
          %s4039 = sand.u32 %s159, 1
          %s4040 = scalar_lea.sflag [#allocation4], %s4039
          %s4041 = sand.u32 %s159, 1
          %s4042 = smul.addr %s4041, 32
          %s4043 = scalar_lea.vmem [#allocation11], %s4042
          %4044 = dma.done %s4040, 512
        $region72: #{dense_upsampling_convolution.1} parent=67 // pred_fallthru
          _
      $region68: #{dense_upsampling_convolution.1} parent=5 // pred_fallthru
        _
    $region6: #{dense_upsampling_convolution.1} parent=1 // loop_footer
      %s23 = sadd.s32 1, %s19
    $region7: #{dense_upsampling_convolution.1} parent=1 // loop_footer_branch
      %18 = sbr.rel target = $region3
    $region8: #{dense_upsampling_convolution.1} parent=1 // loop_exit
      _
    %4045 = vsyncpa [#allocation3], 1
    %s4046 = scalar_lea.sflag [#allocation3], 1
    %4047 = vsyncpa %s4046, 1
    %4048 = vsyncpa [#allocation6], 1
    %4049 = vsyncpa [#allocation9], 1
    %4050 = vsyncpa [#allocation4], 1
    %s4051 = scalar_lea.sflag [#allocation4], 1
    %4052 = vsyncpa %s4051, 1

</llo_original>
